<compile_context>
chip_gen: v5e
topology: v5e:2x2
jax: 0.10.0
libtpu: 0.0.40
codegen_flags: <defaults>
</compile_context>

<pallas_src>
import functools

import jax
import jax.numpy as jnp
from jax.experimental import pallas as pl
from jax.experimental.pallas import tpu as pltpu


# ------------------------------ Pallas kernel -------------------------------

def _fused_forward_kernel(x_ref, t1_ref, b1c_ref, t2_ref, b2c_ref,
                          w1_ref, b1f_ref, w2_ref, b2f_ref, w3_ref, b3f_ref,
                          o_ref, p1_ref):
    """Whole CNNTarget_mnist forward for one batch tile.

    x_ref : (14, 2, TB, 28) bf16   x_ref[r, p, b, w] = image row 2r+p
    t1_ref: (5, 28, 2*12*nk1) bf16 conv1 Toeplitz, cols (gw, pw, co)
    t2_ref: (5, 12*nk1, 2*4*nk2) bf16 conv2 Toeplitz, cols (gw, qw, co)
    w1_ref: (4, 4*nk2, 120) f32    fc1 weights split by qh row-group
    o_ref : (TB, out_dim) f32      log_softmax output
    p1_ref: (6, 2, TB, 12*nk1) bf16 VMEM scratch, pooled conv1 activations
    """
    TB = x_ref.shape[2]
    c1x = t1_ref.shape[2]
    c1 = c1x // 2                      # 12 * nk1
    c2x = t2_ref.shape[2]
    c2 = c2x // 2                      # 4 * nk2

    # ---- conv1(5x5) + bias + ReLU + 2x2/2 max-pool : 28x28x1 -> 12x12xnk1 ----
    pooled1 = None
    for gh in range(2):                              # pool parity along H
        acc = jnp.zeros((12 * TB, c1x), jnp.float32)
        for dh in range(5):                          # kernel row
            s = gh + dh
            rows = x_ref[s // 2: s // 2 + 12, s % 2, :, :]     # (12, TB, 28)
            acc = acc + jnp.dot(rows.reshape(12 * TB, 28), t1_ref[dh],
                                preferred_element_type=jnp.float32)
        half = jnp.maximum(acc[:, :c1], acc[:, c1:])           # pool along W
        pooled1 = half if gh == 0 else jnp.maximum(pooled1, half)  # pool along H
    p1 = jnp.maximum(pooled1 + b1c_ref[...], 0.0).astype(p1_ref.dtype)
    p1_ref[...] = p1.reshape(6, 2, TB, c1)           # rows (ph, b) -> [ph//2, ph%2, b]

    # ---- conv2(5x5) + bias + ReLU + 2x2/2 max-pool : 12x12xnk1 -> 4x4xnk2 ----
    pooled2 = None
    for gh in range(2):
        acc = jnp.zeros((4 * TB, c2x), jnp.float32)
        for dh in range(5):
            s = gh + dh
            rows = p1_ref[s // 2: s // 2 + 4, s % 2, :, :]     # (4, TB, 12*nk1)
            acc = acc + jnp.dot(rows.reshape(4 * TB, c1), t2_ref[dh],
                                preferred_element_type=jnp.float32)
        half = jnp.maximum(acc[:, :c2], acc[:, c2:])
        pooled2 = half if gh == 0 else jnp.maximum(pooled2, half)
    p2 = jnp.maximum(pooled2 + b2c_ref[...], 0.0)    # (4*TB, 4*nk2) f32, rows (qh, b)

    # ---- fc1 (accumulated over the 4 qh row-groups) + ReLU ----
    h = jnp.zeros((TB, w1_ref.shape[2]), jnp.float32)
    for qh in range(w1_ref.shape[0]):
        h = h + jnp.dot(p2[qh * TB:(qh + 1) * TB, :], w1_ref[qh],
                        preferred_element_type=jnp.float32)
    h = jnp.maximum(h + b1f_ref[...], 0.0)

    # ---- fc2 + ReLU, fc3, log_softmax ----
    h = jnp.maximum(jnp.dot(h, w2_ref[...],
                            preferred_element_type=jnp.float32) + b2f_ref[...],
                    0.0)
    z = jnp.dot(h, w3_ref[...], preferred_element_type=jnp.float32) + b3f_ref[...]
    z = z - jnp.max(z, axis=-1, keepdims=True)
    o_ref[...] = z - jnp.log(jnp.sum(jnp.exp(z), axis=-1, keepdims=True))


# ------------------------ weight re-layout (host side) ----------------------

def _build_conv1_toeplitz(w1, dtype):
    """(nk1, 1, 5, 5) -> (5, 28, 2*12*nk1); cols (gw, pw, co); banded along W."""
    nk1 = w1.shape[0]
    wT = jnp.transpose(w1[:, 0], (1, 2, 0))                       # (dh, dw, co)
    win = jnp.arange(28)
    ow = 2 * jnp.arange(12)[None, :] + jnp.arange(2)[:, None]     # (gw, pw)
    dw = win[:, None, None] - ow[None, :, :]                      # (28, 2, 12)
    valid = (dw >= 0) & (dw < 5)
    g = wT[:, jnp.clip(dw, 0, 4), :]                              # (5,28,2,12,nk1)
    t1 = jnp.where(valid[None, :, :, :, None], g, 0.0)
    return t1.reshape(5, 28, 2 * 12 * nk1).astype(dtype)


def _build_conv2_toeplitz(w2, dtype):
    """(nk2, nk1, 5, 5) -> (5, 12*nk1, 2*4*nk2); rows (pw, ci), cols (gw, qw, co)."""
    nk2, nk1 = w2.shape[0], w2.shape[1]
    wT = jnp.transpose(w2, (2, 3, 1, 0))                          # (dh, dw, ci, co)
    pw = jnp.arange(12)
    ow = 2 * jnp.arange(4)[None, :] + jnp.arange(2)[:, None]      # (gw, qw)
    dw = pw[:, None, None] - ow[None, :, :]                       # (12, 2, 4)
    valid = (dw >= 0) & (dw < 5)
    g = wT[:, jnp.clip(dw, 0, 4), :, :]                           # (5,12,2,4,nk1,nk2)
    t2 = jnp.where(valid[None, :, :, :, None, None], g, 0.0)
    t2 = jnp.transpose(t2, (0, 1, 4, 2, 3, 5))                    # (dh,pw,ci,gw,qw,co)
    return t2.reshape(5, 12 * nk1, 2 * 4 * nk2).astype(dtype)


# ------------------------------- forward pass --------------------------------

@functools.partial(jax.jit, static_argnames=("batch_tile",))
def cnn_target_mnist_forward(params, x_nchw, batch_tile=8):
    """Equivalent to CNNTarget_mnist.forward; input NCHW (B, 1, 28, 28)."""
    B, cin, H, W = x_nchw.shape
    if not (cin == 1 and H == 28 and W == 28):
        # TODO(synk): general in_channels / spatial sizes not supported.
        raise NotImplementedError("only (B, 1, 28, 28) inputs are supported")

    nk1 = params["conv1_w"].shape[0]
    nk2 = params["conv2_w"].shape[0]
    out_dim = params["fc3_w"].shape[0]
    cdt = jnp.bfloat16

    TB = batch_tile
    nsteps = max(2, -(-B // TB))           # always >= 2 grid steps (megacore)
    b_pad = nsteps * TB

    # input repack: (B,1,28,28) f32 -> (14, 2, B_pad, 28) bf16,
    # [r, parity, b, w] = x[b, 2r+parity, w]  (batch on sublanes, W on lanes)
    x = x_nchw.reshape(B, 28, 28).astype(cdt)
    x = jnp.pad(x, ((0, b_pad - B), (0, 0), (0, 0)))
    x = jnp.transpose(x.reshape(b_pad, 14, 2, 28), (1, 2, 0, 3))

    # conv weights as banded (Toeplitz-along-W) matrices with pool candidates
    # as two contiguous lane halves; biases tiled to the pooled column layout.
    t1 = _build_conv1_toeplitz(params["conv1_w"], cdt)            # (5, 28, 384)
    t2 = _build_conv2_toeplitz(params["conv2_w"], cdt)            # (5, 192, 256)
    b1c = jnp.tile(params["conv1_b"], 12).reshape(1, 12 * nk1).astype(jnp.float32)
    b2c = jnp.tile(params["conv2_b"], 4).reshape(1, 4 * nk2).astype(jnp.float32)

    # fc1 weight: PyTorch flatten order is (co, qh, qw); kernel feature order
    # is (qh, qw, co) and fc1 is accumulated over the 4 qh row-groups.
    f1 = params["fc1_w"]                                           # (120, nk2*16)
    h1 = f1.shape[0]
    w1fc = jnp.transpose(f1.reshape(h1, nk2, 4, 4), (2, 3, 1, 0))  # (qh,qw,co,out)
    w1fc = w1fc.reshape(4, 4 * nk2, h1).astype(jnp.float32)
    w2fc = params["fc2_w"].T.astype(jnp.float32)                   # (120, 84)
    w3fc = params["fc3_w"].T.astype(jnp.float32)                   # (84, out_dim)
    h2 = w2fc.shape[1]
    b1f = params["fc1_b"].reshape(1, -1).astype(jnp.float32)
    b2f = params["fc2_b"].reshape(1, -1).astype(jnp.float32)
    b3f = params["fc3_b"].reshape(1, -1).astype(jnp.float32)

    c1x, c1 = 2 * 12 * nk1, 12 * nk1
    c2x, c2 = 2 * 4 * nk2, 4 * nk2

    out = pl.pallas_call(
        _fused_forward_kernel,
        out_shape=jax.ShapeDtypeStruct((b_pad, out_dim), jnp.float32),
        grid=(nsteps,),
        in_specs=[
            pl.BlockSpec((14, 2, TB, 28), lambda i: (0, 0, i, 0)),   # input tile
            pl.BlockSpec((5, 28, c1x), lambda i: (0, 0, 0)),         # resident
            pl.BlockSpec((1, c1), lambda i: (0, 0)),
            pl.BlockSpec((5, c1, c2x), lambda i: (0, 0, 0)),
            pl.BlockSpec((1, c2), lambda i: (0, 0)),
            pl.BlockSpec((4, c2, h1), lambda i: (0, 0, 0)),
            pl.BlockSpec((1, h1), lambda i: (0, 0)),
            pl.BlockSpec((h1, h2), lambda i: (0, 0)),
            pl.BlockSpec((1, h2), lambda i: (0, 0)),
            pl.BlockSpec((h2, out_dim), lambda i: (0, 0)),
            pl.BlockSpec((1, out_dim), lambda i: (0, 0)),
        ],
        out_specs=pl.BlockSpec((TB, out_dim), lambda i: (i, 0)),
        scratch_shapes=[pltpu.VMEM((6, 2, TB, 12 * nk1), cdt)],
        compiler_params=pltpu.CompilerParams(
            dimension_semantics=("parallel",)),
    )(x, t1, b1c, t2, b2c, w1fc, b1f, w2fc, b2f, w3fc, b3f)
    return out[:B]


# ------------------------------ parameter init --------------------------------

def init_params(key, in_channels=1, n_kernels=16, out_dim=10):
    ks = jax.random.split(key, 10)
    scale = 0.05
    return {
        "conv1_w": scale * jax.random.normal(ks[0], (n_kernels, in_channels, 5, 5), jnp.float32),
        "conv1_b": scale * jax.random.normal(ks[1], (n_kernels,), jnp.float32),
        "conv2_w": scale * jax.random.normal(ks[2], (2 * n_kernels, n_kernels, 5, 5), jnp.float32),
        "conv2_b": scale * jax.random.normal(ks[3], (2 * n_kernels,), jnp.float32),
        "fc1_w": scale * jax.random.normal(ks[4], (120, 2 * n_kernels * 4 * 4), jnp.float32),
        "fc1_b": scale * jax.random.normal(ks[5], (120,), jnp.float32),
        "fc2_w": scale * jax.random.normal(ks[6], (84, 120), jnp.float32),
        "fc2_b": scale * jax.random.normal(ks[7], (84,), jnp.float32),
        "fc3_w": scale * jax.random.normal(ks[8], (out_dim, 84), jnp.float32),
        "fc3_b": scale * jax.random.normal(ks[9], (out_dim,), jnp.float32),
    }


# -------------------------- pure-JAX reference (f32) --------------------------

def _reference_forward(params, x_nchw):
    x = x_nchw.astype(jnp.float32)
    dn = ("NCHW", "OIHW", "NCHW")

    def conv(z, w, b):
        y = jax.lax.conv_general_dilated(z, w, (1, 1), "VALID",
                                         dimension_numbers=dn)
        return jax.nn.relu(y + b[None, :, None, None])

    def pool(z):
        return jnp.maximum(jnp.maximum(z[:, :, 0::2, 0::2], z[:, :, 0::2, 1::2]),
                           jnp.maximum(z[:, :, 1::2, 0::2], z[:, :, 1::2, 1::2]))

    z = pool(conv(x, params["conv1_w"], params["conv1_b"]))
    z = pool(conv(z, params["conv2_w"], params["conv2_b"]))
    v = z.reshape(z.shape[0], -1)
    v = jax.nn.relu(v @ params["fc1_w"].T + params["fc1_b"])
    v = jax.nn.relu(v @ params["fc2_w"].T + params["fc2_b"])
    v = v @ params["fc3_w"].T + params["fc3_b"]
    return jax.nn.log_softmax(v, axis=-1)


# ------------------------------------ main ------------------------------------

if __name__ == "__main__":
    key = jax.random.PRNGKey(0)
    k_param, k_x = jax.random.split(key)

    params = init_params(k_param, in_channels=1, n_kernels=16, out_dim=10)
    # MNIST-shaped input is required by fc1's hard-coded 2*n_kernels*4*4 = 512.
    x = jax.random.normal(k_x, (2, 1, 28, 28), jnp.float32)

    out = jax.block_until_ready(cnn_target_mnist_forward(params, x))

    assert out.shape == (2, 10), out.shape
    # rows of log_softmax must exp-sum to 1
    assert jnp.allclose(jnp.sum(jnp.exp(out), axis=1), 1.0, atol=1e-4)
    # matches the f32 reference within bf16 tolerance
    ref = _reference_forward(params, x)
    assert jnp.allclose(out, ref, atol=5e-2), (out, ref)

    print("KERNEL_OK")
</pallas_src>

<mosaic_0001>
module attributes {stable_mosaic.version = 11 : i64} {
  func.func @_fused_forward_kernel(%arg0: i32, %arg1: memref<14x2x8x28xbf16, #tpu.memory_space<vmem>>, %arg2: memref<5x28x384xbf16, #tpu.memory_space<vmem>>, %arg3: memref<1x192xf32, #tpu.memory_space<vmem>>, %arg4: memref<5x192x256xbf16, #tpu.memory_space<vmem>>, %arg5: memref<1x128xf32, #tpu.memory_space<vmem>>, %arg6: memref<4x128x120xf32, #tpu.memory_space<vmem>>, %arg7: memref<1x120xf32, #tpu.memory_space<vmem>>, %arg8: memref<120x84xf32, #tpu.memory_space<vmem>>, %arg9: memref<1x84xf32, #tpu.memory_space<vmem>>, %arg10: memref<84x10xf32, #tpu.memory_space<vmem>>, %arg11: memref<1x10xf32, #tpu.memory_space<vmem>>, %arg12: memref<8x10xf32, #tpu.memory_space<vmem>>, %arg13: memref<6x2x8x192xbf16, #tpu.memory_space<vmem>>) attributes {dimension_semantics = [#tpu.dimension_semantics<parallel>], iteration_bounds = array<i64: 2>, scalar_prefetch = 0 : i64, scratch_operands = 1 : i64, tpu.core_type = #tpu.core_type<tc>, window_params = [{transform_indices = @transform_0, window_bounds = array<i64: 14, 2, 8, 28>}, {pipeline_mode = #tpu.pipeline_mode<synchronous>, transform_indices = @transform_1, window_bounds = array<i64: 5, 28, 384>}, {pipeline_mode = #tpu.pipeline_mode<synchronous>, transform_indices = @transform_2, window_bounds = array<i64: 1, 192>}, {pipeline_mode = #tpu.pipeline_mode<synchronous>, transform_indices = @transform_3, window_bounds = array<i64: 5, 192, 256>}, {pipeline_mode = #tpu.pipeline_mode<synchronous>, transform_indices = @transform_4, window_bounds = array<i64: 1, 128>}, {pipeline_mode = #tpu.pipeline_mode<synchronous>, transform_indices = @transform_5, window_bounds = array<i64: 4, 128, 120>}, {pipeline_mode = #tpu.pipeline_mode<synchronous>, transform_indices = @transform_6, window_bounds = array<i64: 1, 120>}, {pipeline_mode = #tpu.pipeline_mode<synchronous>, transform_indices = @transform_7, window_bounds = array<i64: 120, 84>}, {pipeline_mode = #tpu.pipeline_mode<synchronous>, transform_indices = @transform_8, window_bounds = array<i64: 1, 84>}, {pipeline_mode = #tpu.pipeline_mode<synchronous>, transform_indices = @transform_9, window_bounds = array<i64: 84, 10>}, {pipeline_mode = #tpu.pipeline_mode<synchronous>, transform_indices = @transform_10, window_bounds = array<i64: 1, 10>}, {transform_indices = @transform_11, window_bounds = array<i64: 8, 10>}]} {
    %cst = arith.constant 0.000000e+00 : f32
    %0 = vector.broadcast %cst : f32 to vector<96x384xf32>
    %c0 = arith.constant 0 : index
    %c0_0 = arith.constant 0 : index
    %c0_1 = arith.constant 0 : index
    %c0_2 = arith.constant 0 : index
    %1 = vector.load %arg1[%c0, %c0_0, %c0_1, %c0_2] : memref<14x2x8x28xbf16, #tpu.memory_space<vmem>>, vector<12x1x8x28xbf16>
    %2 = vector.shape_cast %1 : vector<12x1x8x28xbf16> to vector<12x8x28xbf16>
    %3 = vector.shape_cast %2 : vector<12x8x28xbf16> to vector<96x28xbf16>
    %c0_3 = arith.constant 0 : index
    %c0_4 = arith.constant 0 : index
    %c0_5 = arith.constant 0 : index
    %4 = vector.load %arg2[%c0_3, %c0_4, %c0_5] : memref<5x28x384xbf16, #tpu.memory_space<vmem>>, vector<1x28x384xbf16>
    %5 = vector.shape_cast %4 : vector<1x28x384xbf16> to vector<28x384xbf16>
    %cst_6 = arith.constant dense<0.000000e+00> : vector<96x384xf32>
    %6 = tpu.matmul %3, %5, %cst_6 {dimension_numbers = #tpu.dot_dimension_numbers<[1], [0], [0], [1], [0, 0, 1, 1], [], []>} : vector<96x28xbf16>, vector<28x384xbf16>, vector<96x384xf32> -> vector<96x384xf32>
    %7 = arith.addf %0, %6 : vector<96x384xf32>
    %c0_7 = arith.constant 0 : index
    %c1 = arith.constant 1 : index
    %c0_8 = arith.constant 0 : index
    %c0_9 = arith.constant 0 : index
    %8 = vector.load %arg1[%c0_7, %c1, %c0_8, %c0_9] : memref<14x2x8x28xbf16, #tpu.memory_space<vmem>>, vector<12x1x8x28xbf16>
    %9 = vector.shape_cast %8 : vector<12x1x8x28xbf16> to vector<12x8x28xbf16>
    %10 = vector.shape_cast %9 : vector<12x8x28xbf16> to vector<96x28xbf16>
    %c1_10 = arith.constant 1 : index
    %c0_11 = arith.constant 0 : index
    %c0_12 = arith.constant 0 : index
    %11 = vector.load %arg2[%c1_10, %c0_11, %c0_12] : memref<5x28x384xbf16, #tpu.memory_space<vmem>>, vector<1x28x384xbf16>
    %12 = vector.shape_cast %11 : vector<1x28x384xbf16> to vector<28x384xbf16>
    %cst_13 = arith.constant dense<0.000000e+00> : vector<96x384xf32>
    %13 = tpu.matmul %10, %12, %cst_13 {dimension_numbers = #tpu.dot_dimension_numbers<[1], [0], [0], [1], [0, 0, 1, 1], [], []>} : vector<96x28xbf16>, vector<28x384xbf16>, vector<96x384xf32> -> vector<96x384xf32>
    %14 = arith.addf %7, %13 : vector<96x384xf32>
    %c1_14 = arith.constant 1 : index
    %c0_15 = arith.constant 0 : index
    %c0_16 = arith.constant 0 : index
    %c0_17 = arith.constant 0 : index
    %15 = vector.load %arg1[%c1_14, %c0_15, %c0_16, %c0_17] : memref<14x2x8x28xbf16, #tpu.memory_space<vmem>>, vector<12x1x8x28xbf16>
    %16 = vector.shape_cast %15 : vector<12x1x8x28xbf16> to vector<12x8x28xbf16>
    %17 = vector.shape_cast %16 : vector<12x8x28xbf16> to vector<96x28xbf16>
    %c2 = arith.constant 2 : index
    %c0_18 = arith.constant 0 : index
    %c0_19 = arith.constant 0 : index
    %18 = vector.load %arg2[%c2, %c0_18, %c0_19] : memref<5x28x384xbf16, #tpu.memory_space<vmem>>, vector<1x28x384xbf16>
    %19 = vector.shape_cast %18 : vector<1x28x384xbf16> to vector<28x384xbf16>
    %cst_20 = arith.constant dense<0.000000e+00> : vector<96x384xf32>
    %20 = tpu.matmul %17, %19, %cst_20 {dimension_numbers = #tpu.dot_dimension_numbers<[1], [0], [0], [1], [0, 0, 1, 1], [], []>} : vector<96x28xbf16>, vector<28x384xbf16>, vector<96x384xf32> -> vector<96x384xf32>
    %21 = arith.addf %14, %20 : vector<96x384xf32>
    %c1_21 = arith.constant 1 : index
    %c1_22 = arith.constant 1 : index
    %c0_23 = arith.constant 0 : index
    %c0_24 = arith.constant 0 : index
    %22 = vector.load %arg1[%c1_21, %c1_22, %c0_23, %c0_24] : memref<14x2x8x28xbf16, #tpu.memory_space<vmem>>, vector<12x1x8x28xbf16>
    %23 = vector.shape_cast %22 : vector<12x1x8x28xbf16> to vector<12x8x28xbf16>
    %24 = vector.shape_cast %23 : vector<12x8x28xbf16> to vector<96x28xbf16>
    %c3 = arith.constant 3 : index
    %c0_25 = arith.constant 0 : index
    %c0_26 = arith.constant 0 : index
    %25 = vector.load %arg2[%c3, %c0_25, %c0_26] : memref<5x28x384xbf16, #tpu.memory_space<vmem>>, vector<1x28x384xbf16>
    %26 = vector.shape_cast %25 : vector<1x28x384xbf16> to vector<28x384xbf16>
    %cst_27 = arith.constant dense<0.000000e+00> : vector<96x384xf32>
    %27 = tpu.matmul %24, %26, %cst_27 {dimension_numbers = #tpu.dot_dimension_numbers<[1], [0], [0], [1], [0, 0, 1, 1], [], []>} : vector<96x28xbf16>, vector<28x384xbf16>, vector<96x384xf32> -> vector<96x384xf32>
    %28 = arith.addf %21, %27 : vector<96x384xf32>
    %c2_28 = arith.constant 2 : index
    %c0_29 = arith.constant 0 : index
    %c0_30 = arith.constant 0 : index
    %c0_31 = arith.constant 0 : index
    %29 = vector.load %arg1[%c2_28, %c0_29, %c0_30, %c0_31] : memref<14x2x8x28xbf16, #tpu.memory_space<vmem>>, vector<12x1x8x28xbf16>
    %30 = vector.shape_cast %29 : vector<12x1x8x28xbf16> to vector<12x8x28xbf16>
    %31 = vector.shape_cast %30 : vector<12x8x28xbf16> to vector<96x28xbf16>
    %c4 = arith.constant 4 : index
    %c0_32 = arith.constant 0 : index
    %c0_33 = arith.constant 0 : index
    %32 = vector.load %arg2[%c4, %c0_32, %c0_33] : memref<5x28x384xbf16, #tpu.memory_space<vmem>>, vector<1x28x384xbf16>
    %33 = vector.shape_cast %32 : vector<1x28x384xbf16> to vector<28x384xbf16>
    %cst_34 = arith.constant dense<0.000000e+00> : vector<96x384xf32>
    %34 = tpu.matmul %31, %33, %cst_34 {dimension_numbers = #tpu.dot_dimension_numbers<[1], [0], [0], [1], [0, 0, 1, 1], [], []>} : vector<96x28xbf16>, vector<28x384xbf16>, vector<96x384xf32> -> vector<96x384xf32>
    %35 = arith.addf %28, %34 : vector<96x384xf32>
    %36 = vector.extract_strided_slice %35 {offsets = [0, 0], sizes = [96, 192], strides = [1, 1]} : vector<96x384xf32> to vector<96x192xf32>
    %37 = vector.extract_strided_slice %35 {offsets = [0, 192], sizes = [96, 192], strides = [1, 1]} : vector<96x384xf32> to vector<96x192xf32>
    %38 = arith.maximumf %36, %37 : vector<96x192xf32>
    %cst_35 = arith.constant 0.000000e+00 : f32
    %39 = vector.broadcast %cst_35 : f32 to vector<96x384xf32>
    %c0_36 = arith.constant 0 : index
    %c1_37 = arith.constant 1 : index
    %c0_38 = arith.constant 0 : index
    %c0_39 = arith.constant 0 : index
    %40 = vector.load %arg1[%c0_36, %c1_37, %c0_38, %c0_39] : memref<14x2x8x28xbf16, #tpu.memory_space<vmem>>, vector<12x1x8x28xbf16>
    %41 = vector.shape_cast %40 : vector<12x1x8x28xbf16> to vector<12x8x28xbf16>
    %42 = vector.shape_cast %41 : vector<12x8x28xbf16> to vector<96x28xbf16>
    %c0_40 = arith.constant 0 : index
    %c0_41 = arith.constant 0 : index
    %c0_42 = arith.constant 0 : index
    %43 = vector.load %arg2[%c0_40, %c0_41, %c0_42] : memref<5x28x384xbf16, #tpu.memory_space<vmem>>, vector<1x28x384xbf16>
    %44 = vector.shape_cast %43 : vector<1x28x384xbf16> to vector<28x384xbf16>
    %cst_43 = arith.constant dense<0.000000e+00> : vector<96x384xf32>
    %45 = tpu.matmul %42, %44, %cst_43 {dimension_numbers = #tpu.dot_dimension_numbers<[1], [0], [0], [1], [0, 0, 1, 1], [], []>} : vector<96x28xbf16>, vector<28x384xbf16>, vector<96x384xf32> -> vector<96x384xf32>
    %46 = arith.addf %39, %45 : vector<96x384xf32>
    %c1_44 = arith.constant 1 : index
    %c0_45 = arith.constant 0 : index
    %c0_46 = arith.constant 0 : index
    %c0_47 = arith.constant 0 : index
    %47 = vector.load %arg1[%c1_44, %c0_45, %c0_46, %c0_47] : memref<14x2x8x28xbf16, #tpu.memory_space<vmem>>, vector<12x1x8x28xbf16>
    %48 = vector.shape_cast %47 : vector<12x1x8x28xbf16> to vector<12x8x28xbf16>
    %49 = vector.shape_cast %48 : vector<12x8x28xbf16> to vector<96x28xbf16>
    %c1_48 = arith.constant 1 : index
    %c0_49 = arith.constant 0 : index
    %c0_50 = arith.constant 0 : index
    %50 = vector.load %arg2[%c1_48, %c0_49, %c0_50] : memref<5x28x384xbf16, #tpu.memory_space<vmem>>, vector<1x28x384xbf16>
    %51 = vector.shape_cast %50 : vector<1x28x384xbf16> to vector<28x384xbf16>
    %cst_51 = arith.constant dense<0.000000e+00> : vector<96x384xf32>
    %52 = tpu.matmul %49, %51, %cst_51 {dimension_numbers = #tpu.dot_dimension_numbers<[1], [0], [0], [1], [0, 0, 1, 1], [], []>} : vector<96x28xbf16>, vector<28x384xbf16>, vector<96x384xf32> -> vector<96x384xf32>
    %53 = arith.addf %46, %52 : vector<96x384xf32>
    %c1_52 = arith.constant 1 : index
    %c1_53 = arith.constant 1 : index
    %c0_54 = arith.constant 0 : index
    %c0_55 = arith.constant 0 : index
    %54 = vector.load %arg1[%c1_52, %c1_53, %c0_54, %c0_55] : memref<14x2x8x28xbf16, #tpu.memory_space<vmem>>, vector<12x1x8x28xbf16>
    %55 = vector.shape_cast %54 : vector<12x1x8x28xbf16> to vector<12x8x28xbf16>
    %56 = vector.shape_cast %55 : vector<12x8x28xbf16> to vector<96x28xbf16>
    %c2_56 = arith.constant 2 : index
    %c0_57 = arith.constant 0 : index
    %c0_58 = arith.constant 0 : index
    %57 = vector.load %arg2[%c2_56, %c0_57, %c0_58] : memref<5x28x384xbf16, #tpu.memory_space<vmem>>, vector<1x28x384xbf16>
    %58 = vector.shape_cast %57 : vector<1x28x384xbf16> to vector<28x384xbf16>
    %cst_59 = arith.constant dense<0.000000e+00> : vector<96x384xf32>
    %59 = tpu.matmul %56, %58, %cst_59 {dimension_numbers = #tpu.dot_dimension_numbers<[1], [0], [0], [1], [0, 0, 1, 1], [], []>} : vector<96x28xbf16>, vector<28x384xbf16>, vector<96x384xf32> -> vector<96x384xf32>
    %60 = arith.addf %53, %59 : vector<96x384xf32>
    %c2_60 = arith.constant 2 : index
    %c0_61 = arith.constant 0 : index
    %c0_62 = arith.constant 0 : index
    %c0_63 = arith.constant 0 : index
    %61 = vector.load %arg1[%c2_60, %c0_61, %c0_62, %c0_63] : memref<14x2x8x28xbf16, #tpu.memory_space<vmem>>, vector<12x1x8x28xbf16>
    %62 = vector.shape_cast %61 : vector<12x1x8x28xbf16> to vector<12x8x28xbf16>
    %63 = vector.shape_cast %62 : vector<12x8x28xbf16> to vector<96x28xbf16>
    %c3_64 = arith.constant 3 : index
    %c0_65 = arith.constant 0 : index
    %c0_66 = arith.constant 0 : index
    %64 = vector.load %arg2[%c3_64, %c0_65, %c0_66] : memref<5x28x384xbf16, #tpu.memory_space<vmem>>, vector<1x28x384xbf16>
    %65 = vector.shape_cast %64 : vector<1x28x384xbf16> to vector<28x384xbf16>
    %cst_67 = arith.constant dense<0.000000e+00> : vector<96x384xf32>
    %66 = tpu.matmul %63, %65, %cst_67 {dimension_numbers = #tpu.dot_dimension_numbers<[1], [0], [0], [1], [0, 0, 1, 1], [], []>} : vector<96x28xbf16>, vector<28x384xbf16>, vector<96x384xf32> -> vector<96x384xf32>
    %67 = arith.addf %60, %66 : vector<96x384xf32>
    %c2_68 = arith.constant 2 : index
    %c1_69 = arith.constant 1 : index
    %c0_70 = arith.constant 0 : index
    %c0_71 = arith.constant 0 : index
    %68 = vector.load %arg1[%c2_68, %c1_69, %c0_70, %c0_71] : memref<14x2x8x28xbf16, #tpu.memory_space<vmem>>, vector<12x1x8x28xbf16>
    %69 = vector.shape_cast %68 : vector<12x1x8x28xbf16> to vector<12x8x28xbf16>
    %70 = vector.shape_cast %69 : vector<12x8x28xbf16> to vector<96x28xbf16>
    %c4_72 = arith.constant 4 : index
    %c0_73 = arith.constant 0 : index
    %c0_74 = arith.constant 0 : index
    %71 = vector.load %arg2[%c4_72, %c0_73, %c0_74] : memref<5x28x384xbf16, #tpu.memory_space<vmem>>, vector<1x28x384xbf16>
    %72 = vector.shape_cast %71 : vector<1x28x384xbf16> to vector<28x384xbf16>
    %cst_75 = arith.constant dense<0.000000e+00> : vector<96x384xf32>
    %73 = tpu.matmul %70, %72, %cst_75 {dimension_numbers = #tpu.dot_dimension_numbers<[1], [0], [0], [1], [0, 0, 1, 1], [], []>} : vector<96x28xbf16>, vector<28x384xbf16>, vector<96x384xf32> -> vector<96x384xf32>
    %74 = arith.addf %67, %73 : vector<96x384xf32>
    %75 = vector.extract_strided_slice %74 {offsets = [0, 0], sizes = [96, 192], strides = [1, 1]} : vector<96x384xf32> to vector<96x192xf32>
    %76 = vector.extract_strided_slice %74 {offsets = [0, 192], sizes = [96, 192], strides = [1, 1]} : vector<96x384xf32> to vector<96x192xf32>
    %77 = arith.maximumf %75, %76 : vector<96x192xf32>
    %78 = arith.maximumf %38, %77 : vector<96x192xf32>
    %c0_76 = arith.constant 0 : index
    %c0_77 = arith.constant 0 : index
    %79 = vector.load %arg3[%c0_76, %c0_77] : memref<1x192xf32, #tpu.memory_space<vmem>>, vector<1x192xf32>
    %80 = vector.broadcast %79 : vector<1x192xf32> to vector<96x192xf32>
    %81 = arith.addf %78, %80 : vector<96x192xf32>
    %cst_78 = arith.constant 0.000000e+00 : f32
    %82 = vector.broadcast %cst_78 : f32 to vector<96x192xf32>
    %83 = arith.maximumf %81, %82 : vector<96x192xf32>
    %84 = arith.truncf %83 : vector<96x192xf32> to vector<96x192xbf16>
    %85 = vector.shape_cast %84 : vector<96x192xbf16> to vector<6x2x8x192xbf16>
    %c0_79 = arith.constant 0 : index
    %c0_80 = arith.constant 0 : index
    %c0_81 = arith.constant 0 : index
    %c0_82 = arith.constant 0 : index
    %86 = vector.load %arg13[%c0_79, %c0_80, %c0_81, %c0_82] : memref<6x2x8x192xbf16, #tpu.memory_space<vmem>>, vector<6x2x8x192xbf16>
    tpu.vector_store %arg13[%c0_79, %c0_80, %c0_81, %c0_82], %85 {strides = array<i32>} : memref<6x2x8x192xbf16, #tpu.memory_space<vmem>>, vector<6x2x8x192xbf16>,
    %cst_83 = arith.constant 0.000000e+00 : f32
    %87 = vector.broadcast %cst_83 : f32 to vector<32x256xf32>
    %c0_84 = arith.constant 0 : index
    %c0_85 = arith.constant 0 : index
    %c0_86 = arith.constant 0 : index
    %c0_87 = arith.constant 0 : index
    %88 = vector.load %arg13[%c0_84, %c0_85, %c0_86, %c0_87] : memref<6x2x8x192xbf16, #tpu.memory_space<vmem>>, vector<4x1x8x192xbf16>
    %89 = vector.shape_cast %88 : vector<4x1x8x192xbf16> to vector<4x8x192xbf16>
    %90 = vector.shape_cast %89 : vector<4x8x192xbf16> to vector<32x192xbf16>
    %c0_88 = arith.constant 0 : index
    %c0_89 = arith.constant 0 : index
    %c0_90 = arith.constant 0 : index
    %91 = vector.load %arg4[%c0_88, %c0_89, %c0_90] : memref<5x192x256xbf16, #tpu.memory_space<vmem>>, vector<1x192x256xbf16>
    %92 = vector.shape_cast %91 : vector<1x192x256xbf16> to vector<192x256xbf16>
    %cst_91 = arith.constant dense<0.000000e+00> : vector<32x256xf32>
    %93 = tpu.matmul %90, %92, %cst_91 {dimension_numbers = #tpu.dot_dimension_numbers<[1], [0], [0], [1], [0, 0, 1, 1], [], []>} : vector<32x192xbf16>, vector<192x256xbf16>, vector<32x256xf32> -> vector<32x256xf32>
    %94 = arith.addf %87, %93 : vector<32x256xf32>
    %c0_92 = arith.constant 0 : index
    %c1_93 = arith.constant 1 : index
    %c0_94 = arith.constant 0 : index
    %c0_95 = arith.constant 0 : index
    %95 = vector.load %arg13[%c0_92, %c1_93, %c0_94, %c0_95] : memref<6x2x8x192xbf16, #tpu.memory_space<vmem>>, vector<4x1x8x192xbf16>
    %96 = vector.shape_cast %95 : vector<4x1x8x192xbf16> to vector<4x8x192xbf16>
    %97 = vector.shape_cast %96 : vector<4x8x192xbf16> to vector<32x192xbf16>
    %c1_96 = arith.constant 1 : index
    %c0_97 = arith.constant 0 : index
    %c0_98 = arith.constant 0 : index
    %98 = vector.load %arg4[%c1_96, %c0_97, %c0_98] : memref<5x192x256xbf16, #tpu.memory_space<vmem>>, vector<1x192x256xbf16>
    %99 = vector.shape_cast %98 : vector<1x192x256xbf16> to vector<192x256xbf16>
    %cst_99 = arith.constant dense<0.000000e+00> : vector<32x256xf32>
    %100 = tpu.matmul %97, %99, %cst_99 {dimension_numbers = #tpu.dot_dimension_numbers<[1], [0], [0], [1], [0, 0, 1, 1], [], []>} : vector<32x192xbf16>, vector<192x256xbf16>, vector<32x256xf32> -> vector<32x256xf32>
    %101 = arith.addf %94, %100 : vector<32x256xf32>
    %c1_100 = arith.constant 1 : index
    %c0_101 = arith.constant 0 : index
    %c0_102 = arith.constant 0 : index
    %c0_103 = arith.constant 0 : index
    %102 = vector.load %arg13[%c1_100, %c0_101, %c0_102, %c0_103] : memref<6x2x8x192xbf16, #tpu.memory_space<vmem>>, vector<4x1x8x192xbf16>
    %103 = vector.shape_cast %102 : vector<4x1x8x192xbf16> to vector<4x8x192xbf16>
    %104 = vector.shape_cast %103 : vector<4x8x192xbf16> to vector<32x192xbf16>
    %c2_104 = arith.constant 2 : index
    %c0_105 = arith.constant 0 : index
    %c0_106 = arith.constant 0 : index
    %105 = vector.load %arg4[%c2_104, %c0_105, %c0_106] : memref<5x192x256xbf16, #tpu.memory_space<vmem>>, vector<1x192x256xbf16>
    %106 = vector.shape_cast %105 : vector<1x192x256xbf16> to vector<192x256xbf16>
    %cst_107 = arith.constant dense<0.000000e+00> : vector<32x256xf32>
    %107 = tpu.matmul %104, %106, %cst_107 {dimension_numbers = #tpu.dot_dimension_numbers<[1], [0], [0], [1], [0, 0, 1, 1], [], []>} : vector<32x192xbf16>, vector<192x256xbf16>, vector<32x256xf32> -> vector<32x256xf32>
    %108 = arith.addf %101, %107 : vector<32x256xf32>
    %c1_108 = arith.constant 1 : index
    %c1_109 = arith.constant 1 : index
    %c0_110 = arith.constant 0 : index
    %c0_111 = arith.constant 0 : index
    %109 = vector.load %arg13[%c1_108, %c1_109, %c0_110, %c0_111] : memref<6x2x8x192xbf16, #tpu.memory_space<vmem>>, vector<4x1x8x192xbf16>
    %110 = vector.shape_cast %109 : vector<4x1x8x192xbf16> to vector<4x8x192xbf16>
    %111 = vector.shape_cast %110 : vector<4x8x192xbf16> to vector<32x192xbf16>
    %c3_112 = arith.constant 3 : index
    %c0_113 = arith.constant 0 : index
    %c0_114 = arith.constant 0 : index
    %112 = vector.load %arg4[%c3_112, %c0_113, %c0_114] : memref<5x192x256xbf16, #tpu.memory_space<vmem>>, vector<1x192x256xbf16>
    %113 = vector.shape_cast %112 : vector<1x192x256xbf16> to vector<192x256xbf16>
    %cst_115 = arith.constant dense<0.000000e+00> : vector<32x256xf32>
    %114 = tpu.matmul %111, %113, %cst_115 {dimension_numbers = #tpu.dot_dimension_numbers<[1], [0], [0], [1], [0, 0, 1, 1], [], []>} : vector<32x192xbf16>, vector<192x256xbf16>, vector<32x256xf32> -> vector<32x256xf32>
    %115 = arith.addf %108, %114 : vector<32x256xf32>
    %c2_116 = arith.constant 2 : index
    %c0_117 = arith.constant 0 : index
    %c0_118 = arith.constant 0 : index
    %c0_119 = arith.constant 0 : index
    %116 = vector.load %arg13[%c2_116, %c0_117, %c0_118, %c0_119] : memref<6x2x8x192xbf16, #tpu.memory_space<vmem>>, vector<4x1x8x192xbf16>
    %117 = vector.shape_cast %116 : vector<4x1x8x192xbf16> to vector<4x8x192xbf16>
    %118 = vector.shape_cast %117 : vector<4x8x192xbf16> to vector<32x192xbf16>
    %c4_120 = arith.constant 4 : index
    %c0_121 = arith.constant 0 : index
    %c0_122 = arith.constant 0 : index
    %119 = vector.load %arg4[%c4_120, %c0_121, %c0_122] : memref<5x192x256xbf16, #tpu.memory_space<vmem>>, vector<1x192x256xbf16>
    %120 = vector.shape_cast %119 : vector<1x192x256xbf16> to vector<192x256xbf16>
    %cst_123 = arith.constant dense<0.000000e+00> : vector<32x256xf32>
    %121 = tpu.matmul %118, %120, %cst_123 {dimension_numbers = #tpu.dot_dimension_numbers<[1], [0], [0], [1], [0, 0, 1, 1], [], []>} : vector<32x192xbf16>, vector<192x256xbf16>, vector<32x256xf32> -> vector<32x256xf32>
    %122 = arith.addf %115, %121 : vector<32x256xf32>
    %123 = vector.extract_strided_slice %122 {offsets = [0, 0], sizes = [32, 128], strides = [1, 1]} : vector<32x256xf32> to vector<32x128xf32>
    %124 = vector.extract_strided_slice %122 {offsets = [0, 128], sizes = [32, 128], strides = [1, 1]} : vector<32x256xf32> to vector<32x128xf32>
    %125 = arith.maximumf %123, %124 : vector<32x128xf32>
    %cst_124 = arith.constant 0.000000e+00 : f32
    %126 = vector.broadcast %cst_124 : f32 to vector<32x256xf32>
    %c0_125 = arith.constant 0 : index
    %c1_126 = arith.constant 1 : index
    %c0_127 = arith.constant 0 : index
    %c0_128 = arith.constant 0 : index
    %127 = vector.load %arg13[%c0_125, %c1_126, %c0_127, %c0_128] : memref<6x2x8x192xbf16, #tpu.memory_space<vmem>>, vector<4x1x8x192xbf16>
    %128 = vector.shape_cast %127 : vector<4x1x8x192xbf16> to vector<4x8x192xbf16>
    %129 = vector.shape_cast %128 : vector<4x8x192xbf16> to vector<32x192xbf16>
    %c0_129 = arith.constant 0 : index
    %c0_130 = arith.constant 0 : index
    %c0_131 = arith.constant 0 : index
    %130 = vector.load %arg4[%c0_129, %c0_130, %c0_131] : memref<5x192x256xbf16, #tpu.memory_space<vmem>>, vector<1x192x256xbf16>
    %131 = vector.shape_cast %130 : vector<1x192x256xbf16> to vector<192x256xbf16>
    %cst_132 = arith.constant dense<0.000000e+00> : vector<32x256xf32>
    %132 = tpu.matmul %129, %131, %cst_132 {dimension_numbers = #tpu.dot_dimension_numbers<[1], [0], [0], [1], [0, 0, 1, 1], [], []>} : vector<32x192xbf16>, vector<192x256xbf16>, vector<32x256xf32> -> vector<32x256xf32>
    %133 = arith.addf %126, %132 : vector<32x256xf32>
    %c1_133 = arith.constant 1 : index
    %c0_134 = arith.constant 0 : index
    %c0_135 = arith.constant 0 : index
    %c0_136 = arith.constant 0 : index
    %134 = vector.load %arg13[%c1_133, %c0_134, %c0_135, %c0_136] : memref<6x2x8x192xbf16, #tpu.memory_space<vmem>>, vector<4x1x8x192xbf16>
    %135 = vector.shape_cast %134 : vector<4x1x8x192xbf16> to vector<4x8x192xbf16>
    %136 = vector.shape_cast %135 : vector<4x8x192xbf16> to vector<32x192xbf16>
    %c1_137 = arith.constant 1 : index
    %c0_138 = arith.constant 0 : index
    %c0_139 = arith.constant 0 : index
    %137 = vector.load %arg4[%c1_137, %c0_138, %c0_139] : memref<5x192x256xbf16, #tpu.memory_space<vmem>>, vector<1x192x256xbf16>
    %138 = vector.shape_cast %137 : vector<1x192x256xbf16> to vector<192x256xbf16>
    %cst_140 = arith.constant dense<0.000000e+00> : vector<32x256xf32>
    %139 = tpu.matmul %136, %138, %cst_140 {dimension_numbers = #tpu.dot_dimension_numbers<[1], [0], [0], [1], [0, 0, 1, 1], [], []>} : vector<32x192xbf16>, vector<192x256xbf16>, vector<32x256xf32> -> vector<32x256xf32>
    %140 = arith.addf %133, %139 : vector<32x256xf32>
    %c1_141 = arith.constant 1 : index
    %c1_142 = arith.constant 1 : index
    %c0_143 = arith.constant 0 : index
    %c0_144 = arith.constant 0 : index
    %141 = vector.load %arg13[%c1_141, %c1_142, %c0_143, %c0_144] : memref<6x2x8x192xbf16, #tpu.memory_space<vmem>>, vector<4x1x8x192xbf16>
    %142 = vector.shape_cast %141 : vector<4x1x8x192xbf16> to vector<4x8x192xbf16>
    %143 = vector.shape_cast %142 : vector<4x8x192xbf16> to vector<32x192xbf16>
    %c2_145 = arith.constant 2 : index
    %c0_146 = arith.constant 0 : index
    %c0_147 = arith.constant 0 : index
    %144 = vector.load %arg4[%c2_145, %c0_146, %c0_147] : memref<5x192x256xbf16, #tpu.memory_space<vmem>>, vector<1x192x256xbf16>
    %145 = vector.shape_cast %144 : vector<1x192x256xbf16> to vector<192x256xbf16>
    %cst_148 = arith.constant dense<0.000000e+00> : vector<32x256xf32>
    %146 = tpu.matmul %143, %145, %cst_148 {dimension_numbers = #tpu.dot_dimension_numbers<[1], [0], [0], [1], [0, 0, 1, 1], [], []>} : vector<32x192xbf16>, vector<192x256xbf16>, vector<32x256xf32> -> vector<32x256xf32>
    %147 = arith.addf %140, %146 : vector<32x256xf32>
    %c2_149 = arith.constant 2 : index
    %c0_150 = arith.constant 0 : index
    %c0_151 = arith.constant 0 : index
    %c0_152 = arith.constant 0 : index
    %148 = vector.load %arg13[%c2_149, %c0_150, %c0_151, %c0_152] : memref<6x2x8x192xbf16, #tpu.memory_space<vmem>>, vector<4x1x8x192xbf16>
    %149 = vector.shape_cast %148 : vector<4x1x8x192xbf16> to vector<4x8x192xbf16>
    %150 = vector.shape_cast %149 : vector<4x8x192xbf16> to vector<32x192xbf16>
    %c3_153 = arith.constant 3 : index
    %c0_154 = arith.constant 0 : index
    %c0_155 = arith.constant 0 : index
    %151 = vector.load %arg4[%c3_153, %c0_154, %c0_155] : memref<5x192x256xbf16, #tpu.memory_space<vmem>>, vector<1x192x256xbf16>
    %152 = vector.shape_cast %151 : vector<1x192x256xbf16> to vector<192x256xbf16>
    %cst_156 = arith.constant dense<0.000000e+00> : vector<32x256xf32>
    %153 = tpu.matmul %150, %152, %cst_156 {dimension_numbers = #tpu.dot_dimension_numbers<[1], [0], [0], [1], [0, 0, 1, 1], [], []>} : vector<32x192xbf16>, vector<192x256xbf16>, vector<32x256xf32> -> vector<32x256xf32>
    %154 = arith.addf %147, %153 : vector<32x256xf32>
    %c2_157 = arith.constant 2 : index
    %c1_158 = arith.constant 1 : index
    %c0_159 = arith.constant 0 : index
    %c0_160 = arith.constant 0 : index
    %155 = vector.load %arg13[%c2_157, %c1_158, %c0_159, %c0_160] : memref<6x2x8x192xbf16, #tpu.memory_space<vmem>>, vector<4x1x8x192xbf16>
    %156 = vector.shape_cast %155 : vector<4x1x8x192xbf16> to vector<4x8x192xbf16>
    %157 = vector.shape_cast %156 : vector<4x8x192xbf16> to vector<32x192xbf16>
    %c4_161 = arith.constant 4 : index
    %c0_162 = arith.constant 0 : index
    %c0_163 = arith.constant 0 : index
    %158 = vector.load %arg4[%c4_161, %c0_162, %c0_163] : memref<5x192x256xbf16, #tpu.memory_space<vmem>>, vector<1x192x256xbf16>
    %159 = vector.shape_cast %158 : vector<1x192x256xbf16> to vector<192x256xbf16>
    %cst_164 = arith.constant dense<0.000000e+00> : vector<32x256xf32>
    %160 = tpu.matmul %157, %159, %cst_164 {dimension_numbers = #tpu.dot_dimension_numbers<[1], [0], [0], [1], [0, 0, 1, 1], [], []>} : vector<32x192xbf16>, vector<192x256xbf16>, vector<32x256xf32> -> vector<32x256xf32>
    %161 = arith.addf %154, %160 : vector<32x256xf32>
    %162 = vector.extract_strided_slice %161 {offsets = [0, 0], sizes = [32, 128], strides = [1, 1]} : vector<32x256xf32> to vector<32x128xf32>
    %163 = vector.extract_strided_slice %161 {offsets = [0, 128], sizes = [32, 128], strides = [1, 1]} : vector<32x256xf32> to vector<32x128xf32>
    %164 = arith.maximumf %162, %163 : vector<32x128xf32>
    %165 = arith.maximumf %125, %164 : vector<32x128xf32>
    %c0_165 = arith.constant 0 : index
    %c0_166 = arith.constant 0 : index
    %166 = vector.load %arg5[%c0_165, %c0_166] : memref<1x128xf32, #tpu.memory_space<vmem>>, vector<1x128xf32>
    %167 = vector.broadcast %166 : vector<1x128xf32> to vector<32x128xf32>
    %168 = arith.addf %165, %167 : vector<32x128xf32>
    %cst_167 = arith.constant 0.000000e+00 : f32
    %169 = vector.broadcast %cst_167 : f32 to vector<32x128xf32>
    %170 = arith.maximumf %168, %169 : vector<32x128xf32>
    %cst_168 = arith.constant 0.000000e+00 : f32
    %171 = vector.broadcast %cst_168 : f32 to vector<8x120xf32>
    %172 = vector.extract_strided_slice %170 {offsets = [0, 0], sizes = [8, 128], strides = [1, 1]} : vector<32x128xf32> to vector<8x128xf32>
    %c0_169 = arith.constant 0 : index
    %c0_170 = arith.constant 0 : index
    %c0_171 = arith.constant 0 : index
    %173 = vector.load %arg6[%c0_169, %c0_170, %c0_171] : memref<4x128x120xf32, #tpu.memory_space<vmem>>, vector<1x128x120xf32>
    %174 = vector.shape_cast %173 : vector<1x128x120xf32> to vector<128x120xf32>
    %cst_172 = arith.constant dense<0.000000e+00> : vector<8x120xf32>
    %175 = tpu.matmul %172, %174, %cst_172 {dimension_numbers = #tpu.dot_dimension_numbers<[1], [0], [0], [1], [0, 0, 1, 1], [], []>} : vector<8x128xf32>, vector<128x120xf32>, vector<8x120xf32> -> vector<8x120xf32>
    %176 = arith.addf %171, %175 : vector<8x120xf32>
    %177 = vector.extract_strided_slice %170 {offsets = [8, 0], sizes = [8, 128], strides = [1, 1]} : vector<32x128xf32> to vector<8x128xf32>
    %c1_173 = arith.constant 1 : index
    %c0_174 = arith.constant 0 : index
    %c0_175 = arith.constant 0 : index
    %178 = vector.load %arg6[%c1_173, %c0_174, %c0_175] : memref<4x128x120xf32, #tpu.memory_space<vmem>>, vector<1x128x120xf32>
    %179 = vector.shape_cast %178 : vector<1x128x120xf32> to vector<128x120xf32>
    %cst_176 = arith.constant dense<0.000000e+00> : vector<8x120xf32>
    %180 = tpu.matmul %177, %179, %cst_176 {dimension_numbers = #tpu.dot_dimension_numbers<[1], [0], [0], [1], [0, 0, 1, 1], [], []>} : vector<8x128xf32>, vector<128x120xf32>, vector<8x120xf32> -> vector<8x120xf32>
    %181 = arith.addf %176, %180 : vector<8x120xf32>
    %182 = vector.extract_strided_slice %170 {offsets = [16, 0], sizes = [8, 128], strides = [1, 1]} : vector<32x128xf32> to vector<8x128xf32>
    %c2_177 = arith.constant 2 : index
    %c0_178 = arith.constant 0 : index
    %c0_179 = arith.constant 0 : index
    %183 = vector.load %arg6[%c2_177, %c0_178, %c0_179] : memref<4x128x120xf32, #tpu.memory_space<vmem>>, vector<1x128x120xf32>
    %184 = vector.shape_cast %183 : vector<1x128x120xf32> to vector<128x120xf32>
    %cst_180 = arith.constant dense<0.000000e+00> : vector<8x120xf32>
    %185 = tpu.matmul %182, %184, %cst_180 {dimension_numbers = #tpu.dot_dimension_numbers<[1], [0], [0], [1], [0, 0, 1, 1], [], []>} : vector<8x128xf32>, vector<128x120xf32>, vector<8x120xf32> -> vector<8x120xf32>
    %186 = arith.addf %181, %185 : vector<8x120xf32>
    %187 = vector.extract_strided_slice %170 {offsets = [24, 0], sizes = [8, 128], strides = [1, 1]} : vector<32x128xf32> to vector<8x128xf32>
    %c3_181 = arith.constant 3 : index
    %c0_182 = arith.constant 0 : index
    %c0_183 = arith.constant 0 : index
    %188 = vector.load %arg6[%c3_181, %c0_182, %c0_183] : memref<4x128x120xf32, #tpu.memory_space<vmem>>, vector<1x128x120xf32>
    %189 = vector.shape_cast %188 : vector<1x128x120xf32> to vector<128x120xf32>
    %cst_184 = arith.constant dense<0.000000e+00> : vector<8x120xf32>
    %190 = tpu.matmul %187, %189, %cst_184 {dimension_numbers = #tpu.dot_dimension_numbers<[1], [0], [0], [1], [0, 0, 1, 1], [], []>} : vector<8x128xf32>, vector<128x120xf32>, vector<8x120xf32> -> vector<8x120xf32>
    %191 = arith.addf %186, %190 : vector<8x120xf32>
    %c0_185 = arith.constant 0 : index
    %c0_186 = arith.constant 0 : index
    %192 = vector.load %arg7[%c0_185, %c0_186] : memref<1x120xf32, #tpu.memory_space<vmem>>, vector<1x120xf32>
    %193 = vector.broadcast %192 : vector<1x120xf32> to vector<8x120xf32>
    %194 = arith.addf %191, %193 : vector<8x120xf32>
    %cst_187 = arith.constant 0.000000e+00 : f32
    %195 = vector.broadcast %cst_187 : f32 to vector<8x120xf32>
    %196 = arith.maximumf %194, %195 : vector<8x120xf32>
    %c0_188 = arith.constant 0 : index
    %c0_189 = arith.constant 0 : index
    %197 = vector.load %arg8[%c0_188, %c0_189] : memref<120x84xf32, #tpu.memory_space<vmem>>, vector<120x84xf32>
    %cst_190 = arith.constant dense<0.000000e+00> : vector<8x84xf32>
    %198 = tpu.matmul %196, %197, %cst_190 {dimension_numbers = #tpu.dot_dimension_numbers<[1], [0], [0], [1], [0, 0, 1, 1], [], []>} : vector<8x120xf32>, vector<120x84xf32>, vector<8x84xf32> -> vector<8x84xf32>
    %c0_191 = arith.constant 0 : index
    %c0_192 = arith.constant 0 : index
    %199 = vector.load %arg9[%c0_191, %c0_192] : memref<1x84xf32, #tpu.memory_space<vmem>>, vector<1x84xf32>
    %200 = vector.broadcast %199 : vector<1x84xf32> to vector<8x84xf32>
    %201 = arith.addf %198, %200 : vector<8x84xf32>
    %cst_193 = arith.constant 0.000000e+00 : f32
    %202 = vector.broadcast %cst_193 : f32 to vector<8x84xf32>
    %203 = arith.maximumf %201, %202 : vector<8x84xf32>
    %c0_194 = arith.constant 0 : index
    %c0_195 = arith.constant 0 : index
    %204 = vector.load %arg10[%c0_194, %c0_195] : memref<84x10xf32, #tpu.memory_space<vmem>>, vector<84x10xf32>
    %cst_196 = arith.constant dense<0.000000e+00> : vector<8x10xf32>
    %205 = tpu.matmul %203, %204, %cst_196 {dimension_numbers = #tpu.dot_dimension_numbers<[1], [0], [0], [1], [0, 0, 1, 1], [], []>} : vector<8x84xf32>, vector<84x10xf32>, vector<8x10xf32> -> vector<8x10xf32>
    %c0_197 = arith.constant 0 : index
    %c0_198 = arith.constant 0 : index
    %206 = vector.load %arg11[%c0_197, %c0_198] : memref<1x10xf32, #tpu.memory_space<vmem>>, vector<1x10xf32>
    %207 = vector.broadcast %206 : vector<1x10xf32> to vector<8x10xf32>
    %208 = arith.addf %205, %207 : vector<8x10xf32>
    %cst_199 = arith.constant dense<0xFF800000> : vector<8xf32>
    %209 = vector.multi_reduction <maximumf>, %208, %cst_199 [1] : vector<8x10xf32> to vector<8xf32>
    %210 = vector.shape_cast %209 : vector<8xf32> to vector<8x1xf32>
    %211 = vector.broadcast %210 : vector<8x1xf32> to vector<8x10xf32>
    %212 = arith.subf %208, %211 : vector<8x10xf32>
    %213 = math.exp %212 : vector<8x10xf32>
    %cst_200 = arith.constant dense<0.000000e+00> : vector<8xf32>
    %214 = vector.multi_reduction <add>, %213, %cst_200 [1] : vector<8x10xf32> to vector<8xf32>
    %215 = vector.shape_cast %214 : vector<8xf32> to vector<8x1xf32>
    %216 = math.log %215 : vector<8x1xf32>
    %217 = vector.broadcast %216 : vector<8x1xf32> to vector<8x10xf32>
    %218 = arith.subf %212, %217 : vector<8x10xf32>
    %c0_201 = arith.constant 0 : index
    %c0_202 = arith.constant 0 : index
    %219 = vector.load %arg12[%c0_201, %c0_202] : memref<8x10xf32, #tpu.memory_space<vmem>>, vector<8x10xf32>
    tpu.vector_store %arg12[%c0_201, %c0_202], %218 {strides = array<i32>} : memref<8x10xf32, #tpu.memory_space<vmem>>, vector<8x10xf32>,
    return
  }
  func.func @transform_0(%arg0: i32) -> (i32, i32, i32, i32) {
    %c0_i32 = arith.constant 0 : i32
    %c0_i32_0 = arith.constant 0 : i32
    %c0_i32_1 = arith.constant 0 : i32
    %c0_i32_2 = arith.constant 0 : i32
    return %c0_i32, %c0_i32_0, %arg0, %c0_i32_1 : i32, i32, i32, i32
  }
  func.func @transform_1(%arg0: i32) -> (i32, i32, i32) {
    %c0_i32 = arith.constant 0 : i32
    %c0_i32_0 = arith.constant 0 : i32
    %c0_i32_1 = arith.constant 0 : i32
    %c0_i32_2 = arith.constant 0 : i32
    return %c0_i32, %c0_i32_0, %c0_i32_1 : i32, i32, i32
  }
  func.func @transform_2(%arg0: i32) -> (i32, i32) {
    %c0_i32 = arith.constant 0 : i32
    %c0_i32_0 = arith.constant 0 : i32
    %c0_i32_1 = arith.constant 0 : i32
    return %c0_i32, %c0_i32_0 : i32, i32
  }
  func.func @transform_3(%arg0: i32) -> (i32, i32, i32) {
    %c0_i32 = arith.constant 0 : i32
    %c0_i32_0 = arith.constant 0 : i32
    %c0_i32_1 = arith.constant 0 : i32
    %c0_i32_2 = arith.constant 0 : i32
    return %c0_i32, %c0_i32_0, %c0_i32_1 : i32, i32, i32
  }
  func.func @transform_4(%arg0: i32) -> (i32, i32) {
    %c0_i32 = arith.constant 0 : i32
    %c0_i32_0 = arith.constant 0 : i32
    %c0_i32_1 = arith.constant 0 : i32
    return %c0_i32, %c0_i32_0 : i32, i32
  }
  func.func @transform_5(%arg0: i32) -> (i32, i32, i32) {
    %c0_i32 = arith.constant 0 : i32
    %c0_i32_0 = arith.constant 0 : i32
    %c0_i32_1 = arith.constant 0 : i32
    %c0_i32_2 = arith.constant 0 : i32
    return %c0_i32, %c0_i32_0, %c0_i32_1 : i32, i32, i32
  }
  func.func @transform_6(%arg0: i32) -> (i32, i32) {
    %c0_i32 = arith.constant 0 : i32
    %c0_i32_0 = arith.constant 0 : i32
    %c0_i32_1 = arith.constant 0 : i32
    return %c0_i32, %c0_i32_0 : i32, i32
  }
  func.func @transform_7(%arg0: i32) -> (i32, i32) {
    %c0_i32 = arith.constant 0 : i32
    %c0_i32_0 = arith.constant 0 : i32
    %c0_i32_1 = arith.constant 0 : i32
    return %c0_i32, %c0_i32_0 : i32, i32
  }
  func.func @transform_8(%arg0: i32) -> (i32, i32) {
    %c0_i32 = arith.constant 0 : i32
    %c0_i32_0 = arith.constant 0 : i32
    %c0_i32_1 = arith.constant 0 : i32
    return %c0_i32, %c0_i32_0 : i32, i32
  }
  func.func @transform_9(%arg0: i32) -> (i32, i32) {
    %c0_i32 = arith.constant 0 : i32
    %c0_i32_0 = arith.constant 0 : i32
    %c0_i32_1 = arith.constant 0 : i32
    return %c0_i32, %c0_i32_0 : i32, i32
  }
  func.func @transform_10(%arg0: i32) -> (i32, i32) {
    %c0_i32 = arith.constant 0 : i32
    %c0_i32_0 = arith.constant 0 : i32
    %c0_i32_1 = arith.constant 0 : i32
    return %c0_i32, %c0_i32_0 : i32, i32
  }
  func.func @transform_11(%arg0: i32) -> (i32, i32) {
    %c0_i32 = arith.constant 0 : i32
    %c0_i32_0 = arith.constant 0 : i32
    return %arg0, %c0_i32 : i32, i32
  }
}

</mosaic_0001>

<llo_original>
// kernel: tile.13
$region0: #{tile.13}
  #allocation0 [shape = 's32[1]{0}', space=sflag, size = 0x4, scoped, tag = 'scoped memory for tile.13']
  %s0 = inlined_call_operand.vmem [shape: f32[16], index: 0, kind: input, shape index: {}]
  %s1 = inlined_call_operand.vmem [shape: f32[12,16], index: 1, kind: output, shape index: {}]
  // Predicated region
  $region2: #{tile.13} parent=0 // pred_check
    _
  $region3: #{tile.13} parent=0 // pred_check_branch
    %3 = sbr.rel (0) target = $region5
  $region4: #{tile.13} parent=0 // pred_region
    _
  $region5: #{tile.13} parent=0 // pred_fallthru
    _
  %v4 = vld [vmem:[%s0] ss:$0 sm:$0xff]
  %5 = vst [vmem:[%s1] sm:$0xff] %v4
  %s6 = scalar_lea.vmem %s1, 8
  %7 = vst [vmem:[%s6] sm:$0xff] %v4

// kernel: tile.14
$region0: #{tile.14}
  %s0 = inlined_call_operand.vmem [shape: f32[12,16], index: 0, kind: input, shape index: {}]
  %s1 = inlined_call_operand.vmem [shape: f32[1,192], index: 1, kind: output, shape index: {}]
  $region1: #{tile.14} parent=0
    #allocation0 [shape = 'u8[8192]{0}', space=vmem, size = 0x2000, scoped, tag = 'scoped mem for output reshape']
    %s2 = smov 3
    %v3 = vld [vmem:[%s0] ss:$8 sm:%s2]
    %vm4 = vcmask 130048
    %5 = vst.msk [vmem:[#allocation0] ss:$8 sm:$0x3] %vm4, %v3
    %s6 = scalar_lea.vmem %s0, 7
    %v7 = vld [vmem:[%s6] sm:$0x1]
    %8 = vrot.lane.b32.xlu0 %v7, 112
    %v9 = vpop.permute.xlu0 %8
    %vm10 = vcmask 1048448
    %11 = vst.msk [vmem:[#allocation0] sm:$0x1] %vm10, %v9
    %s12 = scalar_lea.vmem %s0, 6
    %v13 = vld [vmem:[%s12] sm:$0x1]
    %14 = vrot.lane.b32.xlu0 %v13, 96
    %v15 = vpop.permute.xlu0 %14
    %vm16 = vcmask 917248
    %17 = vst.msk [vmem:[#allocation0] sm:$0x1] %vm16, %v15
    %s18 = scalar_lea.vmem %s0, 5
    %v19 = vld [vmem:[%s18] sm:$0x1]
    %20 = vrot.lane.b32.xlu0 %v19, 80
    %v21 = vpop.permute.xlu0 %20
    %vm22 = vcmask 786048
    %23 = vst.msk [vmem:[#allocation0] sm:$0x1] %vm22, %v21
    %s24 = scalar_lea.vmem %s0, 4
    %v25 = vld [vmem:[%s24] sm:$0x1]
    %26 = vrot.lane.b32.xlu0 %v25, 64
    %v27 = vpop.permute.xlu0 %26
    %vm28 = vcmask 654848
    %29 = vst.msk [vmem:[#allocation0] sm:$0x1] %vm28, %v27
    %s30 = scalar_lea.vmem %s0, 3
    %s31 = smov 3
    %v32 = vld [vmem:[%s30] ss:$8 sm:%s31]
    %33 = vrot.lane.b32.xlu0 %v32, 48
    %v34 = vpop.permute.xlu0 %33
    %vm35 = vcmask 523648
    %36 = vst.msk [vmem:[#allocation0] ss:$8 sm:$0x3] %vm35, %v34
    %s37 = scalar_lea.vmem %s0, 2
    %s38 = smov 3
    %v39 = vld [vmem:[%s37] ss:$8 sm:%s38]
    %40 = vrot.lane.b32.xlu0 %v39, 32
    %v41 = vpop.permute.xlu0 %40
    %vm42 = vcmask 392448
    %43 = vst.msk [vmem:[#allocation0] ss:$8 sm:$0x3] %vm42, %v41
    %s44 = scalar_lea.vmem %s0, 1
    %s45 = smov 3
    %v46 = vld [vmem:[%s44] ss:$8 sm:%s45]
    %47 = vrot.lane.b32.xlu0 %v46, 16
    %v48 = vpop.permute.xlu0 %47
    %vm49 = vcmask 261248
    %50 = vst.msk [vmem:[#allocation0] ss:$8 sm:$0x3] %vm49, %v48
    %s52 = ssub.s32 2, 1
    %v53 = vld [vmem:[#allocation0] sm:%s52]
    %s55 = ssub.s32 2, 1
    %56 = vst [vmem:[%s1] sm:%s55] %v53
    %s57 = scalar_lea.vmem [#allocation0], 8
    %v58 = vld [vmem:[%s57] sm:%s52]
    %s60 = ssub.s32 2, 1
    %s61 = scalar_lea.vmem %s1, 1
    %62 = vst [vmem:[%s61] sm:%s60] %v58

// kernel: tile.18
$region0: #{tile.18}
  #allocation0 [shape = 's32[1]{0}', space=sflag, size = 0x4, scoped, tag = 'scoped memory for tile.18']
  %s0 = inlined_call_operand.vmem [shape: f32[32], index: 0, kind: input, shape index: {}]
  %s1 = inlined_call_operand.vmem [shape: f32[4,32], index: 1, kind: output, shape index: {}]
  // Predicated region
  $region2: #{tile.18} parent=0 // pred_check
    _
  $region3: #{tile.18} parent=0 // pred_check_branch
    %3 = sbr.rel (0) target = $region5
  $region4: #{tile.18} parent=0 // pred_region
    _
  $region5: #{tile.18} parent=0 // pred_fallthru
    _
  %v4 = vld [vmem:[%s0] ss:$0 sm:$0xff]
  %5 = vst [vmem:[%s1] sm:$0xf] %v4

// kernel: tile.19
$region0: #{tile.19}
  %s0 = inlined_call_operand.vmem [shape: f32[4,32], index: 0, kind: input, shape index: {}]
  %s1 = inlined_call_operand.vmem [shape: f32[1,128], index: 1, kind: output, shape index: {}]
  $region1: #{tile.19} parent=0
    #allocation0 [shape = 'u8[4096]{0}', space=vmem, size = 0x1000, scoped, tag = 'scoped mem for output reshape']
    #allocation1 [shape = 'u8[4096]{0}', space=vmem, size = 0x1000, scoped, tag = 'scoped mem for input reshape']
    %s3 = ssub.s32 16, 1
    %v4 = vld [vmem:[%s0] sm:%s3]
    %5 = vst [vmem:[#allocation1] sm:%s3] %v4
    %v6 = vld [vmem:[#allocation1] sm:$0x1]
    %vm7 = vcmask 261120
    %8 = vst.msk [vmem:[#allocation0] sm:$0x1] %vm7, %v6
    %s9 = scalar_lea.vmem [#allocation1], 3
    %v10 = vld [vmem:[%s9] sm:$0x1]
    %11 = vrot.lane.b32.xlu0 %v10, 96
    %v12 = vpop.permute.xlu0 %11
    %vm13 = vcmask 1048320
    %14 = vst.msk [vmem:[#allocation0] sm:$0x1] %vm13, %v12
    %s15 = scalar_lea.vmem [#allocation1], 2
    %v16 = vld [vmem:[%s15] sm:$0x1]
    %17 = vrot.lane.b32.xlu0 %v16, 64
    %v18 = vpop.permute.xlu0 %17
    %vm19 = vcmask 785920
    %20 = vst.msk [vmem:[#allocation0] sm:$0x1] %vm19, %v18
    %s21 = scalar_lea.vmem [#allocation1], 1
    %v22 = vld [vmem:[%s21] sm:$0x1]
    %23 = vrot.lane.b32.xlu0 %v22, 32
    %v24 = vpop.permute.xlu0 %23
    %vm25 = vcmask 523520
    %26 = vst.msk [vmem:[#allocation0] sm:$0x1] %vm25, %v24
    %s28 = ssub.s32 2, 1
    %v29 = vld [vmem:[#allocation0] sm:%s28]
    %s31 = ssub.s32 2, 1
    %32 = vst [vmem:[%s1] sm:%s31] %v29

// kernel: cnn_target_mnist_forward.1
$region0: #{cnn_target_mnist_forward.1}
  #allocation0 [shape = 'u32[]', space=smem, size = 0x4, offset = 0x4, fixed_abs, tag = 'smem constant byte address 0x4 - core index']
  #allocation1 [shape = 'u32[72,128]{1,0:T(1,128)}', space=vmem, size = 0x9000, scoped, tag = 'internal scratch']
  #allocation2 [shape = 'bf16[6,2,8,192]{3,2,1,0:T(8,128)(2,1)}', space=vmem, size = 0xc000, scoped, tag = 'scratch operand']
  %s0 = inlined_call_operand.vmem [shape: bf16[14,2,16,28], index: 0, kind: input, shape index: {}]
  %s1 = inlined_call_operand.vmem [shape: bf16[5,28,384], index: 1, kind: input, shape index: {}]
  %s2 = inlined_call_operand.vmem [shape: f32[1,192], index: 2, kind: input, shape index: {}]
  %s3 = inlined_call_operand.vmem [shape: bf16[5,192,256], index: 3, kind: input, shape index: {}]
  %s4 = inlined_call_operand.vmem [shape: f32[1,128], index: 4, kind: input, shape index: {}]
  %s5 = inlined_call_operand.vmem [shape: f32[4,128,120], index: 5, kind: input, shape index: {}]
  %s6 = inlined_call_operand.vmem [shape: f32[1,120], index: 6, kind: input, shape index: {}]
  %s7 = inlined_call_operand.vmem [shape: f32[120,84], index: 7, kind: input, shape index: {}]
  %s8 = inlined_call_operand.vmem [shape: f32[1,84], index: 8, kind: input, shape index: {}]
  %s9 = inlined_call_operand.vmem [shape: f32[84,10], index: 9, kind: input, shape index: {}]
  %s10 = inlined_call_operand.vmem [shape: f32[1,10], index: 10, kind: input, shape index: {}]
  %s11 = inlined_call_operand.vmem [shape: f32[16,10], index: 11, kind: output, shape index: {}]
  %s12 = sld [smem:[#allocation0]]
  $region118: #{cnn_target_mnist_forward.1} parent=0
    _
  %s14 = ssub.s32 1, %s12
  %s15 = scalar_select 0, %s14, %s12
  $region1: #{cnn_target_mnist_forward.1} parent=0
    #allocation3 [shape = 'u8[114688]{0}', space=vmem, size = 0x1c000, scoped, tag = 'input window, operand 0']
    loop: start=0, step=1, limit=4
    $region2: #{cnn_target_mnist_forward.1} parent=1 // loop_pre_header
      _
    $region3: #{cnn_target_mnist_forward.1} parent=1 // loop_header
      %s17 = sphi 0, %s21
      %p18 = scmp.ge.s32.totalorder %s17, 4
      %s27 = sphi 0, %s29
      %s30 = sphi 0, %s27
      %s31 = sphi 0, %s30
      %s47 = sphi 0, %s31
      %s51 = sphi 0, %s51
      %s53 = sphi 0, %s51
      %s54 = sphi 0, %s53
      %s68 = sphi 0, %s54
      %s72 = sphi 0, %s72
      %s74 = sphi 0, %s72
      %s75 = sphi 0, %s74
      %s89 = sphi 0, %s75
      %s93 = sphi 0, %s93
      %s95 = sphi 0, %s93
      %s96 = sphi 0, %s95
      %s110 = sphi 0, %s96
      %s114 = sphi 0, %s114
      %s116 = sphi 0, %s114
      %s117 = sphi 0, %s116
      %s131 = sphi 0, %s117
      %s135 = sphi 0, %s135
      %s137 = sphi 0, %s135
      %s138 = sphi 0, %s137
      %s152 = sphi 0, %s138
      %s156 = sphi 0, %s156
      %s158 = sphi 0, %s156
      %s159 = sphi 0, %s158
      %s173 = sphi 0, %s159
      %s177 = sphi 0, %s177
      %s179 = sphi 0, %s177
      %s180 = sphi 0, %s179
      %s194 = sphi 0, %s180
      %s198 = sphi 0, %s198
      %s200 = sphi 0, %s198
      %s201 = sphi 0, %s200
      %s215 = sphi 0, %s201
      %s219 = sphi 0, %s219
      %s221 = sphi 0, %s219
      %s222 = sphi 0, %s221
      %s236 = sphi 0, %s222
      %s240 = sphi 0, %s240
      %s242 = sphi 0, %s240
      %s243 = sphi 0, %s242
      %s257 = sphi 0, %s243
      %s263 = sphi 0, %s265
      %s266 = sphi 0, %s263
      %s267 = sphi 0, %s266
      %s283 = sphi 0, %s267
    $region4: #{cnn_target_mnist_forward.1} parent=1 // loop_header_branch
      %20 = sbr.rel (%p18) target = $region8
    $region5: #{cnn_target_mnist_forward.1} parent=1 // loop_body
      %s22 = ssub.s32 %s17, 1
      %s23 = ssub.s32 %s17, 2
      %s24 = sadd.s32 %s17, 1
      %s25 = ssub.s32 %s17, %s24
      %p26 = scmp.eq.s32.totalorder %s25, 0
      %s28 = sadd.s32 %s27, 1
      %s29 = scalar_select %p26, %s27, %s28
      %p32 = pneg %p26
      %p33 = scmp.eq.s32.totalorder %s17, 1
      %p34 = por %p32, %p33
      %p35 = scmp.ne.s32.totalorder %s27, %s30
      %p36 = scmp.eq.s32.totalorder %s17, 0
      %p37 = por %p35, %p36
      %p38 = scmp.ne.s32.totalorder %s27, %s30
      %p39 = scmp.eq.s32.totalorder %s22, 1
      %p40 = por %p38, %p39
      %p41 = scmp.ne.s32.totalorder %s30, %s31
      %p42 = scmp.eq.s32.totalorder %s22, 0
      %p43 = por %p41, %p42
      %p44 = scmp.ne.s32.totalorder %s30, %s31
      %p45 = scmp.eq.s32.totalorder %s23, 1
      %p46 = por %p44, %p45
      %p48 = scmp.ne.s32.totalorder %s31, %s47
      %p49 = scmp.eq.s32.totalorder %s23, 0
      %p50 = por %p48, %p49
      %s52 = sadd.s32 %s51, 1
      %p55 = scmp.eq.s32.totalorder %s17, 1
      %p56 = scmp.ne.s32.totalorder %s51, %s53
      %p57 = scmp.eq.s32.totalorder %s17, 0
      %p58 = por %p56, %p57
      %p59 = scmp.ne.s32.totalorder %s51, %s53
      %p60 = scmp.eq.s32.totalorder %s22, 1
      %p61 = por %p59, %p60
      %p62 = scmp.ne.s32.totalorder %s53, %s54
      %p63 = scmp.eq.s32.totalorder %s22, 0
      %p64 = por %p62, %p63
      %p65 = scmp.ne.s32.totalorder %s53, %s54
      %p66 = scmp.eq.s32.totalorder %s23, 1
      %p67 = por %p65, %p66
      %p69 = scmp.ne.s32.totalorder %s54, %s68
      %p70 = scmp.eq.s32.totalorder %s23, 0
      %p71 = por %p69, %p70
      %s73 = sadd.s32 %s72, 1
      %p76 = scmp.eq.s32.totalorder %s17, 1
      %p77 = scmp.ne.s32.totalorder %s72, %s74
      %p78 = scmp.eq.s32.totalorder %s17, 0
      %p79 = por %p77, %p78
      %p80 = scmp.ne.s32.totalorder %s72, %s74
      %p81 = scmp.eq.s32.totalorder %s22, 1
      %p82 = por %p80, %p81
      %p83 = scmp.ne.s32.totalorder %s74, %s75
      %p84 = scmp.eq.s32.totalorder %s22, 0
      %p85 = por %p83, %p84
      %p86 = scmp.ne.s32.totalorder %s74, %s75
      %p87 = scmp.eq.s32.totalorder %s23, 1
      %p88 = por %p86, %p87
      %p90 = scmp.ne.s32.totalorder %s75, %s89
      %p91 = scmp.eq.s32.totalorder %s23, 0
      %p92 = por %p90, %p91
      %s94 = sadd.s32 %s93, 1
      %p97 = scmp.eq.s32.totalorder %s17, 1
      %p98 = scmp.ne.s32.totalorder %s93, %s95
      %p99 = scmp.eq.s32.totalorder %s17, 0
      %p100 = por %p98, %p99
      %p101 = scmp.ne.s32.totalorder %s93, %s95
      %p102 = scmp.eq.s32.totalorder %s22, 1
      %p103 = por %p101, %p102
      %p104 = scmp.ne.s32.totalorder %s95, %s96
      %p105 = scmp.eq.s32.totalorder %s22, 0
      %p106 = por %p104, %p105
      %p107 = scmp.ne.s32.totalorder %s95, %s96
      %p108 = scmp.eq.s32.totalorder %s23, 1
      %p109 = por %p107, %p108
      %p111 = scmp.ne.s32.totalorder %s96, %s110
      %p112 = scmp.eq.s32.totalorder %s23, 0
      %p113 = por %p111, %p112
      %s115 = sadd.s32 %s114, 1
      %p118 = scmp.eq.s32.totalorder %s17, 1
      %p119 = scmp.ne.s32.totalorder %s114, %s116
      %p120 = scmp.eq.s32.totalorder %s17, 0
      %p121 = por %p119, %p120
      %p122 = scmp.ne.s32.totalorder %s114, %s116
      %p123 = scmp.eq.s32.totalorder %s22, 1
      %p124 = por %p122, %p123
      %p125 = scmp.ne.s32.totalorder %s116, %s117
      %p126 = scmp.eq.s32.totalorder %s22, 0
      %p127 = por %p125, %p126
      %p128 = scmp.ne.s32.totalorder %s116, %s117
      %p129 = scmp.eq.s32.totalorder %s23, 1
      %p130 = por %p128, %p129
      %p132 = scmp.ne.s32.totalorder %s117, %s131
      %p133 = scmp.eq.s32.totalorder %s23, 0
      %p134 = por %p132, %p133
      %s136 = sadd.s32 %s135, 1
      %p139 = scmp.eq.s32.totalorder %s17, 1
      %p140 = scmp.ne.s32.totalorder %s135, %s137
      %p141 = scmp.eq.s32.totalorder %s17, 0
      %p142 = por %p140, %p141
      %p143 = scmp.ne.s32.totalorder %s135, %s137
      %p144 = scmp.eq.s32.totalorder %s22, 1
      %p145 = por %p143, %p144
      %p146 = scmp.ne.s32.totalorder %s137, %s138
      %p147 = scmp.eq.s32.totalorder %s22, 0
      %p148 = por %p146, %p147
      %p149 = scmp.ne.s32.totalorder %s137, %s138
      %p150 = scmp.eq.s32.totalorder %s23, 1
      %p151 = por %p149, %p150
      %p153 = scmp.ne.s32.totalorder %s138, %s152
      %p154 = scmp.eq.s32.totalorder %s23, 0
      %p155 = por %p153, %p154
      %s157 = sadd.s32 %s156, 1
      %p160 = scmp.eq.s32.totalorder %s17, 1
      %p161 = scmp.ne.s32.totalorder %s156, %s158
      %p162 = scmp.eq.s32.totalorder %s17, 0
      %p163 = por %p161, %p162
      %p164 = scmp.ne.s32.totalorder %s156, %s158
      %p165 = scmp.eq.s32.totalorder %s22, 1
      %p166 = por %p164, %p165
      %p167 = scmp.ne.s32.totalorder %s158, %s159
      %p168 = scmp.eq.s32.totalorder %s22, 0
      %p169 = por %p167, %p168
      %p170 = scmp.ne.s32.totalorder %s158, %s159
      %p171 = scmp.eq.s32.totalorder %s23, 1
      %p172 = por %p170, %p171
      %p174 = scmp.ne.s32.totalorder %s159, %s173
      %p175 = scmp.eq.s32.totalorder %s23, 0
      %p176 = por %p174, %p175
      %s178 = sadd.s32 %s177, 1
      %p181 = scmp.eq.s32.totalorder %s17, 1
      %p182 = scmp.ne.s32.totalorder %s177, %s179
      %p183 = scmp.eq.s32.totalorder %s17, 0
      %p184 = por %p182, %p183
      %p185 = scmp.ne.s32.totalorder %s177, %s179
      %p186 = scmp.eq.s32.totalorder %s22, 1
      %p187 = por %p185, %p186
      %p188 = scmp.ne.s32.totalorder %s179, %s180
      %p189 = scmp.eq.s32.totalorder %s22, 0
      %p190 = por %p188, %p189
      %p191 = scmp.ne.s32.totalorder %s179, %s180
      %p192 = scmp.eq.s32.totalorder %s23, 1
      %p193 = por %p191, %p192
      %p195 = scmp.ne.s32.totalorder %s180, %s194
      %p196 = scmp.eq.s32.totalorder %s23, 0
      %p197 = por %p195, %p196
      %s199 = sadd.s32 %s198, 1
      %p202 = scmp.eq.s32.totalorder %s17, 1
      %p203 = scmp.ne.s32.totalorder %s198, %s200
      %p204 = scmp.eq.s32.totalorder %s17, 0
      %p205 = por %p203, %p204
      %p206 = scmp.ne.s32.totalorder %s198, %s200
      %p207 = scmp.eq.s32.totalorder %s22, 1
      %p208 = por %p206, %p207
      %p209 = scmp.ne.s32.totalorder %s200, %s201
      %p210 = scmp.eq.s32.totalorder %s22, 0
      %p211 = por %p209, %p210
      %p212 = scmp.ne.s32.totalorder %s200, %s201
      %p213 = scmp.eq.s32.totalorder %s23, 1
      %p214 = por %p212, %p213
      %p216 = scmp.ne.s32.totalorder %s201, %s215
      %p217 = scmp.eq.s32.totalorder %s23, 0
      %p218 = por %p216, %p217
      %s220 = sadd.s32 %s219, 1
      %p223 = scmp.eq.s32.totalorder %s17, 1
      %p224 = scmp.ne.s32.totalorder %s219, %s221
      %p225 = scmp.eq.s32.totalorder %s17, 0
      %p226 = por %p224, %p225
      %p227 = scmp.ne.s32.totalorder %s219, %s221
      %p228 = scmp.eq.s32.totalorder %s22, 1
      %p229 = por %p227, %p228
      %p230 = scmp.ne.s32.totalorder %s221, %s222
      %p231 = scmp.eq.s32.totalorder %s22, 0
      %p232 = por %p230, %p231
      %p233 = scmp.ne.s32.totalorder %s221, %s222
      %p234 = scmp.eq.s32.totalorder %s23, 1
      %p235 = por %p233, %p234
      %p237 = scmp.ne.s32.totalorder %s222, %s236
      %p238 = scmp.eq.s32.totalorder %s23, 0
      %p239 = por %p237, %p238
      %s241 = sadd.s32 %s240, 1
      %p244 = scmp.eq.s32.totalorder %s17, 1
      %p245 = scmp.ne.s32.totalorder %s240, %s242
      %p246 = scmp.eq.s32.totalorder %s17, 0
      %p247 = por %p245, %p246
      %p248 = scmp.ne.s32.totalorder %s240, %s242
      %p249 = scmp.eq.s32.totalorder %s22, 1
      %p250 = por %p248, %p249
      %p251 = scmp.ne.s32.totalorder %s242, %s243
      %p252 = scmp.eq.s32.totalorder %s22, 0
      %p253 = por %p251, %p252
      %p254 = scmp.ne.s32.totalorder %s242, %s243
      %p255 = scmp.eq.s32.totalorder %s23, 1
      %p256 = por %p254, %p255
      %p258 = scmp.ne.s32.totalorder %s243, %s257
      %p259 = scmp.eq.s32.totalorder %s23, 0
      %p260 = por %p258, %p259
      %s261 = ssub.s32 %s17, %s24
      %p262 = scmp.eq.s32.totalorder %s261, 0
      %s264 = sadd.s32 %s263, 1
      %s265 = scalar_select %p262, %s263, %s264
      %p268 = pneg %p262
      %p269 = scmp.eq.s32.totalorder %s17, 1
      %p270 = por %p268, %p269
      %p271 = scmp.ne.s32.totalorder %s263, %s266
      %p272 = scmp.eq.s32.totalorder %s17, 0
      %p273 = por %p271, %p272
      %p274 = scmp.ne.s32.totalorder %s263, %s266
      %p275 = scmp.eq.s32.totalorder %s22, 1
      %p276 = por %p274, %p275
      %p277 = scmp.ne.s32.totalorder %s266, %s267
      %p278 = scmp.eq.s32.totalorder %s22, 0
      %p279 = por %p277, %p278
      %p280 = scmp.ne.s32.totalorder %s266, %s267
      %p281 = scmp.eq.s32.totalorder %s23, 1
      %p282 = por %p280, %p281
      %p284 = scmp.ne.s32.totalorder %s267, %s283
      %p285 = scmp.eq.s32.totalorder %s23, 0
      %p286 = por %p284, %p285
      %p287 = scmp.le.s32.totalorder 1, %s17
      %p288 = scmp.lt.s32.totalorder %s17, 3
      %p289 = pnand %p287, %p288
      %p290 = pneg %p289
      // Predicated region
      $region9: #{cnn_target_mnist_forward.1} parent=5 // pred_check
        _
      $region10: #{cnn_target_mnist_forward.1} parent=5 // pred_check_branch
        %292 = sbr.rel (%p289) target = $region12
      $region11: #{cnn_target_mnist_forward.1} parent=5 // pred_region
        %s293 = ssub.s32 %s17, 1
        // Predicated region
        $region13: #{cnn_target_mnist_forward.1} parent=11 // pred_check
          %p294 = pneg %p64
        $region14: #{cnn_target_mnist_forward.1} parent=11 // pred_check_branch
          %296 = sbr.rel (%p294) target = $region16
        $region15: #{cnn_target_mnist_forward.1} parent=11 // pred_region
          _
        $region16: #{cnn_target_mnist_forward.1} parent=11 // pred_fallthru
          _
        // Predicated region
        $region17: #{cnn_target_mnist_forward.1} parent=11 // pred_check
          %p297 = pneg %p85
        $region18: #{cnn_target_mnist_forward.1} parent=11 // pred_check_branch
          %299 = sbr.rel (%p297) target = $region20
        $region19: #{cnn_target_mnist_forward.1} parent=11 // pred_region
          _
        $region20: #{cnn_target_mnist_forward.1} parent=11 // pred_fallthru
          _
        // Predicated region
        $region21: #{cnn_target_mnist_forward.1} parent=11 // pred_check
          %p300 = pneg %p106
        $region22: #{cnn_target_mnist_forward.1} parent=11 // pred_check_branch
          %302 = sbr.rel (%p300) target = $region24
        $region23: #{cnn_target_mnist_forward.1} parent=11 // pred_region
          _
        $region24: #{cnn_target_mnist_forward.1} parent=11 // pred_fallthru
          _
        // Predicated region
        $region25: #{cnn_target_mnist_forward.1} parent=11 // pred_check
          %p303 = pneg %p127
        $region26: #{cnn_target_mnist_forward.1} parent=11 // pred_check_branch
          %305 = sbr.rel (%p303) target = $region28
        $region27: #{cnn_target_mnist_forward.1} parent=11 // pred_region
          _
        $region28: #{cnn_target_mnist_forward.1} parent=11 // pred_fallthru
          _
        // Predicated region
        $region29: #{cnn_target_mnist_forward.1} parent=11 // pred_check
          %p306 = pneg %p148
        $region30: #{cnn_target_mnist_forward.1} parent=11 // pred_check_branch
          %308 = sbr.rel (%p306) target = $region32
        $region31: #{cnn_target_mnist_forward.1} parent=11 // pred_region
          _
        $region32: #{cnn_target_mnist_forward.1} parent=11 // pred_fallthru
          _
        // Predicated region
        $region33: #{cnn_target_mnist_forward.1} parent=11 // pred_check
          %p309 = pneg %p169
        $region34: #{cnn_target_mnist_forward.1} parent=11 // pred_check_branch
          %311 = sbr.rel (%p309) target = $region36
        $region35: #{cnn_target_mnist_forward.1} parent=11 // pred_region
          _
        $region36: #{cnn_target_mnist_forward.1} parent=11 // pred_fallthru
          _
        // Predicated region
        $region37: #{cnn_target_mnist_forward.1} parent=11 // pred_check
          %p312 = pneg %p190
        $region38: #{cnn_target_mnist_forward.1} parent=11 // pred_check_branch
          %314 = sbr.rel (%p312) target = $region40
        $region39: #{cnn_target_mnist_forward.1} parent=11 // pred_region
          _
        $region40: #{cnn_target_mnist_forward.1} parent=11 // pred_fallthru
          _
        // Predicated region
        $region41: #{cnn_target_mnist_forward.1} parent=11 // pred_check
          %p315 = pneg %p211
        $region42: #{cnn_target_mnist_forward.1} parent=11 // pred_check_branch
          %317 = sbr.rel (%p315) target = $region44
        $region43: #{cnn_target_mnist_forward.1} parent=11 // pred_region
          _
        $region44: #{cnn_target_mnist_forward.1} parent=11 // pred_fallthru
          _
        // Predicated region
        $region45: #{cnn_target_mnist_forward.1} parent=11 // pred_check
          %p318 = pneg %p232
        $region46: #{cnn_target_mnist_forward.1} parent=11 // pred_check_branch
          %320 = sbr.rel (%p318) target = $region48
        $region47: #{cnn_target_mnist_forward.1} parent=11 // pred_region
          _
        $region48: #{cnn_target_mnist_forward.1} parent=11 // pred_fallthru
          _
        // Predicated region
        $region49: #{cnn_target_mnist_forward.1} parent=11 // pred_check
          %p321 = pneg %p253
        $region50: #{cnn_target_mnist_forward.1} parent=11 // pred_check_branch
          %323 = sbr.rel (%p321) target = $region52
        $region51: #{cnn_target_mnist_forward.1} parent=11 // pred_region
          _
        $region52: #{cnn_target_mnist_forward.1} parent=11 // pred_fallthru
          _
      $region12: #{cnn_target_mnist_forward.1} parent=5 // pred_fallthru
        _
      %p324 = scmp.lt.s32.totalorder %s17, 2
      // Predicated region
      $region53: #{cnn_target_mnist_forward.1} parent=5 // pred_check
        %p325 = pneg %p324
      $region54: #{cnn_target_mnist_forward.1} parent=5 // pred_check_branch
        %327 = sbr.rel (%p325) target = $region56
      $region55: #{cnn_target_mnist_forward.1} parent=5 // pred_region
        // Predicated region
        $region57: #{cnn_target_mnist_forward.1} parent=55 // pred_check
          %p328 = pneg %p37
        $region58: #{cnn_target_mnist_forward.1} parent=55 // pred_check_branch
          %330 = sbr.rel (%p328) target = $region60
        $region59: #{cnn_target_mnist_forward.1} parent=55 // pred_region
          %s331 = sand.u32 %s27, 1
          %s332 = sand.u32 %s27, 1
          %s333 = smul.addr %s332, 112
          %s334 = scalar_lea.vmem [#allocation3], %s333
          %s335 = smul.addr %s17, 4
          %s336 = scalar_lea.vmem %s0, %s335
          // Predicated region
          $region61: #{cnn_target_mnist_forward.1} parent=59 // pred_check
            _
          $region62: #{cnn_target_mnist_forward.1} parent=59 // pred_check_branch
            %338 = sbr.rel (0) target = $region64
          $region63: #{cnn_target_mnist_forward.1} parent=59 // pred_region
            // Predicated region
            $region65: #{cnn_target_mnist_forward.1} parent=63 // pred_check
              _
            $region66: #{cnn_target_mnist_forward.1} parent=63 // pred_check_branch
              %340 = sbr.rel target = $region68
            $region67: #{cnn_target_mnist_forward.1} parent=63 // pred_region
              // Predicated region
              $region80: #{cnn_target_mnist_forward.1} parent=67 // pred_check
                _
              $region81: #{cnn_target_mnist_forward.1} parent=67 // pred_check_branch
                %410 = sbr.rel (0) target = $region83
              $region82: #{cnn_target_mnist_forward.1} parent=67 // pred_region
                loop: start=0, step=1, limit=1
                $region84: #{cnn_target_mnist_forward.1} parent=82 // loop_pre_header
                  _
                $region85: #{cnn_target_mnist_forward.1} parent=82 // loop_header
                  %s412 = sphi 0, %s416
                  %p413 = scmp.ge.s32.totalorder %s412, 1
                  %s417 = sphi %s336, %s336
                  %s418 = sphi %s334, %s334
                $region86: #{cnn_target_mnist_forward.1} parent=82 // loop_header_branch
                  %415 = sbr.rel (%p413) target = $region90
                $region87: #{cnn_target_mnist_forward.1} parent=82 // loop_body
                  _
                $region88: #{cnn_target_mnist_forward.1} parent=82 // loop_footer
                  %s416 = sadd.s32 1, %s412
                $region89: #{cnn_target_mnist_forward.1} parent=82 // loop_footer_branch
                  %411 = sbr.rel target = $region85
                $region90: #{cnn_target_mnist_forward.1} parent=82 // loop_exit
                  _
                %s420 = ssub.s32 16, 1
                loop: start=0, step=1, limit=1
                $region91: #{cnn_target_mnist_forward.1} parent=82 // loop_pre_header
                  _
                $region92: #{cnn_target_mnist_forward.1} parent=82 // loop_header
                  %s422 = sphi 0, %s426
                  %p423 = scmp.ge.s32.totalorder %s422, 1
                  %s427 = sphi %s336, %s336
                  %s428 = sphi %s334, %s334
                $region93: #{cnn_target_mnist_forward.1} parent=82 // loop_header_branch
                  %425 = sbr.rel (%p423) target = $region97
                $region94: #{cnn_target_mnist_forward.1} parent=82 // loop_body
                  %v429 = vld [vmem:[%s427] sm:%s420]
                  %430 = vst [vmem:[%s428] sm:%s420] %v429
                  %v431 = vld [vmem:[%s427 + $0x8] sm:%s420]
                  %432 = vst [vmem:[%s428 + $0x4] sm:%s420] %v431
                  %v433 = vld [vmem:[%s427 + $0x10] sm:%s420]
                  %434 = vst [vmem:[%s428 + $0x8] sm:%s420] %v433
                  %v435 = vld [vmem:[%s427 + $0x18] sm:%s420]
                  %436 = vst [vmem:[%s428 + $0xc] sm:%s420] %v435
                  %v437 = vld [vmem:[%s427 + $0x20] sm:%s420]
                  %438 = vst [vmem:[%s428 + $0x10] sm:%s420] %v437
                  %v439 = vld [vmem:[%s427 + $0x28] sm:%s420]
                  %440 = vst [vmem:[%s428 + $0x14] sm:%s420] %v439
                  %v441 = vld [vmem:[%s427 + $0x30] sm:%s420]
                  %442 = vst [vmem:[%s428 + $0x18] sm:%s420] %v441
                  %v443 = vld [vmem:[%s427 + $0x38] sm:%s420]
                  %444 = vst [vmem:[%s428 + $0x1c] sm:%s420] %v443
                  %v445 = vld [vmem:[%s427 + $0x40] sm:%s420]
                  %446 = vst [vmem:[%s428 + $0x20] sm:%s420] %v445
                  %v447 = vld [vmem:[%s427 + $0x48] sm:%s420]
                  %448 = vst [vmem:[%s428 + $0x24] sm:%s420] %v447
                  %v449 = vld [vmem:[%s427 + $0x50] sm:%s420]
                  %450 = vst [vmem:[%s428 + $0x28] sm:%s420] %v449
                  %v451 = vld [vmem:[%s427 + $0x58] sm:%s420]
                  %452 = vst [vmem:[%s428 + $0x2c] sm:%s420] %v451
                  %v453 = vld [vmem:[%s427 + $0x60] sm:%s420]
                  %454 = vst [vmem:[%s428 + $0x30] sm:%s420] %v453
                  %v455 = vld [vmem:[%s427 + $0x68] sm:%s420]
                  %456 = vst [vmem:[%s428 + $0x34] sm:%s420] %v455
                  %v457 = vld [vmem:[%s427 + $0x70] sm:%s420]
                  %458 = vst [vmem:[%s428 + $0x38] sm:%s420] %v457
                  %v459 = vld [vmem:[%s427 + $0x78] sm:%s420]
                  %460 = vst [vmem:[%s428 + $0x3c] sm:%s420] %v459
                  %v461 = vld [vmem:[%s427 + $0x80] sm:%s420]
                  %462 = vst [vmem:[%s428 + $0x40] sm:%s420] %v461
                  %v463 = vld [vmem:[%s427 + $0x88] sm:%s420]
                  %464 = vst [vmem:[%s428 + $0x44] sm:%s420] %v463
                  %v465 = vld [vmem:[%s427 + $0x90] sm:%s420]
                  %466 = vst [vmem:[%s428 + $0x48] sm:%s420] %v465
                  %v467 = vld [vmem:[%s427 + $0x98] sm:%s420]
                  %468 = vst [vmem:[%s428 + $0x4c] sm:%s420] %v467
                  %v469 = vld [vmem:[%s427 + $0xa0] sm:%s420]
                  %470 = vst [vmem:[%s428 + $0x50] sm:%s420] %v469
                  %v471 = vld [vmem:[%s427 + $0xa8] sm:%s420]
                  %472 = vst [vmem:[%s428 + $0x54] sm:%s420] %v471
                  %v473 = vld [vmem:[%s427 + $0xb0] sm:%s420]
                  %474 = vst [vmem:[%s428 + $0x58] sm:%s420] %v473
                  %v475 = vld [vmem:[%s427 + $0xb8] sm:%s420]
                  %476 = vst [vmem:[%s428 + $0x5c] sm:%s420] %v475
                  %v477 = vld [vmem:[%s427 + $0xc0] sm:%s420]
                  %478 = vst [vmem:[%s428 + $0x60] sm:%s420] %v477
                  %v479 = vld [vmem:[%s427 + $0xc8] sm:%s420]
                  %480 = vst [vmem:[%s428 + $0x64] sm:%s420] %v479
                  %v481 = vld [vmem:[%s427 + $0xd0] sm:%s420]
                  %482 = vst [vmem:[%s428 + $0x68] sm:%s420] %v481
                  %v483 = vld [vmem:[%s427 + $0xd8] sm:%s420]
                  %484 = vst [vmem:[%s428 + $0x6c] sm:%s420] %v483
                $region95: #{cnn_target_mnist_forward.1} parent=82 // loop_footer
                  %s426 = sadd.s32 1, %s422
                $region96: #{cnn_target_mnist_forward.1} parent=82 // loop_footer_branch
                  %421 = sbr.rel target = $region92
                $region97: #{cnn_target_mnist_forward.1} parent=82 // loop_exit
                  _
              $region83: #{cnn_target_mnist_forward.1} parent=67 // pred_fallthru
                _
            $region68: #{cnn_target_mnist_forward.1} parent=63 // pred_fallthru
              _
            // Predicated region
            $region69: #{cnn_target_mnist_forward.1} parent=63 // pred_check
              _
            $region70: #{cnn_target_mnist_forward.1} parent=63 // pred_check_branch
              %342 = sbr.rel (0) target = $region72
            $region71: #{cnn_target_mnist_forward.1} parent=63 // pred_region
              %s344 = ssub.s32 16, 1
              loop: start=0, step=1, limit=1
              $region73: #{cnn_target_mnist_forward.1} parent=71 // loop_pre_header
                _
              $region74: #{cnn_target_mnist_forward.1} parent=71 // loop_header
                %s346 = sphi 0, %s350
                %p347 = scmp.ge.s32.totalorder %s346, 1
                %s351 = sphi %s336, %s336
                %s352 = sphi %s334, %s334
              $region75: #{cnn_target_mnist_forward.1} parent=71 // loop_header_branch
                %349 = sbr.rel (%p347) target = $region79
              $region76: #{cnn_target_mnist_forward.1} parent=71 // loop_body
                %v353 = vld [vmem:[%s351] sm:%s344]
                %354 = vst [vmem:[%s352] sm:%s344] %v353
                %v355 = vld [vmem:[%s351 + $0x8] sm:%s344]
                %356 = vst [vmem:[%s352 + $0x4] sm:%s344] %v355
                %v357 = vld [vmem:[%s351 + $0x10] sm:%s344]
                %358 = vst [vmem:[%s352 + $0x8] sm:%s344] %v357
                %v359 = vld [vmem:[%s351 + $0x18] sm:%s344]
                %360 = vst [vmem:[%s352 + $0xc] sm:%s344] %v359
                %v361 = vld [vmem:[%s351 + $0x20] sm:%s344]
                %362 = vst [vmem:[%s352 + $0x10] sm:%s344] %v361
                %v363 = vld [vmem:[%s351 + $0x28] sm:%s344]
                %364 = vst [vmem:[%s352 + $0x14] sm:%s344] %v363
                %v365 = vld [vmem:[%s351 + $0x30] sm:%s344]
                %366 = vst [vmem:[%s352 + $0x18] sm:%s344] %v365
                %v367 = vld [vmem:[%s351 + $0x38] sm:%s344]
                %368 = vst [vmem:[%s352 + $0x1c] sm:%s344] %v367
                %v369 = vld [vmem:[%s351 + $0x40] sm:%s344]
                %370 = vst [vmem:[%s352 + $0x20] sm:%s344] %v369
                %v371 = vld [vmem:[%s351 + $0x48] sm:%s344]
                %372 = vst [vmem:[%s352 + $0x24] sm:%s344] %v371
                %v373 = vld [vmem:[%s351 + $0x50] sm:%s344]
                %374 = vst [vmem:[%s352 + $0x28] sm:%s344] %v373
                %v375 = vld [vmem:[%s351 + $0x58] sm:%s344]
                %376 = vst [vmem:[%s352 + $0x2c] sm:%s344] %v375
                %v377 = vld [vmem:[%s351 + $0x60] sm:%s344]
                %378 = vst [vmem:[%s352 + $0x30] sm:%s344] %v377
                %v379 = vld [vmem:[%s351 + $0x68] sm:%s344]
                %380 = vst [vmem:[%s352 + $0x34] sm:%s344] %v379
                %v381 = vld [vmem:[%s351 + $0x70] sm:%s344]
                %382 = vst [vmem:[%s352 + $0x38] sm:%s344] %v381
                %v383 = vld [vmem:[%s351 + $0x78] sm:%s344]
                %384 = vst [vmem:[%s352 + $0x3c] sm:%s344] %v383
                %v385 = vld [vmem:[%s351 + $0x80] sm:%s344]
                %386 = vst [vmem:[%s352 + $0x40] sm:%s344] %v385
                %v387 = vld [vmem:[%s351 + $0x88] sm:%s344]
                %388 = vst [vmem:[%s352 + $0x44] sm:%s344] %v387
                %v389 = vld [vmem:[%s351 + $0x90] sm:%s344]
                %390 = vst [vmem:[%s352 + $0x48] sm:%s344] %v389
                %v391 = vld [vmem:[%s351 + $0x98] sm:%s344]
                %392 = vst [vmem:[%s352 + $0x4c] sm:%s344] %v391
                %v393 = vld [vmem:[%s351 + $0xa0] sm:%s344]
                %394 = vst [vmem:[%s352 + $0x50] sm:%s344] %v393
                %v395 = vld [vmem:[%s351 + $0xa8] sm:%s344]
                %396 = vst [vmem:[%s352 + $0x54] sm:%s344] %v395
                %v397 = vld [vmem:[%s351 + $0xb0] sm:%s344]
                %398 = vst [vmem:[%s352 + $0x58] sm:%s344] %v397
                %v399 = vld [vmem:[%s351 + $0xb8] sm:%s344]
                %400 = vst [vmem:[%s352 + $0x5c] sm:%s344] %v399
                %v401 = vld [vmem:[%s351 + $0xc0] sm:%s344]
                %402 = vst [vmem:[%s352 + $0x60] sm:%s344] %v401
                %v403 = vld [vmem:[%s351 + $0xc8] sm:%s344]
                %404 = vst [vmem:[%s352 + $0x64] sm:%s344] %v403
                %v405 = vld [vmem:[%s351 + $0xd0] sm:%s344]
                %406 = vst [vmem:[%s352 + $0x68] sm:%s344] %v405
                %v407 = vld [vmem:[%s351 + $0xd8] sm:%s344]
                %408 = vst [vmem:[%s352 + $0x6c] sm:%s344] %v407
              $region77: #{cnn_target_mnist_forward.1} parent=71 // loop_footer
                %s350 = sadd.s32 1, %s346
              $region78: #{cnn_target_mnist_forward.1} parent=71 // loop_footer_branch
                %345 = sbr.rel target = $region74
              $region79: #{cnn_target_mnist_forward.1} parent=71 // loop_exit
                _
            $region72: #{cnn_target_mnist_forward.1} parent=63 // pred_fallthru
              _
          $region64: #{cnn_target_mnist_forward.1} parent=59 // pred_fallthru
            _
          %485 = vnop
        $region60: #{cnn_target_mnist_forward.1} parent=55 // pred_fallthru
          _
      $region56: #{cnn_target_mnist_forward.1} parent=5 // pred_fallthru
        _
      %p486 = scmp.le.s32.totalorder 1, %s17
      %p487 = scmp.lt.s32.totalorder %s17, 3
      %p488 = pnand %p486, %p487
      %p489 = pneg %p488
      // Predicated region
      $region98: #{cnn_target_mnist_forward.1} parent=5 // pred_check
        _
      $region99: #{cnn_target_mnist_forward.1} parent=5 // pred_check_branch
        %491 = sbr.rel (%p488) target = $region101
      $region100: #{cnn_target_mnist_forward.1} parent=5 // pred_region
        %s492 = ssub.s32 %s17, 1
        %s493 = sand.u32 %s30, 1
        %s494 = sand.u32 %s30, 1
        %s495 = smul.addr %s494, 112
        %s496 = scalar_lea.vmem [#allocation3], %s495
        // Predicated region
        $region102: #{cnn_target_mnist_forward.1} parent=100 // pred_check
          %p497 = pneg %p43
        $region103: #{cnn_target_mnist_forward.1} parent=100 // pred_check_branch
          %499 = sbr.rel (%p497) target = $region105
        $region104: #{cnn_target_mnist_forward.1} parent=100 // pred_region
          _
        $region105: #{cnn_target_mnist_forward.1} parent=100 // pred_fallthru
          _
        %s500 = sand.u32 %s30, 1
        %s501 = sand.u32 %s30, 1
        %s502 = smul.addr %s501, 112
        %s503 = scalar_lea.vmem [#allocation3], %s502
        %p504 = pneg %p43
        %p505 = pneg %p40
        %p506 = pneg %p64
        %p507 = pneg %p61
        %p508 = pneg %p85
        %p509 = pneg %p82
        %p510 = pneg %p106
        %p511 = pneg %p103
        %p512 = pneg %p127
        %p513 = pneg %p124
        %p514 = pneg %p148
        %p515 = pneg %p145
        %p516 = pneg %p169
        %p517 = pneg %p166
        %p518 = pneg %p190
        %p519 = pneg %p187
        %p520 = pneg %p211
        %p521 = pneg %p208
        %p522 = pneg %p232
        %p523 = pneg %p229
        %p524 = pneg %p253
        %p525 = pneg %p250
        %p526 = pneg %p279
        %p527 = pneg %p276
        %p528 = scmp.lt.s32.totalorder %s22, 1
        %s529 = scalar_select %p528, %s22, 1
        %s530 = smul.addr %s529, 8
        %s531 = scalar_lea.vmem %s11, %s530
        %p532 = scmp.lt.s32.totalorder %s22, 1
        %s533 = scalar_select %p532, %s22, 1
        %s534 = smul.addr %s533, 8
        %s535 = scalar_lea.vmem %s11, %s534
        %v537 = vld [vmem:[%s496] sm:$0xf]
        %v538 = vld [vmem:[%s496 + $0x8] sm:$0xf]
        %v539 = vld [vmem:[%s496 + $0x10] sm:$0xf]
        %v540 = vld [vmem:[%s496 + $0x18] sm:$0xf]
        %v541 = vld [vmem:[%s496 + $0x20] sm:$0xf]
        %v542 = vld [vmem:[%s496 + $0x28] sm:$0xf]
        %v543 = vld [vmem:[%s496 + $0x30] sm:$0xf]
        %v544 = vld [vmem:[%s496 + $0x38] sm:$0xf]
        %v545 = vld [vmem:[%s496 + $0x40] sm:$0xf]
        %v546 = vld [vmem:[%s496 + $0x48] sm:$0xf]
        %v547 = vld [vmem:[%s496 + $0x50] sm:$0xf]
        %v548 = vld [vmem:[%s496 + $0x58] sm:$0xf]
        %v549 = vld [vmem:[%s1] sm:$0xff]
        %v550 = vld [vmem:[%s1 + $0x8] sm:$0xf]
        %v551 = vld [vmem:[%s1 + $0xc] sm:$0xff]
        %v552 = vld [vmem:[%s1 + $0x14] sm:$0xf]
        %v553 = vld [vmem:[%s1 + $0x18] sm:$0xff]
        %v554 = vld [vmem:[%s1 + $0x20] sm:$0xf]
        %v555 = vld [vmem:[%s1 + $0x24] sm:$0x33]
        %v556 = vld [vmem:[%s1 + $0x2c] sm:$0x3]
        %s557 = scalar_lea.vmem %s496, 4 [#allocation3]
        %v558 = vld [vmem:[%s557] sm:$0xf]
        %v559 = vld [vmem:[%s557 + $0x8] sm:$0xf]
        %v560 = vld [vmem:[%s557 + $0x10] sm:$0xf]
        %v561 = vld [vmem:[%s557 + $0x18] sm:$0xf]
        %v562 = vld [vmem:[%s557 + $0x20] sm:$0xf]
        %v563 = vld [vmem:[%s557 + $0x28] sm:$0xf]
        %v564 = vld [vmem:[%s557 + $0x30] sm:$0xf]
        %v565 = vld [vmem:[%s557 + $0x38] sm:$0xf]
        %v566 = vld [vmem:[%s557 + $0x40] sm:$0xf]
        %v567 = vld [vmem:[%s557 + $0x48] sm:$0xf]
        %v568 = vld [vmem:[%s557 + $0x50] sm:$0xf]
        %v569 = vld [vmem:[%s557 + $0x58] sm:$0xf]
        %s570 = scalar_lea.vmem %s1, 48
        %v571 = vld [vmem:[%s570] sm:$0xff]
        %v572 = vld [vmem:[%s570 + $0x8] sm:$0xf]
        %v573 = vld [vmem:[%s570 + $0xc] sm:$0xff]
        %v574 = vld [vmem:[%s570 + $0x14] sm:$0xf]
        %v575 = vld [vmem:[%s570 + $0x18] sm:$0xff]
        %v576 = vld [vmem:[%s570 + $0x20] sm:$0xf]
        %v577 = vld [vmem:[%s570 + $0x24] sm:$0x33]
        %v578 = vld [vmem:[%s570 + $0x2c] sm:$0x3]
        %v591 = vunpack.c.l.b16 %v558
        %v592 = vunpack.c.l.b16 %v559
        %v593 = vunpack.c.l.b16 %v560
        %v594 = vunpack.c.l.b16 %v561
        %v595 = vunpack.c.l.b16 %v562
        %v596 = vunpack.c.l.b16 %v563
        %v597 = vunpack.c.l.b16 %v564
        %v598 = vunpack.c.l.b16 %v565
        %v599 = vunpack.c.l.b16 %v566
        %v600 = vunpack.c.l.b16 %v567
        %v601 = vunpack.c.l.b16 %v568
        %v602 = vunpack.c.l.b16 %v569
        %v603 = vpack.c.b16 %v592, %v591
        %v604 = vpack.c.b16 %v594, %v593
        %v605 = vpack.c.b16 %v596, %v595
        %v606 = vpack.c.b16 %v598, %v597
        %v607 = vpack.c.b16 %v600, %v599
        %v608 = vpack.c.b16 %v602, %v601
        %v617 = vunpack.c.l.b16 %v571
        %v618 = vunpack.c.h.b16 %v571
        %v619 = vunpack.c.l.b16 %v572
        %v620 = vunpack.c.l.b16 %v573
        %v621 = vunpack.c.h.b16 %v573
        %v622 = vunpack.c.l.b16 %v574
        %v623 = vunpack.c.l.b16 %v575
        %v624 = vunpack.c.h.b16 %v575
        %v625 = vunpack.c.l.b16 %v576
        %v626 = vunpack.c.l.b16 %v577
        %v627 = vunpack.c.h.b16 %v577
        %v628 = vunpack.c.l.b16 %v578
        %v629 = vpack.c.b16 %v620, %v617
        %v630 = vpack.c.b16 %v621, %v618
        %v631 = vpack.c.b16 %v622, %v619
        %v632 = vpack.c.b16 %v626, %v623
        %v633 = vpack.c.b16 %v627, %v624
        %v634 = vpack.c.b16 %v628, %v625
        %vm638 = vcmask 228352
        %v640 = vsel %vm638, %v603, 0
        %v643 = vsel %vm638, %v604, 0
        %v646 = vsel %vm638, %v605, 0
        %v649 = vsel %vm638, %v606, 0
        %v652 = vsel %vm638, %v607, 0
        %v655 = vsel %vm638, %v608, 0
        %vm657 = vcmask 1045504
        %v659 = vsel %vm657, %v632, 0
        %v662 = vsel %vm657, %v633, 0
        %v665 = vsel %vm657, %v634, 0
        %667 = vmatpush.bf16.msra.mxu0 0
        %668 = vmatpush.bf16.msra.mxu0 0
        %669 = vmatpush.bf16.msra.mxu0 0
        %670 = vmatpush.bf16.msra.mxu0 0
        %671 = vmatpush.bf16.msra.mxu0 0
        %672 = vmatpush.bf16.msra.mxu0 0
        %673 = vmatpush.bf16.msra.mxu0 %v659
        %674 = vmatpush.bf16.msra.mxu0 %v629
        %675 = vmatmul.bf16.gmra.mxu0 %v640
        %v676 = vpop.f32.mrf.mxu0
        %v677 = vadd.f32 0.0, %v676
        %v678 = vpop.f32.mrf.mxu0
        %v679 = vadd.f32 0.0, %v678
        %680 = vmatmul.bf16.gmra.mxu0 %v643
        %v681 = vpop.f32.mrf.mxu0
        %v682 = vadd.f32 0.0, %v681
        %v683 = vpop.f32.mrf.mxu0
        %v684 = vadd.f32 0.0, %v683
        %685 = vmatmul.bf16.gmra.mxu0 %v646
        %v686 = vpop.f32.mrf.mxu0
        %v687 = vadd.f32 0.0, %v686
        %v688 = vpop.f32.mrf.mxu0
        %v689 = vadd.f32 0.0, %v688
        %690 = vmatmul.bf16.gmra.mxu0 %v649
        %v691 = vpop.f32.mrf.mxu0
        %v692 = vadd.f32 0.0, %v691
        %v693 = vpop.f32.mrf.mxu0
        %v694 = vadd.f32 0.0, %v693
        %695 = vmatmul.bf16.gmra.mxu0 %v652
        %v696 = vpop.f32.mrf.mxu0
        %v697 = vadd.f32 0.0, %v696
        %v698 = vpop.f32.mrf.mxu0
        %v699 = vadd.f32 0.0, %v698
        %700 = vmatmul.bf16.gmra.mxu0 %v655
        %v701 = vpop.f32.mrf.mxu0
        %v702 = vadd.f32 0.0, %v701
        %v703 = vpop.f32.mrf.mxu0
        %v704 = vadd.f32 0.0, %v703
        %705 = vdwg.mxu0
        %706 = vmatpush.bf16.msra.mxu0 0
        %707 = vmatpush.bf16.msra.mxu0 0
        %708 = vmatpush.bf16.msra.mxu0 0
        %709 = vmatpush.bf16.msra.mxu0 0
        %710 = vmatpush.bf16.msra.mxu0 0
        %711 = vmatpush.bf16.msra.mxu0 0
        %712 = vmatpush.bf16.msra.mxu0 %v662
        %713 = vmatpush.bf16.msra.mxu0 %v630
        %714 = vmatmul.bf16.gmra.mxu0 %v640
        %v715 = vpop.f32.mrf.mxu0
        %v716 = vadd.f32 0.0, %v715
        %v717 = vpop.f32.mrf.mxu0
        %v718 = vadd.f32 0.0, %v717
        %719 = vmatmul.bf16.gmra.mxu0 %v643
        %v720 = vpop.f32.mrf.mxu0
        %v721 = vadd.f32 0.0, %v720
        %v722 = vpop.f32.mrf.mxu0
        %v723 = vadd.f32 0.0, %v722
        %724 = vmatmul.bf16.gmra.mxu0 %v646
        %v725 = vpop.f32.mrf.mxu0
        %v726 = vadd.f32 0.0, %v725
        %v727 = vpop.f32.mrf.mxu0
        %v728 = vadd.f32 0.0, %v727
        %729 = vmatmul.bf16.gmra.mxu0 %v649
        %v730 = vpop.f32.mrf.mxu0
        %v731 = vadd.f32 0.0, %v730
        %v732 = vpop.f32.mrf.mxu0
        %v733 = vadd.f32 0.0, %v732
        %734 = vmatmul.bf16.gmra.mxu0 %v652
        %v735 = vpop.f32.mrf.mxu0
        %v736 = vadd.f32 0.0, %v735
        %v737 = vpop.f32.mrf.mxu0
        %v738 = vadd.f32 0.0, %v737
        %739 = vmatmul.bf16.gmra.mxu0 %v655
        %v740 = vpop.f32.mrf.mxu0
        %v741 = vadd.f32 0.0, %v740
        %v742 = vpop.f32.mrf.mxu0
        %v743 = vadd.f32 0.0, %v742
        %744 = vdwg.mxu0
        %745 = vmatpush.bf16.msra.mxu0 0
        %746 = vmatpush.bf16.msra.mxu0 0
        %747 = vmatpush.bf16.msra.mxu0 0
        %748 = vmatpush.bf16.msra.mxu0 0
        %749 = vmatpush.bf16.msra.mxu0 0
        %750 = vmatpush.bf16.msra.mxu0 0
        %751 = vmatpush.bf16.msra.mxu0 %v665
        %752 = vmatpush.bf16.msra.mxu0 %v631
        %753 = vmatmul.bf16.gmra.mxu0 %v640
        %v754 = vpop.f32.mrf.mxu0
        %v755 = vadd.f32 0.0, %v754
        %v756 = vpop.f32.mrf.mxu0
        %v757 = vadd.f32 0.0, %v756
        %758 = vmatmul.bf16.gmra.mxu0 %v643
        %v759 = vpop.f32.mrf.mxu0
        %v760 = vadd.f32 0.0, %v759
        %v761 = vpop.f32.mrf.mxu0
        %v762 = vadd.f32 0.0, %v761
        %763 = vmatmul.bf16.gmra.mxu0 %v646
        %v764 = vpop.f32.mrf.mxu0
        %v765 = vadd.f32 0.0, %v764
        %v766 = vpop.f32.mrf.mxu0
        %v767 = vadd.f32 0.0, %v766
        %768 = vmatmul.bf16.gmra.mxu0 %v649
        %v769 = vpop.f32.mrf.mxu0
        %v770 = vadd.f32 0.0, %v769
        %v771 = vpop.f32.mrf.mxu0
        %v772 = vadd.f32 0.0, %v771
        %773 = vmatmul.bf16.gmra.mxu0 %v652
        %v774 = vpop.f32.mrf.mxu0
        %v775 = vadd.f32 0.0, %v774
        %v776 = vpop.f32.mrf.mxu0
        %v777 = vadd.f32 0.0, %v776
        %778 = vmatmul.bf16.gmra.mxu0 %v655
        %v779 = vpop.f32.mrf.mxu0
        %v780 = vadd.f32 0.0, %v779
        %v781 = vpop.f32.mrf.mxu0
        %v782 = vadd.f32 0.0, %v781
        %783 = vdwg.mxu0
        %v796 = vunpack.c.l.b16 %v537
        %v797 = vunpack.c.l.b16 %v538
        %v798 = vunpack.c.l.b16 %v539
        %v799 = vunpack.c.l.b16 %v540
        %v800 = vunpack.c.l.b16 %v541
        %v801 = vunpack.c.l.b16 %v542
        %v802 = vunpack.c.l.b16 %v543
        %v803 = vunpack.c.l.b16 %v544
        %v804 = vunpack.c.l.b16 %v545
        %v805 = vunpack.c.l.b16 %v546
        %v806 = vunpack.c.l.b16 %v547
        %v807 = vunpack.c.l.b16 %v548
        %v808 = vpack.c.b16 %v797, %v796
        %v809 = vpack.c.b16 %v799, %v798
        %v810 = vpack.c.b16 %v801, %v800
        %v811 = vpack.c.b16 %v803, %v802
        %v812 = vpack.c.b16 %v805, %v804
        %v813 = vpack.c.b16 %v807, %v806
        %v822 = vunpack.c.l.b16 %v549
        %v823 = vunpack.c.h.b16 %v549
        %v824 = vunpack.c.l.b16 %v550
        %v825 = vunpack.c.l.b16 %v551
        %v826 = vunpack.c.h.b16 %v551
        %v827 = vunpack.c.l.b16 %v552
        %v828 = vunpack.c.l.b16 %v553
        %v829 = vunpack.c.h.b16 %v553
        %v830 = vunpack.c.l.b16 %v554
        %v831 = vunpack.c.l.b16 %v555
        %v832 = vunpack.c.h.b16 %v555
        %v833 = vunpack.c.l.b16 %v556
        %v834 = vpack.c.b16 %v825, %v822
        %v835 = vpack.c.b16 %v826, %v823
        %v836 = vpack.c.b16 %v827, %v824
        %v837 = vpack.c.b16 %v831, %v828
        %v838 = vpack.c.b16 %v832, %v829
        %v839 = vpack.c.b16 %v833, %v830
        %v844 = vsel %vm638, %v808, 0
        %v847 = vsel %vm638, %v809, 0
        %v850 = vsel %vm638, %v810, 0
        %v853 = vsel %vm638, %v811, 0
        %v856 = vsel %vm638, %v812, 0
        %v859 = vsel %vm638, %v813, 0
        %v862 = vsel %vm657, %v837, 0
        %v865 = vsel %vm657, %v838, 0
        %v868 = vsel %vm657, %v839, 0
        %870 = vmatpush.bf16.msra.mxu0 0
        %871 = vmatpush.bf16.msra.mxu0 0
        %872 = vmatpush.bf16.msra.mxu0 0
        %873 = vmatpush.bf16.msra.mxu0 0
        %874 = vmatpush.bf16.msra.mxu0 0
        %875 = vmatpush.bf16.msra.mxu0 0
        %876 = vmatpush.bf16.msra.mxu0 %v862
        %877 = vmatpush.bf16.msra.mxu0 %v834
        %878 = vmatmul.bf16.gmra.mxu0 %v844
        %v879 = vpop.f32.mrf.mxu0
        %v880 = vadd.f32 %v677, %v879
        %v881 = vpop.f32.mrf.mxu0
        %v882 = vadd.f32 %v679, %v881
        %883 = vmatmul.bf16.gmra.mxu0 %v847
        %v884 = vpop.f32.mrf.mxu0
        %v885 = vadd.f32 %v682, %v884
        %v886 = vpop.f32.mrf.mxu0
        %v887 = vadd.f32 %v684, %v886
        %888 = vmatmul.bf16.gmra.mxu0 %v850
        %v889 = vpop.f32.mrf.mxu0
        %v890 = vadd.f32 %v687, %v889
        %v891 = vpop.f32.mrf.mxu0
        %v892 = vadd.f32 %v689, %v891
        %893 = vmatmul.bf16.gmra.mxu0 %v853
        %v894 = vpop.f32.mrf.mxu0
        %v895 = vadd.f32 %v692, %v894
        %v896 = vpop.f32.mrf.mxu0
        %v897 = vadd.f32 %v694, %v896
        %898 = vmatmul.bf16.gmra.mxu0 %v856
        %v899 = vpop.f32.mrf.mxu0
        %v900 = vadd.f32 %v697, %v899
        %v901 = vpop.f32.mrf.mxu0
        %v902 = vadd.f32 %v699, %v901
        %903 = vmatmul.bf16.gmra.mxu0 %v859
        %v904 = vpop.f32.mrf.mxu0
        %v905 = vadd.f32 %v702, %v904
        %v906 = vpop.f32.mrf.mxu0
        %v907 = vadd.f32 %v704, %v906
        %908 = vdwg.mxu0
        %909 = vmatpush.bf16.msra.mxu0 0
        %910 = vmatpush.bf16.msra.mxu0 0
        %911 = vmatpush.bf16.msra.mxu0 0
        %912 = vmatpush.bf16.msra.mxu0 0
        %913 = vmatpush.bf16.msra.mxu0 0
        %914 = vmatpush.bf16.msra.mxu0 0
        %915 = vmatpush.bf16.msra.mxu0 %v865
        %916 = vmatpush.bf16.msra.mxu0 %v835
        %917 = vmatmul.bf16.gmra.mxu0 %v844
        %v918 = vpop.f32.mrf.mxu0
        %v919 = vadd.f32 %v716, %v918
        %v920 = vpop.f32.mrf.mxu0
        %v921 = vadd.f32 %v718, %v920
        %922 = vmatmul.bf16.gmra.mxu0 %v847
        %v923 = vpop.f32.mrf.mxu0
        %v924 = vadd.f32 %v721, %v923
        %v925 = vpop.f32.mrf.mxu0
        %v926 = vadd.f32 %v723, %v925
        %927 = vmatmul.bf16.gmra.mxu0 %v850
        %v928 = vpop.f32.mrf.mxu0
        %v929 = vadd.f32 %v726, %v928
        %v930 = vpop.f32.mrf.mxu0
        %v931 = vadd.f32 %v728, %v930
        %932 = vmatmul.bf16.gmra.mxu0 %v853
        %v933 = vpop.f32.mrf.mxu0
        %v934 = vadd.f32 %v731, %v933
        %v935 = vpop.f32.mrf.mxu0
        %v936 = vadd.f32 %v733, %v935
        %937 = vmatmul.bf16.gmra.mxu0 %v856
        %v938 = vpop.f32.mrf.mxu0
        %v939 = vadd.f32 %v736, %v938
        %v940 = vpop.f32.mrf.mxu0
        %v941 = vadd.f32 %v738, %v940
        %942 = vmatmul.bf16.gmra.mxu0 %v859
        %v943 = vpop.f32.mrf.mxu0
        %v944 = vadd.f32 %v741, %v943
        %v945 = vpop.f32.mrf.mxu0
        %v946 = vadd.f32 %v743, %v945
        %947 = vdwg.mxu0
        %948 = vmatpush.bf16.msra.mxu0 0
        %949 = vmatpush.bf16.msra.mxu0 0
        %950 = vmatpush.bf16.msra.mxu0 0
        %951 = vmatpush.bf16.msra.mxu0 0
        %952 = vmatpush.bf16.msra.mxu0 0
        %953 = vmatpush.bf16.msra.mxu0 0
        %954 = vmatpush.bf16.msra.mxu0 %v868
        %955 = vmatpush.bf16.msra.mxu0 %v836
        %956 = vmatmul.bf16.gmra.mxu0 %v844
        %v957 = vpop.f32.mrf.mxu0
        %v958 = vadd.f32 %v755, %v957
        %v959 = vpop.f32.mrf.mxu0
        %v960 = vadd.f32 %v757, %v959
        %961 = vmatmul.bf16.gmra.mxu0 %v847
        %v962 = vpop.f32.mrf.mxu0
        %v963 = vadd.f32 %v760, %v962
        %v964 = vpop.f32.mrf.mxu0
        %v965 = vadd.f32 %v762, %v964
        %966 = vmatmul.bf16.gmra.mxu0 %v850
        %v967 = vpop.f32.mrf.mxu0
        %v968 = vadd.f32 %v765, %v967
        %v969 = vpop.f32.mrf.mxu0
        %v970 = vadd.f32 %v767, %v969
        %971 = vmatmul.bf16.gmra.mxu0 %v853
        %v972 = vpop.f32.mrf.mxu0
        %v973 = vadd.f32 %v770, %v972
        %v974 = vpop.f32.mrf.mxu0
        %v975 = vadd.f32 %v772, %v974
        %976 = vmatmul.bf16.gmra.mxu0 %v856
        %v977 = vpop.f32.mrf.mxu0
        %v978 = vadd.f32 %v775, %v977
        %v979 = vpop.f32.mrf.mxu0
        %v980 = vadd.f32 %v777, %v979
        %981 = vmatmul.bf16.gmra.mxu0 %v859
        %v982 = vpop.f32.mrf.mxu0
        %v983 = vadd.f32 %v780, %v982
        %v984 = vpop.f32.mrf.mxu0
        %v985 = vadd.f32 %v782, %v984
        %986 = vdwg.mxu0
        %s987 = scalar_lea.vmem %s496, 8 [#allocation3]
        %v988 = vld [vmem:[%s987] sm:$0xf]
        %v989 = vld [vmem:[%s987 + $0x8] sm:$0xf]
        %v990 = vld [vmem:[%s987 + $0x10] sm:$0xf]
        %v991 = vld [vmem:[%s987 + $0x18] sm:$0xf]
        %v992 = vld [vmem:[%s987 + $0x20] sm:$0xf]
        %v993 = vld [vmem:[%s987 + $0x28] sm:$0xf]
        %v994 = vld [vmem:[%s987 + $0x30] sm:$0xf]
        %v995 = vld [vmem:[%s987 + $0x38] sm:$0xf]
        %v996 = vld [vmem:[%s987 + $0x40] sm:$0xf]
        %v997 = vld [vmem:[%s987 + $0x48] sm:$0xf]
        %v998 = vld [vmem:[%s987 + $0x50] sm:$0xf]
        %v999 = vld [vmem:[%s987 + $0x58] sm:$0xf]
        %s1000 = scalar_lea.vmem %s1, 96
        %v1001 = vld [vmem:[%s1000] sm:$0xff]
        %v1002 = vld [vmem:[%s1000 + $0x8] sm:$0xf]
        %v1003 = vld [vmem:[%s1000 + $0xc] sm:$0xff]
        %v1004 = vld [vmem:[%s1000 + $0x14] sm:$0xf]
        %v1005 = vld [vmem:[%s1000 + $0x18] sm:$0xff]
        %v1006 = vld [vmem:[%s1000 + $0x20] sm:$0xf]
        %v1007 = vld [vmem:[%s1000 + $0x24] sm:$0x33]
        %v1008 = vld [vmem:[%s1000 + $0x2c] sm:$0x3]
        %v1021 = vunpack.c.l.b16 %v988
        %v1022 = vunpack.c.l.b16 %v989
        %v1023 = vunpack.c.l.b16 %v990
        %v1024 = vunpack.c.l.b16 %v991
        %v1025 = vunpack.c.l.b16 %v992
        %v1026 = vunpack.c.l.b16 %v993
        %v1027 = vunpack.c.l.b16 %v994
        %v1028 = vunpack.c.l.b16 %v995
        %v1029 = vunpack.c.l.b16 %v996
        %v1030 = vunpack.c.l.b16 %v997
        %v1031 = vunpack.c.l.b16 %v998
        %v1032 = vunpack.c.l.b16 %v999
        %v1033 = vpack.c.b16 %v1022, %v1021
        %v1034 = vpack.c.b16 %v1024, %v1023
        %v1035 = vpack.c.b16 %v1026, %v1025
        %v1036 = vpack.c.b16 %v1028, %v1027
        %v1037 = vpack.c.b16 %v1030, %v1029
        %v1038 = vpack.c.b16 %v1032, %v1031
        %v1047 = vunpack.c.l.b16 %v1001
        %v1048 = vunpack.c.h.b16 %v1001
        %v1049 = vunpack.c.l.b16 %v1002
        %v1050 = vunpack.c.l.b16 %v1003
        %v1051 = vunpack.c.h.b16 %v1003
        %v1052 = vunpack.c.l.b16 %v1004
        %v1053 = vunpack.c.l.b16 %v1005
        %v1054 = vunpack.c.h.b16 %v1005
        %v1055 = vunpack.c.l.b16 %v1006
        %v1056 = vunpack.c.l.b16 %v1007
        %v1057 = vunpack.c.h.b16 %v1007
        %v1058 = vunpack.c.l.b16 %v1008
        %v1059 = vpack.c.b16 %v1050, %v1047
        %v1060 = vpack.c.b16 %v1051, %v1048
        %v1061 = vpack.c.b16 %v1052, %v1049
        %v1062 = vpack.c.b16 %v1056, %v1053
        %v1063 = vpack.c.b16 %v1057, %v1054
        %v1064 = vpack.c.b16 %v1058, %v1055
        %v1069 = vsel %vm638, %v1033, 0
        %v1072 = vsel %vm638, %v1034, 0
        %v1075 = vsel %vm638, %v1035, 0
        %v1078 = vsel %vm638, %v1036, 0
        %v1081 = vsel %vm638, %v1037, 0
        %v1084 = vsel %vm638, %v1038, 0
        %v1087 = vsel %vm657, %v1062, 0
        %v1090 = vsel %vm657, %v1063, 0
        %v1093 = vsel %vm657, %v1064, 0
        %1095 = vmatpush.bf16.msra.mxu0 0
        %1096 = vmatpush.bf16.msra.mxu0 0
        %1097 = vmatpush.bf16.msra.mxu0 0
        %1098 = vmatpush.bf16.msra.mxu0 0
        %1099 = vmatpush.bf16.msra.mxu0 0
        %1100 = vmatpush.bf16.msra.mxu0 0
        %1101 = vmatpush.bf16.msra.mxu0 %v1087
        %1102 = vmatpush.bf16.msra.mxu0 %v1059
        %1103 = vmatmul.bf16.gmra.mxu0 %v1069
        %v1104 = vpop.f32.mrf.mxu0
        %v1105 = vadd.f32 0.0, %v1104
        %v1106 = vpop.f32.mrf.mxu0
        %v1107 = vadd.f32 0.0, %v1106
        %1108 = vmatmul.bf16.gmra.mxu0 %v1072
        %v1109 = vpop.f32.mrf.mxu0
        %v1110 = vadd.f32 0.0, %v1109
        %v1111 = vpop.f32.mrf.mxu0
        %v1112 = vadd.f32 0.0, %v1111
        %1113 = vmatmul.bf16.gmra.mxu0 %v1075
        %v1114 = vpop.f32.mrf.mxu0
        %v1115 = vadd.f32 0.0, %v1114
        %v1116 = vpop.f32.mrf.mxu0
        %v1117 = vadd.f32 0.0, %v1116
        %1118 = vmatmul.bf16.gmra.mxu0 %v1078
        %v1119 = vpop.f32.mrf.mxu0
        %v1120 = vadd.f32 0.0, %v1119
        %v1121 = vpop.f32.mrf.mxu0
        %v1122 = vadd.f32 0.0, %v1121
        %1123 = vmatmul.bf16.gmra.mxu0 %v1081
        %v1124 = vpop.f32.mrf.mxu0
        %v1125 = vadd.f32 0.0, %v1124
        %v1126 = vpop.f32.mrf.mxu0
        %v1127 = vadd.f32 0.0, %v1126
        %1128 = vmatmul.bf16.gmra.mxu0 %v1084
        %v1129 = vpop.f32.mrf.mxu0
        %v1130 = vadd.f32 0.0, %v1129
        %v1131 = vpop.f32.mrf.mxu0
        %v1132 = vadd.f32 0.0, %v1131
        %1133 = vdwg.mxu0
        %1134 = vmatpush.bf16.msra.mxu0 0
        %1135 = vmatpush.bf16.msra.mxu0 0
        %1136 = vmatpush.bf16.msra.mxu0 0
        %1137 = vmatpush.bf16.msra.mxu0 0
        %1138 = vmatpush.bf16.msra.mxu0 0
        %1139 = vmatpush.bf16.msra.mxu0 0
        %1140 = vmatpush.bf16.msra.mxu0 %v1090
        %1141 = vmatpush.bf16.msra.mxu0 %v1060
        %1142 = vmatmul.bf16.gmra.mxu0 %v1069
        %v1143 = vpop.f32.mrf.mxu0
        %v1144 = vadd.f32 0.0, %v1143
        %v1145 = vpop.f32.mrf.mxu0
        %v1146 = vadd.f32 0.0, %v1145
        %1147 = vmatmul.bf16.gmra.mxu0 %v1072
        %v1148 = vpop.f32.mrf.mxu0
        %v1149 = vadd.f32 0.0, %v1148
        %v1150 = vpop.f32.mrf.mxu0
        %v1151 = vadd.f32 0.0, %v1150
        %1152 = vmatmul.bf16.gmra.mxu0 %v1075
        %v1153 = vpop.f32.mrf.mxu0
        %v1154 = vadd.f32 0.0, %v1153
        %v1155 = vpop.f32.mrf.mxu0
        %v1156 = vadd.f32 0.0, %v1155
        %1157 = vmatmul.bf16.gmra.mxu0 %v1078
        %v1158 = vpop.f32.mrf.mxu0
        %v1159 = vadd.f32 0.0, %v1158
        %v1160 = vpop.f32.mrf.mxu0
        %v1161 = vadd.f32 0.0, %v1160
        %1162 = vmatmul.bf16.gmra.mxu0 %v1081
        %v1163 = vpop.f32.mrf.mxu0
        %v1164 = vadd.f32 0.0, %v1163
        %v1165 = vpop.f32.mrf.mxu0
        %v1166 = vadd.f32 0.0, %v1165
        %1167 = vmatmul.bf16.gmra.mxu0 %v1084
        %v1168 = vpop.f32.mrf.mxu0
        %v1169 = vadd.f32 0.0, %v1168
        %v1170 = vpop.f32.mrf.mxu0
        %v1171 = vadd.f32 0.0, %v1170
        %1172 = vdwg.mxu0
        %1173 = vmatpush.bf16.msra.mxu0 0
        %1174 = vmatpush.bf16.msra.mxu0 0
        %1175 = vmatpush.bf16.msra.mxu0 0
        %1176 = vmatpush.bf16.msra.mxu0 0
        %1177 = vmatpush.bf16.msra.mxu0 0
        %1178 = vmatpush.bf16.msra.mxu0 0
        %1179 = vmatpush.bf16.msra.mxu0 %v1093
        %1180 = vmatpush.bf16.msra.mxu0 %v1061
        %1181 = vmatmul.bf16.gmra.mxu0 %v1069
        %v1182 = vpop.f32.mrf.mxu0
        %v1183 = vadd.f32 0.0, %v1182
        %v1184 = vpop.f32.mrf.mxu0
        %v1185 = vadd.f32 0.0, %v1184
        %1186 = vmatmul.bf16.gmra.mxu0 %v1072
        %v1187 = vpop.f32.mrf.mxu0
        %v1188 = vadd.f32 0.0, %v1187
        %v1189 = vpop.f32.mrf.mxu0
        %v1190 = vadd.f32 0.0, %v1189
        %1191 = vmatmul.bf16.gmra.mxu0 %v1075
        %v1192 = vpop.f32.mrf.mxu0
        %v1193 = vadd.f32 0.0, %v1192
        %v1194 = vpop.f32.mrf.mxu0
        %v1195 = vadd.f32 0.0, %v1194
        %1196 = vmatmul.bf16.gmra.mxu0 %v1078
        %v1197 = vpop.f32.mrf.mxu0
        %v1198 = vadd.f32 0.0, %v1197
        %v1199 = vpop.f32.mrf.mxu0
        %v1200 = vadd.f32 0.0, %v1199
        %1201 = vmatmul.bf16.gmra.mxu0 %v1081
        %v1202 = vpop.f32.mrf.mxu0
        %v1203 = vadd.f32 0.0, %v1202
        %v1204 = vpop.f32.mrf.mxu0
        %v1205 = vadd.f32 0.0, %v1204
        %1206 = vmatmul.bf16.gmra.mxu0 %v1084
        %v1207 = vpop.f32.mrf.mxu0
        %v1208 = vadd.f32 0.0, %v1207
        %v1209 = vpop.f32.mrf.mxu0
        %v1210 = vadd.f32 0.0, %v1209
        %1211 = vdwg.mxu0
        %v1212 = vadd.f32 %v880, %v1105
        %v1213 = vadd.f32 %v919, %v1144
        %v1214 = vadd.f32 %v958, %v1183
        %v1215 = vadd.f32 %v882, %v1107
        %v1216 = vadd.f32 %v921, %v1146
        %v1217 = vadd.f32 %v960, %v1185
        %v1218 = vadd.f32 %v885, %v1110
        %v1219 = vadd.f32 %v924, %v1149
        %v1220 = vadd.f32 %v963, %v1188
        %v1221 = vadd.f32 %v887, %v1112
        %v1222 = vadd.f32 %v926, %v1151
        %v1223 = vadd.f32 %v965, %v1190
        %v1224 = vadd.f32 %v890, %v1115
        %v1225 = vadd.f32 %v929, %v1154
        %v1226 = vadd.f32 %v968, %v1193
        %v1227 = vadd.f32 %v892, %v1117
        %v1228 = vadd.f32 %v931, %v1156
        %v1229 = vadd.f32 %v970, %v1195
        %v1230 = vadd.f32 %v895, %v1120
        %v1231 = vadd.f32 %v934, %v1159
        %v1232 = vadd.f32 %v973, %v1198
        %v1233 = vadd.f32 %v897, %v1122
        %v1234 = vadd.f32 %v936, %v1161
        %v1235 = vadd.f32 %v975, %v1200
        %v1236 = vadd.f32 %v900, %v1125
        %v1237 = vadd.f32 %v939, %v1164
        %v1238 = vadd.f32 %v978, %v1203
        %v1239 = vadd.f32 %v902, %v1127
        %v1240 = vadd.f32 %v941, %v1166
        %v1241 = vadd.f32 %v980, %v1205
        %v1242 = vadd.f32 %v905, %v1130
        %v1243 = vadd.f32 %v944, %v1169
        %v1244 = vadd.f32 %v983, %v1208
        %v1245 = vadd.f32 %v907, %v1132
        %v1246 = vadd.f32 %v946, %v1171
        %v1247 = vadd.f32 %v985, %v1210
        %s1248 = scalar_lea.vmem %s496, 12 [#allocation3]
        %v1249 = vld [vmem:[%s1248] sm:$0xf]
        %v1250 = vld [vmem:[%s1248 + $0x8] sm:$0xf]
        %v1251 = vld [vmem:[%s1248 + $0x10] sm:$0xf]
        %v1252 = vld [vmem:[%s1248 + $0x18] sm:$0xf]
        %v1253 = vld [vmem:[%s1248 + $0x20] sm:$0xf]
        %v1254 = vld [vmem:[%s1248 + $0x28] sm:$0xf]
        %v1255 = vld [vmem:[%s1248 + $0x30] sm:$0xf]
        %v1256 = vld [vmem:[%s1248 + $0x38] sm:$0xf]
        %v1257 = vld [vmem:[%s1248 + $0x40] sm:$0xf]
        %v1258 = vld [vmem:[%s1248 + $0x48] sm:$0xf]
        %v1259 = vld [vmem:[%s1248 + $0x50] sm:$0xf]
        %v1260 = vld [vmem:[%s1248 + $0x58] sm:$0xf]
        %s1261 = scalar_lea.vmem %s1, 144
        %v1262 = vld [vmem:[%s1261] sm:$0xff]
        %v1263 = vld [vmem:[%s1261 + $0x8] sm:$0xf]
        %v1264 = vld [vmem:[%s1261 + $0xc] sm:$0xff]
        %v1265 = vld [vmem:[%s1261 + $0x14] sm:$0xf]
        %v1266 = vld [vmem:[%s1261 + $0x18] sm:$0xff]
        %v1267 = vld [vmem:[%s1261 + $0x20] sm:$0xf]
        %v1268 = vld [vmem:[%s1261 + $0x24] sm:$0x33]
        %v1269 = vld [vmem:[%s1261 + $0x2c] sm:$0x3]
        %v1282 = vunpack.c.l.b16 %v1249
        %v1283 = vunpack.c.l.b16 %v1250
        %v1284 = vunpack.c.l.b16 %v1251
        %v1285 = vunpack.c.l.b16 %v1252
        %v1286 = vunpack.c.l.b16 %v1253
        %v1287 = vunpack.c.l.b16 %v1254
        %v1288 = vunpack.c.l.b16 %v1255
        %v1289 = vunpack.c.l.b16 %v1256
        %v1290 = vunpack.c.l.b16 %v1257
        %v1291 = vunpack.c.l.b16 %v1258
        %v1292 = vunpack.c.l.b16 %v1259
        %v1293 = vunpack.c.l.b16 %v1260
        %v1294 = vpack.c.b16 %v1283, %v1282
        %v1295 = vpack.c.b16 %v1285, %v1284
        %v1296 = vpack.c.b16 %v1287, %v1286
        %v1297 = vpack.c.b16 %v1289, %v1288
        %v1298 = vpack.c.b16 %v1291, %v1290
        %v1299 = vpack.c.b16 %v1293, %v1292
        %v1308 = vunpack.c.l.b16 %v1262
        %v1309 = vunpack.c.h.b16 %v1262
        %v1310 = vunpack.c.l.b16 %v1263
        %v1311 = vunpack.c.l.b16 %v1264
        %v1312 = vunpack.c.h.b16 %v1264
        %v1313 = vunpack.c.l.b16 %v1265
        %v1314 = vunpack.c.l.b16 %v1266
        %v1315 = vunpack.c.h.b16 %v1266
        %v1316 = vunpack.c.l.b16 %v1267
        %v1317 = vunpack.c.l.b16 %v1268
        %v1318 = vunpack.c.h.b16 %v1268
        %v1319 = vunpack.c.l.b16 %v1269
        %v1320 = vpack.c.b16 %v1311, %v1308
        %v1321 = vpack.c.b16 %v1312, %v1309
        %v1322 = vpack.c.b16 %v1313, %v1310
        %v1323 = vpack.c.b16 %v1317, %v1314
        %v1324 = vpack.c.b16 %v1318, %v1315
        %v1325 = vpack.c.b16 %v1319, %v1316
        %v1330 = vsel %vm638, %v1294, 0
        %v1333 = vsel %vm638, %v1295, 0
        %v1336 = vsel %vm638, %v1296, 0
        %v1339 = vsel %vm638, %v1297, 0
        %v1342 = vsel %vm638, %v1298, 0
        %v1345 = vsel %vm638, %v1299, 0
        %v1348 = vsel %vm657, %v1323, 0
        %v1351 = vsel %vm657, %v1324, 0
        %v1354 = vsel %vm657, %v1325, 0
        %1356 = vmatpush.bf16.msra.mxu0 0
        %1357 = vmatpush.bf16.msra.mxu0 0
        %1358 = vmatpush.bf16.msra.mxu0 0
        %1359 = vmatpush.bf16.msra.mxu0 0
        %1360 = vmatpush.bf16.msra.mxu0 0
        %1361 = vmatpush.bf16.msra.mxu0 0
        %1362 = vmatpush.bf16.msra.mxu0 %v1348
        %1363 = vmatpush.bf16.msra.mxu0 %v1320
        %1364 = vmatmul.bf16.gmra.mxu0 %v1330
        %v1365 = vpop.f32.mrf.mxu0
        %v1366 = vadd.f32 0.0, %v1365
        %v1367 = vpop.f32.mrf.mxu0
        %v1368 = vadd.f32 0.0, %v1367
        %1369 = vmatmul.bf16.gmra.mxu0 %v1333
        %v1370 = vpop.f32.mrf.mxu0
        %v1371 = vadd.f32 0.0, %v1370
        %v1372 = vpop.f32.mrf.mxu0
        %v1373 = vadd.f32 0.0, %v1372
        %1374 = vmatmul.bf16.gmra.mxu0 %v1336
        %v1375 = vpop.f32.mrf.mxu0
        %v1376 = vadd.f32 0.0, %v1375
        %v1377 = vpop.f32.mrf.mxu0
        %v1378 = vadd.f32 0.0, %v1377
        %1379 = vmatmul.bf16.gmra.mxu0 %v1339
        %v1380 = vpop.f32.mrf.mxu0
        %v1381 = vadd.f32 0.0, %v1380
        %v1382 = vpop.f32.mrf.mxu0
        %v1383 = vadd.f32 0.0, %v1382
        %1384 = vmatmul.bf16.gmra.mxu0 %v1342
        %v1385 = vpop.f32.mrf.mxu0
        %v1386 = vadd.f32 0.0, %v1385
        %v1387 = vpop.f32.mrf.mxu0
        %v1388 = vadd.f32 0.0, %v1387
        %1389 = vmatmul.bf16.gmra.mxu0 %v1345
        %v1390 = vpop.f32.mrf.mxu0
        %v1391 = vadd.f32 0.0, %v1390
        %v1392 = vpop.f32.mrf.mxu0
        %v1393 = vadd.f32 0.0, %v1392
        %1394 = vdwg.mxu0
        %1395 = vmatpush.bf16.msra.mxu0 0
        %1396 = vmatpush.bf16.msra.mxu0 0
        %1397 = vmatpush.bf16.msra.mxu0 0
        %1398 = vmatpush.bf16.msra.mxu0 0
        %1399 = vmatpush.bf16.msra.mxu0 0
        %1400 = vmatpush.bf16.msra.mxu0 0
        %1401 = vmatpush.bf16.msra.mxu0 %v1351
        %1402 = vmatpush.bf16.msra.mxu0 %v1321
        %1403 = vmatmul.bf16.gmra.mxu0 %v1330
        %v1404 = vpop.f32.mrf.mxu0
        %v1405 = vadd.f32 0.0, %v1404
        %v1406 = vpop.f32.mrf.mxu0
        %v1407 = vadd.f32 0.0, %v1406
        %1408 = vmatmul.bf16.gmra.mxu0 %v1333
        %v1409 = vpop.f32.mrf.mxu0
        %v1410 = vadd.f32 0.0, %v1409
        %v1411 = vpop.f32.mrf.mxu0
        %v1412 = vadd.f32 0.0, %v1411
        %1413 = vmatmul.bf16.gmra.mxu0 %v1336
        %v1414 = vpop.f32.mrf.mxu0
        %v1415 = vadd.f32 0.0, %v1414
        %v1416 = vpop.f32.mrf.mxu0
        %v1417 = vadd.f32 0.0, %v1416
        %1418 = vmatmul.bf16.gmra.mxu0 %v1339
        %v1419 = vpop.f32.mrf.mxu0
        %v1420 = vadd.f32 0.0, %v1419
        %v1421 = vpop.f32.mrf.mxu0
        %v1422 = vadd.f32 0.0, %v1421
        %1423 = vmatmul.bf16.gmra.mxu0 %v1342
        %v1424 = vpop.f32.mrf.mxu0
        %v1425 = vadd.f32 0.0, %v1424
        %v1426 = vpop.f32.mrf.mxu0
        %v1427 = vadd.f32 0.0, %v1426
        %1428 = vmatmul.bf16.gmra.mxu0 %v1345
        %v1429 = vpop.f32.mrf.mxu0
        %v1430 = vadd.f32 0.0, %v1429
        %v1431 = vpop.f32.mrf.mxu0
        %v1432 = vadd.f32 0.0, %v1431
        %1433 = vdwg.mxu0
        %1434 = vmatpush.bf16.msra.mxu0 0
        %1435 = vmatpush.bf16.msra.mxu0 0
        %1436 = vmatpush.bf16.msra.mxu0 0
        %1437 = vmatpush.bf16.msra.mxu0 0
        %1438 = vmatpush.bf16.msra.mxu0 0
        %1439 = vmatpush.bf16.msra.mxu0 0
        %1440 = vmatpush.bf16.msra.mxu0 %v1354
        %1441 = vmatpush.bf16.msra.mxu0 %v1322
        %1442 = vmatmul.bf16.gmra.mxu0 %v1330
        %v1443 = vpop.f32.mrf.mxu0
        %v1444 = vadd.f32 0.0, %v1443
        %v1445 = vpop.f32.mrf.mxu0
        %v1446 = vadd.f32 0.0, %v1445
        %1447 = vmatmul.bf16.gmra.mxu0 %v1333
        %v1448 = vpop.f32.mrf.mxu0
        %v1449 = vadd.f32 0.0, %v1448
        %v1450 = vpop.f32.mrf.mxu0
        %v1451 = vadd.f32 0.0, %v1450
        %1452 = vmatmul.bf16.gmra.mxu0 %v1336
        %v1453 = vpop.f32.mrf.mxu0
        %v1454 = vadd.f32 0.0, %v1453
        %v1455 = vpop.f32.mrf.mxu0
        %v1456 = vadd.f32 0.0, %v1455
        %1457 = vmatmul.bf16.gmra.mxu0 %v1339
        %v1458 = vpop.f32.mrf.mxu0
        %v1459 = vadd.f32 0.0, %v1458
        %v1460 = vpop.f32.mrf.mxu0
        %v1461 = vadd.f32 0.0, %v1460
        %1462 = vmatmul.bf16.gmra.mxu0 %v1342
        %v1463 = vpop.f32.mrf.mxu0
        %v1464 = vadd.f32 0.0, %v1463
        %v1465 = vpop.f32.mrf.mxu0
        %v1466 = vadd.f32 0.0, %v1465
        %1467 = vmatmul.bf16.gmra.mxu0 %v1345
        %v1468 = vpop.f32.mrf.mxu0
        %v1469 = vadd.f32 0.0, %v1468
        %v1470 = vpop.f32.mrf.mxu0
        %v1471 = vadd.f32 0.0, %v1470
        %1472 = vdwg.mxu0
        %v1473 = vadd.f32 %v1212, %v1366
        %v1474 = vadd.f32 %v1213, %v1405
        %v1475 = vadd.f32 %v1214, %v1444
        %v1476 = vadd.f32 %v1215, %v1368
        %v1477 = vadd.f32 %v1216, %v1407
        %v1478 = vadd.f32 %v1217, %v1446
        %v1479 = vadd.f32 %v1218, %v1371
        %v1480 = vadd.f32 %v1219, %v1410
        %v1481 = vadd.f32 %v1220, %v1449
        %v1482 = vadd.f32 %v1221, %v1373
        %v1483 = vadd.f32 %v1222, %v1412
        %v1484 = vadd.f32 %v1223, %v1451
        %v1485 = vadd.f32 %v1224, %v1376
        %v1486 = vadd.f32 %v1225, %v1415
        %v1487 = vadd.f32 %v1226, %v1454
        %v1488 = vadd.f32 %v1227, %v1378
        %v1489 = vadd.f32 %v1228, %v1417
        %v1490 = vadd.f32 %v1229, %v1456
        %v1491 = vadd.f32 %v1230, %v1381
        %v1492 = vadd.f32 %v1231, %v1420
        %v1493 = vadd.f32 %v1232, %v1459
        %v1494 = vadd.f32 %v1233, %v1383
        %v1495 = vadd.f32 %v1234, %v1422
        %v1496 = vadd.f32 %v1235, %v1461
        %v1497 = vadd.f32 %v1236, %v1386
        %v1498 = vadd.f32 %v1237, %v1425
        %v1499 = vadd.f32 %v1238, %v1464
        %v1500 = vadd.f32 %v1239, %v1388
        %v1501 = vadd.f32 %v1240, %v1427
        %v1502 = vadd.f32 %v1241, %v1466
        %v1503 = vadd.f32 %v1242, %v1391
        %v1504 = vadd.f32 %v1243, %v1430
        %v1505 = vadd.f32 %v1244, %v1469
        %v1506 = vadd.f32 %v1245, %v1393
        %v1507 = vadd.f32 %v1246, %v1432
        %v1508 = vadd.f32 %v1247, %v1471
        %s1509 = scalar_lea.vmem %s496, 16 [#allocation3]
        %v1510 = vld [vmem:[%s1509] sm:$0xf]
        %v1511 = vld [vmem:[%s1509 + $0x8] sm:$0xf]
        %v1512 = vld [vmem:[%s1509 + $0x10] sm:$0xf]
        %v1513 = vld [vmem:[%s1509 + $0x18] sm:$0xf]
        %v1514 = vld [vmem:[%s1509 + $0x20] sm:$0xf]
        %v1515 = vld [vmem:[%s1509 + $0x28] sm:$0xf]
        %v1516 = vld [vmem:[%s1509 + $0x30] sm:$0xf]
        %v1517 = vld [vmem:[%s1509 + $0x38] sm:$0xf]
        %v1518 = vld [vmem:[%s1509 + $0x40] sm:$0xf]
        %v1519 = vld [vmem:[%s1509 + $0x48] sm:$0xf]
        %v1520 = vld [vmem:[%s1509 + $0x50] sm:$0xf]
        %v1521 = vld [vmem:[%s1509 + $0x58] sm:$0xf]
        %s1522 = scalar_lea.vmem %s1, 192
        %v1523 = vld [vmem:[%s1522] sm:$0xff]
        %v1524 = vld [vmem:[%s1522 + $0x8] sm:$0xf]
        %v1525 = vld [vmem:[%s1522 + $0xc] sm:$0xff]
        %v1526 = vld [vmem:[%s1522 + $0x14] sm:$0xf]
        %v1527 = vld [vmem:[%s1522 + $0x18] sm:$0xff]
        %v1528 = vld [vmem:[%s1522 + $0x20] sm:$0xf]
        %v1529 = vld [vmem:[%s1522 + $0x24] sm:$0x33]
        %v1530 = vld [vmem:[%s1522 + $0x2c] sm:$0x3]
        %v1543 = vunpack.c.l.b16 %v1510
        %v1544 = vunpack.c.l.b16 %v1511
        %v1545 = vunpack.c.l.b16 %v1512
        %v1546 = vunpack.c.l.b16 %v1513
        %v1547 = vunpack.c.l.b16 %v1514
        %v1548 = vunpack.c.l.b16 %v1515
        %v1549 = vunpack.c.l.b16 %v1516
        %v1550 = vunpack.c.l.b16 %v1517
        %v1551 = vunpack.c.l.b16 %v1518
        %v1552 = vunpack.c.l.b16 %v1519
        %v1553 = vunpack.c.l.b16 %v1520
        %v1554 = vunpack.c.l.b16 %v1521
        %v1555 = vpack.c.b16 %v1544, %v1543
        %v1556 = vpack.c.b16 %v1546, %v1545
        %v1557 = vpack.c.b16 %v1548, %v1547
        %v1558 = vpack.c.b16 %v1550, %v1549
        %v1559 = vpack.c.b16 %v1552, %v1551
        %v1560 = vpack.c.b16 %v1554, %v1553
        %v1569 = vunpack.c.l.b16 %v1523
        %v1570 = vunpack.c.h.b16 %v1523
        %v1571 = vunpack.c.l.b16 %v1524
        %v1572 = vunpack.c.l.b16 %v1525
        %v1573 = vunpack.c.h.b16 %v1525
        %v1574 = vunpack.c.l.b16 %v1526
        %v1575 = vunpack.c.l.b16 %v1527
        %v1576 = vunpack.c.h.b16 %v1527
        %v1577 = vunpack.c.l.b16 %v1528
        %v1578 = vunpack.c.l.b16 %v1529
        %v1579 = vunpack.c.h.b16 %v1529
        %v1580 = vunpack.c.l.b16 %v1530
        %v1581 = vpack.c.b16 %v1572, %v1569
        %v1582 = vpack.c.b16 %v1573, %v1570
        %v1583 = vpack.c.b16 %v1574, %v1571
        %v1584 = vpack.c.b16 %v1578, %v1575
        %v1585 = vpack.c.b16 %v1579, %v1576
        %v1586 = vpack.c.b16 %v1580, %v1577
        %v1591 = vsel %vm638, %v1555, 0
        %v1594 = vsel %vm638, %v1556, 0
        %v1597 = vsel %vm638, %v1557, 0
        %v1600 = vsel %vm638, %v1558, 0
        %v1603 = vsel %vm638, %v1559, 0
        %v1606 = vsel %vm638, %v1560, 0
        %v1609 = vsel %vm657, %v1584, 0
        %v1612 = vsel %vm657, %v1585, 0
        %v1615 = vsel %vm657, %v1586, 0
        %1617 = vmatpush.bf16.msra.mxu0 0
        %1618 = vmatpush.bf16.msra.mxu0 0
        %1619 = vmatpush.bf16.msra.mxu0 0
        %1620 = vmatpush.bf16.msra.mxu0 0
        %1621 = vmatpush.bf16.msra.mxu0 0
        %1622 = vmatpush.bf16.msra.mxu0 0
        %1623 = vmatpush.bf16.msra.mxu0 %v1609
        %1624 = vmatpush.bf16.msra.mxu0 %v1581
        %1625 = vmatmul.bf16.gmra.mxu0 %v1591
        %v1626 = vpop.f32.mrf.mxu0
        %v1627 = vadd.f32 0.0, %v1626
        %v1628 = vpop.f32.mrf.mxu0
        %v1629 = vadd.f32 0.0, %v1628
        %1630 = vmatmul.bf16.gmra.mxu0 %v1594
        %v1631 = vpop.f32.mrf.mxu0
        %v1632 = vadd.f32 0.0, %v1631
        %v1633 = vpop.f32.mrf.mxu0
        %v1634 = vadd.f32 0.0, %v1633
        %1635 = vmatmul.bf16.gmra.mxu0 %v1597
        %v1636 = vpop.f32.mrf.mxu0
        %v1637 = vadd.f32 0.0, %v1636
        %v1638 = vpop.f32.mrf.mxu0
        %v1639 = vadd.f32 0.0, %v1638
        %1640 = vmatmul.bf16.gmra.mxu0 %v1600
        %v1641 = vpop.f32.mrf.mxu0
        %v1642 = vadd.f32 0.0, %v1641
        %v1643 = vpop.f32.mrf.mxu0
        %v1644 = vadd.f32 0.0, %v1643
        %1645 = vmatmul.bf16.gmra.mxu0 %v1603
        %v1646 = vpop.f32.mrf.mxu0
        %v1647 = vadd.f32 0.0, %v1646
        %v1648 = vpop.f32.mrf.mxu0
        %v1649 = vadd.f32 0.0, %v1648
        %1650 = vmatmul.bf16.gmra.mxu0 %v1606
        %v1651 = vpop.f32.mrf.mxu0
        %v1652 = vadd.f32 0.0, %v1651
        %v1653 = vpop.f32.mrf.mxu0
        %v1654 = vadd.f32 0.0, %v1653
        %1655 = vdwg.mxu0
        %1656 = vmatpush.bf16.msra.mxu0 0
        %1657 = vmatpush.bf16.msra.mxu0 0
        %1658 = vmatpush.bf16.msra.mxu0 0
        %1659 = vmatpush.bf16.msra.mxu0 0
        %1660 = vmatpush.bf16.msra.mxu0 0
        %1661 = vmatpush.bf16.msra.mxu0 0
        %1662 = vmatpush.bf16.msra.mxu0 %v1612
        %1663 = vmatpush.bf16.msra.mxu0 %v1582
        %1664 = vmatmul.bf16.gmra.mxu0 %v1591
        %v1665 = vpop.f32.mrf.mxu0
        %v1666 = vadd.f32 0.0, %v1665
        %v1667 = vpop.f32.mrf.mxu0
        %v1668 = vadd.f32 0.0, %v1667
        %1669 = vmatmul.bf16.gmra.mxu0 %v1594
        %v1670 = vpop.f32.mrf.mxu0
        %v1671 = vadd.f32 0.0, %v1670
        %v1672 = vpop.f32.mrf.mxu0
        %v1673 = vadd.f32 0.0, %v1672
        %1674 = vmatmul.bf16.gmra.mxu0 %v1597
        %v1675 = vpop.f32.mrf.mxu0
        %v1676 = vadd.f32 0.0, %v1675
        %v1677 = vpop.f32.mrf.mxu0
        %v1678 = vadd.f32 0.0, %v1677
        %1679 = vmatmul.bf16.gmra.mxu0 %v1600
        %v1680 = vpop.f32.mrf.mxu0
        %v1681 = vadd.f32 0.0, %v1680
        %v1682 = vpop.f32.mrf.mxu0
        %v1683 = vadd.f32 0.0, %v1682
        %1684 = vmatmul.bf16.gmra.mxu0 %v1603
        %v1685 = vpop.f32.mrf.mxu0
        %v1686 = vadd.f32 0.0, %v1685
        %v1687 = vpop.f32.mrf.mxu0
        %v1688 = vadd.f32 0.0, %v1687
        %1689 = vmatmul.bf16.gmra.mxu0 %v1606
        %v1690 = vpop.f32.mrf.mxu0
        %v1691 = vadd.f32 0.0, %v1690
        %v1692 = vpop.f32.mrf.mxu0
        %v1693 = vadd.f32 0.0, %v1692
        %1694 = vdwg.mxu0
        %1695 = vmatpush.bf16.msra.mxu0 0
        %1696 = vmatpush.bf16.msra.mxu0 0
        %1697 = vmatpush.bf16.msra.mxu0 0
        %1698 = vmatpush.bf16.msra.mxu0 0
        %1699 = vmatpush.bf16.msra.mxu0 0
        %1700 = vmatpush.bf16.msra.mxu0 0
        %1701 = vmatpush.bf16.msra.mxu0 %v1615
        %1702 = vmatpush.bf16.msra.mxu0 %v1583
        %1703 = vmatmul.bf16.gmra.mxu0 %v1591
        %v1704 = vpop.f32.mrf.mxu0
        %v1705 = vadd.f32 0.0, %v1704
        %v1706 = vpop.f32.mrf.mxu0
        %v1707 = vadd.f32 0.0, %v1706
        %1708 = vmatmul.bf16.gmra.mxu0 %v1594
        %v1709 = vpop.f32.mrf.mxu0
        %v1710 = vadd.f32 0.0, %v1709
        %v1711 = vpop.f32.mrf.mxu0
        %v1712 = vadd.f32 0.0, %v1711
        %1713 = vmatmul.bf16.gmra.mxu0 %v1597
        %v1714 = vpop.f32.mrf.mxu0
        %v1715 = vadd.f32 0.0, %v1714
        %v1716 = vpop.f32.mrf.mxu0
        %v1717 = vadd.f32 0.0, %v1716
        %1718 = vmatmul.bf16.gmra.mxu0 %v1600
        %v1719 = vpop.f32.mrf.mxu0
        %v1720 = vadd.f32 0.0, %v1719
        %v1721 = vpop.f32.mrf.mxu0
        %v1722 = vadd.f32 0.0, %v1721
        %1723 = vmatmul.bf16.gmra.mxu0 %v1603
        %v1724 = vpop.f32.mrf.mxu0
        %v1725 = vadd.f32 0.0, %v1724
        %v1726 = vpop.f32.mrf.mxu0
        %v1727 = vadd.f32 0.0, %v1726
        %1728 = vmatmul.bf16.gmra.mxu0 %v1606
        %v1729 = vpop.f32.mrf.mxu0
        %v1730 = vadd.f32 0.0, %v1729
        %v1731 = vpop.f32.mrf.mxu0
        %v1732 = vadd.f32 0.0, %v1731
        %1733 = vdwg.mxu0
        %v1734 = vadd.f32 %v1473, %v1627
        %v1735 = vadd.f32 %v1474, %v1666
        %v1736 = vadd.f32 %v1475, %v1705
        %v1737 = vadd.f32 %v1476, %v1629
        %v1738 = vadd.f32 %v1477, %v1668
        %v1739 = vadd.f32 %v1478, %v1707
        %v1740 = vadd.f32 %v1479, %v1632
        %v1741 = vadd.f32 %v1480, %v1671
        %v1742 = vadd.f32 %v1481, %v1710
        %v1743 = vadd.f32 %v1482, %v1634
        %v1744 = vadd.f32 %v1483, %v1673
        %v1745 = vadd.f32 %v1484, %v1712
        %v1746 = vadd.f32 %v1485, %v1637
        %v1747 = vadd.f32 %v1486, %v1676
        %v1748 = vadd.f32 %v1487, %v1715
        %v1749 = vadd.f32 %v1488, %v1639
        %v1750 = vadd.f32 %v1489, %v1678
        %v1751 = vadd.f32 %v1490, %v1717
        %v1752 = vadd.f32 %v1491, %v1642
        %v1753 = vadd.f32 %v1492, %v1681
        %v1754 = vadd.f32 %v1493, %v1720
        %v1755 = vadd.f32 %v1494, %v1644
        %v1756 = vadd.f32 %v1495, %v1683
        %v1757 = vadd.f32 %v1496, %v1722
        %v1758 = vadd.f32 %v1497, %v1647
        %v1759 = vadd.f32 %v1498, %v1686
        %v1760 = vadd.f32 %v1499, %v1725
        %v1761 = vadd.f32 %v1500, %v1649
        %v1762 = vadd.f32 %v1501, %v1688
        %v1763 = vadd.f32 %v1502, %v1727
        %v1764 = vadd.f32 %v1503, %v1652
        %v1765 = vadd.f32 %v1504, %v1691
        %v1766 = vadd.f32 %v1505, %v1730
        %v1767 = vadd.f32 %v1506, %v1654
        %v1768 = vadd.f32 %v1507, %v1693
        %v1769 = vadd.f32 %v1508, %v1732
        %1794 = vrot.lane.b32.xlu0 %v1735, 64
        %v1795 = vpop.permute.xlu0 %1794
        %1796 = vrot.lane.b32.xlu0 %v1736, 64
        %v1797 = vpop.permute.xlu0 %1796
        %1798 = vrot.lane.b32.xlu0 %v1738, 64
        %v1799 = vpop.permute.xlu0 %1798
        %1800 = vrot.lane.b32.xlu0 %v1739, 64
        %v1801 = vpop.permute.xlu0 %1800
        %1802 = vrot.lane.b32.xlu0 %v1741, 64
        %v1803 = vpop.permute.xlu0 %1802
        %1804 = vrot.lane.b32.xlu0 %v1742, 64
        %v1805 = vpop.permute.xlu0 %1804
        %1806 = vrot.lane.b32.xlu0 %v1744, 64
        %v1807 = vpop.permute.xlu0 %1806
        %1808 = vrot.lane.b32.xlu0 %v1745, 64
        %v1809 = vpop.permute.xlu0 %1808
        %1810 = vrot.lane.b32.xlu0 %v1747, 64
        %v1811 = vpop.permute.xlu0 %1810
        %1812 = vrot.lane.b32.xlu0 %v1748, 64
        %v1813 = vpop.permute.xlu0 %1812
        %1814 = vrot.lane.b32.xlu0 %v1750, 64
        %v1815 = vpop.permute.xlu0 %1814
        %1816 = vrot.lane.b32.xlu0 %v1751, 64
        %v1817 = vpop.permute.xlu0 %1816
        %1818 = vrot.lane.b32.xlu0 %v1753, 64
        %v1819 = vpop.permute.xlu0 %1818
        %1820 = vrot.lane.b32.xlu0 %v1754, 64
        %v1821 = vpop.permute.xlu0 %1820
        %1822 = vrot.lane.b32.xlu0 %v1756, 64
        %v1823 = vpop.permute.xlu0 %1822
        %1824 = vrot.lane.b32.xlu0 %v1757, 64
        %v1825 = vpop.permute.xlu0 %1824
        %1826 = vrot.lane.b32.xlu0 %v1759, 64
        %v1827 = vpop.permute.xlu0 %1826
        %1828 = vrot.lane.b32.xlu0 %v1760, 64
        %v1829 = vpop.permute.xlu0 %1828
        %1830 = vrot.lane.b32.xlu0 %v1762, 64
        %v1831 = vpop.permute.xlu0 %1830
        %1832 = vrot.lane.b32.xlu0 %v1763, 64
        %v1833 = vpop.permute.xlu0 %1832
        %1834 = vrot.lane.b32.xlu0 %v1765, 64
        %v1835 = vpop.permute.xlu0 %1834
        %1836 = vrot.lane.b32.xlu0 %v1766, 64
        %v1837 = vpop.permute.xlu0 %1836
        %1838 = vrot.lane.b32.xlu0 %v1768, 64
        %v1839 = vpop.permute.xlu0 %1838
        %1840 = vrot.lane.b32.xlu0 %v1769, 64
        %v1841 = vpop.permute.xlu0 %1840
        %vm1842 = vcmask 523264
        %v1843 = vsel %vm1842, %v1795, %v1797
        %v1844 = vsel %vm1842, %v1799, %v1801
        %v1845 = vsel %vm1842, %v1803, %v1805
        %v1846 = vsel %vm1842, %v1807, %v1809
        %v1847 = vsel %vm1842, %v1811, %v1813
        %v1848 = vsel %vm1842, %v1815, %v1817
        %v1849 = vsel %vm1842, %v1819, %v1821
        %v1850 = vsel %vm1842, %v1823, %v1825
        %v1851 = vsel %vm1842, %v1827, %v1829
        %v1852 = vsel %vm1842, %v1831, %v1833
        %v1853 = vsel %vm1842, %v1835, %v1837
        %v1854 = vsel %vm1842, %v1839, %v1841
        %v1879 = vmax.f32 %v1734, %v1843
        %v1880 = vmax.f32 %v1735, %v1797
        %v1881 = vmax.f32 %v1737, %v1844
        %v1882 = vmax.f32 %v1738, %v1801
        %v1883 = vmax.f32 %v1740, %v1845
        %v1884 = vmax.f32 %v1741, %v1805
        %v1885 = vmax.f32 %v1743, %v1846
        %v1886 = vmax.f32 %v1744, %v1809
        %v1887 = vmax.f32 %v1746, %v1847
        %v1888 = vmax.f32 %v1747, %v1813
        %v1889 = vmax.f32 %v1749, %v1848
        %v1890 = vmax.f32 %v1750, %v1817
        %v1891 = vmax.f32 %v1752, %v1849
        %v1892 = vmax.f32 %v1753, %v1821
        %v1893 = vmax.f32 %v1755, %v1850
        %v1894 = vmax.f32 %v1756, %v1825
        %v1895 = vmax.f32 %v1758, %v1851
        %v1896 = vmax.f32 %v1759, %v1829
        %v1897 = vmax.f32 %v1761, %v1852
        %v1898 = vmax.f32 %v1762, %v1833
        %v1899 = vmax.f32 %v1764, %v1853
        %v1900 = vmax.f32 %v1765, %v1837
        %v1901 = vmax.f32 %v1767, %v1854
        %v1902 = vmax.f32 %v1768, %v1841
        %1903 = vmatpush.bf16.msra.mxu0 0
        %1904 = vmatpush.bf16.msra.mxu0 0
        %1905 = vmatpush.bf16.msra.mxu0 0
        %1906 = vmatpush.bf16.msra.mxu0 0
        %1907 = vmatpush.bf16.msra.mxu0 0
        %1908 = vmatpush.bf16.msra.mxu0 0
        %1909 = vmatpush.bf16.msra.mxu0 %v659
        %1910 = vmatpush.bf16.msra.mxu0 %v629
        %1911 = vmatmul.bf16.gmra.mxu0 %v1069
        %v1912 = vpop.f32.mrf.mxu0
        %v1913 = vadd.f32 0.0, %v1912
        %v1914 = vpop.f32.mrf.mxu0
        %v1915 = vadd.f32 0.0, %v1914
        %1916 = vmatmul.bf16.gmra.mxu0 %v1072
        %v1917 = vpop.f32.mrf.mxu0
        %v1918 = vadd.f32 0.0, %v1917
        %v1919 = vpop.f32.mrf.mxu0
        %v1920 = vadd.f32 0.0, %v1919
        %1921 = vmatmul.bf16.gmra.mxu0 %v1075
        %v1922 = vpop.f32.mrf.mxu0
        %v1923 = vadd.f32 0.0, %v1922
        %v1924 = vpop.f32.mrf.mxu0
        %v1925 = vadd.f32 0.0, %v1924
        %1926 = vmatmul.bf16.gmra.mxu0 %v1078
        %v1927 = vpop.f32.mrf.mxu0
        %v1928 = vadd.f32 0.0, %v1927
        %v1929 = vpop.f32.mrf.mxu0
        %v1930 = vadd.f32 0.0, %v1929
        %1931 = vmatmul.bf16.gmra.mxu0 %v1081
        %v1932 = vpop.f32.mrf.mxu0
        %v1933 = vadd.f32 0.0, %v1932
        %v1934 = vpop.f32.mrf.mxu0
        %v1935 = vadd.f32 0.0, %v1934
        %1936 = vmatmul.bf16.gmra.mxu0 %v1084
        %v1937 = vpop.f32.mrf.mxu0
        %v1938 = vadd.f32 0.0, %v1937
        %v1939 = vpop.f32.mrf.mxu0
        %v1940 = vadd.f32 0.0, %v1939
        %1941 = vdwg.mxu0
        %1942 = vmatpush.bf16.msra.mxu0 0
        %1943 = vmatpush.bf16.msra.mxu0 0
        %1944 = vmatpush.bf16.msra.mxu0 0
        %1945 = vmatpush.bf16.msra.mxu0 0
        %1946 = vmatpush.bf16.msra.mxu0 0
        %1947 = vmatpush.bf16.msra.mxu0 0
        %1948 = vmatpush.bf16.msra.mxu0 %v662
        %1949 = vmatpush.bf16.msra.mxu0 %v630
        %1950 = vmatmul.bf16.gmra.mxu0 %v1069
        %v1951 = vpop.f32.mrf.mxu0
        %v1952 = vadd.f32 0.0, %v1951
        %v1953 = vpop.f32.mrf.mxu0
        %v1954 = vadd.f32 0.0, %v1953
        %1955 = vmatmul.bf16.gmra.mxu0 %v1072
        %v1956 = vpop.f32.mrf.mxu0
        %v1957 = vadd.f32 0.0, %v1956
        %v1958 = vpop.f32.mrf.mxu0
        %v1959 = vadd.f32 0.0, %v1958
        %1960 = vmatmul.bf16.gmra.mxu0 %v1075
        %v1961 = vpop.f32.mrf.mxu0
        %v1962 = vadd.f32 0.0, %v1961
        %v1963 = vpop.f32.mrf.mxu0
        %v1964 = vadd.f32 0.0, %v1963
        %1965 = vmatmul.bf16.gmra.mxu0 %v1078
        %v1966 = vpop.f32.mrf.mxu0
        %v1967 = vadd.f32 0.0, %v1966
        %v1968 = vpop.f32.mrf.mxu0
        %v1969 = vadd.f32 0.0, %v1968
        %1970 = vmatmul.bf16.gmra.mxu0 %v1081
        %v1971 = vpop.f32.mrf.mxu0
        %v1972 = vadd.f32 0.0, %v1971
        %v1973 = vpop.f32.mrf.mxu0
        %v1974 = vadd.f32 0.0, %v1973
        %1975 = vmatmul.bf16.gmra.mxu0 %v1084
        %v1976 = vpop.f32.mrf.mxu0
        %v1977 = vadd.f32 0.0, %v1976
        %v1978 = vpop.f32.mrf.mxu0
        %v1979 = vadd.f32 0.0, %v1978
        %1980 = vdwg.mxu0
        %1981 = vmatpush.bf16.msra.mxu0 0
        %1982 = vmatpush.bf16.msra.mxu0 0
        %1983 = vmatpush.bf16.msra.mxu0 0
        %1984 = vmatpush.bf16.msra.mxu0 0
        %1985 = vmatpush.bf16.msra.mxu0 0
        %1986 = vmatpush.bf16.msra.mxu0 0
        %1987 = vmatpush.bf16.msra.mxu0 %v665
        %1988 = vmatpush.bf16.msra.mxu0 %v631
        %1989 = vmatmul.bf16.gmra.mxu0 %v1069
        %v1990 = vpop.f32.mrf.mxu0
        %v1991 = vadd.f32 0.0, %v1990
        %v1992 = vpop.f32.mrf.mxu0
        %v1993 = vadd.f32 0.0, %v1992
        %1994 = vmatmul.bf16.gmra.mxu0 %v1072
        %v1995 = vpop.f32.mrf.mxu0
        %v1996 = vadd.f32 0.0, %v1995
        %v1997 = vpop.f32.mrf.mxu0
        %v1998 = vadd.f32 0.0, %v1997
        %1999 = vmatmul.bf16.gmra.mxu0 %v1075
        %v2000 = vpop.f32.mrf.mxu0
        %v2001 = vadd.f32 0.0, %v2000
        %v2002 = vpop.f32.mrf.mxu0
        %v2003 = vadd.f32 0.0, %v2002
        %2004 = vmatmul.bf16.gmra.mxu0 %v1078
        %v2005 = vpop.f32.mrf.mxu0
        %v2006 = vadd.f32 0.0, %v2005
        %v2007 = vpop.f32.mrf.mxu0
        %v2008 = vadd.f32 0.0, %v2007
        %2009 = vmatmul.bf16.gmra.mxu0 %v1081
        %v2010 = vpop.f32.mrf.mxu0
        %v2011 = vadd.f32 0.0, %v2010
        %v2012 = vpop.f32.mrf.mxu0
        %v2013 = vadd.f32 0.0, %v2012
        %2014 = vmatmul.bf16.gmra.mxu0 %v1084
        %v2015 = vpop.f32.mrf.mxu0
        %v2016 = vadd.f32 0.0, %v2015
        %v2017 = vpop.f32.mrf.mxu0
        %v2018 = vadd.f32 0.0, %v2017
        %2019 = vdwg.mxu0
        %2020 = vmatpush.bf16.msra.mxu0 0
        %2021 = vmatpush.bf16.msra.mxu0 0
        %2022 = vmatpush.bf16.msra.mxu0 0
        %2023 = vmatpush.bf16.msra.mxu0 0
        %2024 = vmatpush.bf16.msra.mxu0 0
        %2025 = vmatpush.bf16.msra.mxu0 0
        %2026 = vmatpush.bf16.msra.mxu0 %v862
        %2027 = vmatpush.bf16.msra.mxu0 %v834
        %2028 = vmatmul.bf16.gmra.mxu0 %v640
        %v2029 = vpop.f32.mrf.mxu0
        %v2030 = vadd.f32 %v1913, %v2029
        %v2031 = vpop.f32.mrf.mxu0
        %v2032 = vadd.f32 %v1915, %v2031
        %2033 = vmatmul.bf16.gmra.mxu0 %v643
        %v2034 = vpop.f32.mrf.mxu0
        %v2035 = vadd.f32 %v1918, %v2034
        %v2036 = vpop.f32.mrf.mxu0
        %v2037 = vadd.f32 %v1920, %v2036
        %2038 = vmatmul.bf16.gmra.mxu0 %v646
        %v2039 = vpop.f32.mrf.mxu0
        %v2040 = vadd.f32 %v1923, %v2039
        %v2041 = vpop.f32.mrf.mxu0
        %v2042 = vadd.f32 %v1925, %v2041
        %2043 = vmatmul.bf16.gmra.mxu0 %v649
        %v2044 = vpop.f32.mrf.mxu0
        %v2045 = vadd.f32 %v1928, %v2044
        %v2046 = vpop.f32.mrf.mxu0
        %v2047 = vadd.f32 %v1930, %v2046
        %2048 = vmatmul.bf16.gmra.mxu0 %v652
        %v2049 = vpop.f32.mrf.mxu0
        %v2050 = vadd.f32 %v1933, %v2049
        %v2051 = vpop.f32.mrf.mxu0
        %v2052 = vadd.f32 %v1935, %v2051
        %2053 = vmatmul.bf16.gmra.mxu0 %v655
        %v2054 = vpop.f32.mrf.mxu0
        %v2055 = vadd.f32 %v1938, %v2054
        %v2056 = vpop.f32.mrf.mxu0
        %v2057 = vadd.f32 %v1940, %v2056
        %2058 = vdwg.mxu0
        %2059 = vmatpush.bf16.msra.mxu0 0
        %2060 = vmatpush.bf16.msra.mxu0 0
        %2061 = vmatpush.bf16.msra.mxu0 0
        %2062 = vmatpush.bf16.msra.mxu0 0
        %2063 = vmatpush.bf16.msra.mxu0 0
        %2064 = vmatpush.bf16.msra.mxu0 0
        %2065 = vmatpush.bf16.msra.mxu0 %v865
        %2066 = vmatpush.bf16.msra.mxu0 %v835
        %2067 = vmatmul.bf16.gmra.mxu0 %v640
        %v2068 = vpop.f32.mrf.mxu0
        %v2069 = vadd.f32 %v1952, %v2068
        %v2070 = vpop.f32.mrf.mxu0
        %v2071 = vadd.f32 %v1954, %v2070
        %2072 = vmatmul.bf16.gmra.mxu0 %v643
        %v2073 = vpop.f32.mrf.mxu0
        %v2074 = vadd.f32 %v1957, %v2073
        %v2075 = vpop.f32.mrf.mxu0
        %v2076 = vadd.f32 %v1959, %v2075
        %2077 = vmatmul.bf16.gmra.mxu0 %v646
        %v2078 = vpop.f32.mrf.mxu0
        %v2079 = vadd.f32 %v1962, %v2078
        %v2080 = vpop.f32.mrf.mxu0
        %v2081 = vadd.f32 %v1964, %v2080
        %2082 = vmatmul.bf16.gmra.mxu0 %v649
        %v2083 = vpop.f32.mrf.mxu0
        %v2084 = vadd.f32 %v1967, %v2083
        %v2085 = vpop.f32.mrf.mxu0
        %v2086 = vadd.f32 %v1969, %v2085
        %2087 = vmatmul.bf16.gmra.mxu0 %v652
        %v2088 = vpop.f32.mrf.mxu0
        %v2089 = vadd.f32 %v1972, %v2088
        %v2090 = vpop.f32.mrf.mxu0
        %v2091 = vadd.f32 %v1974, %v2090
        %2092 = vmatmul.bf16.gmra.mxu0 %v655
        %v2093 = vpop.f32.mrf.mxu0
        %v2094 = vadd.f32 %v1977, %v2093
        %v2095 = vpop.f32.mrf.mxu0
        %v2096 = vadd.f32 %v1979, %v2095
        %2097 = vdwg.mxu0
        %2098 = vmatpush.bf16.msra.mxu0 0
        %2099 = vmatpush.bf16.msra.mxu0 0
        %2100 = vmatpush.bf16.msra.mxu0 0
        %2101 = vmatpush.bf16.msra.mxu0 0
        %2102 = vmatpush.bf16.msra.mxu0 0
        %2103 = vmatpush.bf16.msra.mxu0 0
        %2104 = vmatpush.bf16.msra.mxu0 %v868
        %2105 = vmatpush.bf16.msra.mxu0 %v836
        %2106 = vmatmul.bf16.gmra.mxu0 %v640
        %v2107 = vpop.f32.mrf.mxu0
        %v2108 = vadd.f32 %v1991, %v2107
        %v2109 = vpop.f32.mrf.mxu0
        %v2110 = vadd.f32 %v1993, %v2109
        %2111 = vmatmul.bf16.gmra.mxu0 %v643
        %v2112 = vpop.f32.mrf.mxu0
        %v2113 = vadd.f32 %v1996, %v2112
        %v2114 = vpop.f32.mrf.mxu0
        %v2115 = vadd.f32 %v1998, %v2114
        %2116 = vmatmul.bf16.gmra.mxu0 %v646
        %v2117 = vpop.f32.mrf.mxu0
        %v2118 = vadd.f32 %v2001, %v2117
        %v2119 = vpop.f32.mrf.mxu0
        %v2120 = vadd.f32 %v2003, %v2119
        %2121 = vmatmul.bf16.gmra.mxu0 %v649
        %v2122 = vpop.f32.mrf.mxu0
        %v2123 = vadd.f32 %v2006, %v2122
        %v2124 = vpop.f32.mrf.mxu0
        %v2125 = vadd.f32 %v2008, %v2124
        %2126 = vmatmul.bf16.gmra.mxu0 %v652
        %v2127 = vpop.f32.mrf.mxu0
        %v2128 = vadd.f32 %v2011, %v2127
        %v2129 = vpop.f32.mrf.mxu0
        %v2130 = vadd.f32 %v2013, %v2129
        %2131 = vmatmul.bf16.gmra.mxu0 %v655
        %v2132 = vpop.f32.mrf.mxu0
        %v2133 = vadd.f32 %v2016, %v2132
        %v2134 = vpop.f32.mrf.mxu0
        %v2135 = vadd.f32 %v2018, %v2134
        %2136 = vdwg.mxu0
        %2137 = vmatpush.bf16.msra.mxu0 0
        %2138 = vmatpush.bf16.msra.mxu0 0
        %2139 = vmatpush.bf16.msra.mxu0 0
        %2140 = vmatpush.bf16.msra.mxu0 0
        %2141 = vmatpush.bf16.msra.mxu0 0
        %2142 = vmatpush.bf16.msra.mxu0 0
        %2143 = vmatpush.bf16.msra.mxu0 %v1087
        %2144 = vmatpush.bf16.msra.mxu0 %v1059
        %2145 = vmatmul.bf16.gmra.mxu0 %v1330
        %v2146 = vpop.f32.mrf.mxu0
        %v2147 = vadd.f32 0.0, %v2146
        %v2148 = vpop.f32.mrf.mxu0
        %v2149 = vadd.f32 0.0, %v2148
        %2150 = vmatmul.bf16.gmra.mxu0 %v1333
        %v2151 = vpop.f32.mrf.mxu0
        %v2152 = vadd.f32 0.0, %v2151
        %v2153 = vpop.f32.mrf.mxu0
        %v2154 = vadd.f32 0.0, %v2153
        %2155 = vmatmul.bf16.gmra.mxu0 %v1336
        %v2156 = vpop.f32.mrf.mxu0
        %v2157 = vadd.f32 0.0, %v2156
        %v2158 = vpop.f32.mrf.mxu0
        %v2159 = vadd.f32 0.0, %v2158
        %2160 = vmatmul.bf16.gmra.mxu0 %v1339
        %v2161 = vpop.f32.mrf.mxu0
        %v2162 = vadd.f32 0.0, %v2161
        %v2163 = vpop.f32.mrf.mxu0
        %v2164 = vadd.f32 0.0, %v2163
        %2165 = vmatmul.bf16.gmra.mxu0 %v1342
        %v2166 = vpop.f32.mrf.mxu0
        %v2167 = vadd.f32 0.0, %v2166
        %v2168 = vpop.f32.mrf.mxu0
        %v2169 = vadd.f32 0.0, %v2168
        %2170 = vmatmul.bf16.gmra.mxu0 %v1345
        %v2171 = vpop.f32.mrf.mxu0
        %v2172 = vadd.f32 0.0, %v2171
        %v2173 = vpop.f32.mrf.mxu0
        %v2174 = vadd.f32 0.0, %v2173
        %2175 = vdwg.mxu0
        %2176 = vmatpush.bf16.msra.mxu0 0
        %2177 = vmatpush.bf16.msra.mxu0 0
        %2178 = vmatpush.bf16.msra.mxu0 0
        %2179 = vmatpush.bf16.msra.mxu0 0
        %2180 = vmatpush.bf16.msra.mxu0 0
        %2181 = vmatpush.bf16.msra.mxu0 0
        %2182 = vmatpush.bf16.msra.mxu0 %v1090
        %2183 = vmatpush.bf16.msra.mxu0 %v1060
        %2184 = vmatmul.bf16.gmra.mxu0 %v1330
        %v2185 = vpop.f32.mrf.mxu0
        %v2186 = vadd.f32 0.0, %v2185
        %v2187 = vpop.f32.mrf.mxu0
        %v2188 = vadd.f32 0.0, %v2187
        %2189 = vmatmul.bf16.gmra.mxu0 %v1333
        %v2190 = vpop.f32.mrf.mxu0
        %v2191 = vadd.f32 0.0, %v2190
        %v2192 = vpop.f32.mrf.mxu0
        %v2193 = vadd.f32 0.0, %v2192
        %2194 = vmatmul.bf16.gmra.mxu0 %v1336
        %v2195 = vpop.f32.mrf.mxu0
        %v2196 = vadd.f32 0.0, %v2195
        %v2197 = vpop.f32.mrf.mxu0
        %v2198 = vadd.f32 0.0, %v2197
        %2199 = vmatmul.bf16.gmra.mxu0 %v1339
        %v2200 = vpop.f32.mrf.mxu0
        %v2201 = vadd.f32 0.0, %v2200
        %v2202 = vpop.f32.mrf.mxu0
        %v2203 = vadd.f32 0.0, %v2202
        %2204 = vmatmul.bf16.gmra.mxu0 %v1342
        %v2205 = vpop.f32.mrf.mxu0
        %v2206 = vadd.f32 0.0, %v2205
        %v2207 = vpop.f32.mrf.mxu0
        %v2208 = vadd.f32 0.0, %v2207
        %2209 = vmatmul.bf16.gmra.mxu0 %v1345
        %v2210 = vpop.f32.mrf.mxu0
        %v2211 = vadd.f32 0.0, %v2210
        %v2212 = vpop.f32.mrf.mxu0
        %v2213 = vadd.f32 0.0, %v2212
        %2214 = vdwg.mxu0
        %2215 = vmatpush.bf16.msra.mxu0 0
        %2216 = vmatpush.bf16.msra.mxu0 0
        %2217 = vmatpush.bf16.msra.mxu0 0
        %2218 = vmatpush.bf16.msra.mxu0 0
        %2219 = vmatpush.bf16.msra.mxu0 0
        %2220 = vmatpush.bf16.msra.mxu0 0
        %2221 = vmatpush.bf16.msra.mxu0 %v1093
        %2222 = vmatpush.bf16.msra.mxu0 %v1061
        %2223 = vmatmul.bf16.gmra.mxu0 %v1330
        %v2224 = vpop.f32.mrf.mxu0
        %v2225 = vadd.f32 0.0, %v2224
        %v2226 = vpop.f32.mrf.mxu0
        %v2227 = vadd.f32 0.0, %v2226
        %2228 = vmatmul.bf16.gmra.mxu0 %v1333
        %v2229 = vpop.f32.mrf.mxu0
        %v2230 = vadd.f32 0.0, %v2229
        %v2231 = vpop.f32.mrf.mxu0
        %v2232 = vadd.f32 0.0, %v2231
        %2233 = vmatmul.bf16.gmra.mxu0 %v1336
        %v2234 = vpop.f32.mrf.mxu0
        %v2235 = vadd.f32 0.0, %v2234
        %v2236 = vpop.f32.mrf.mxu0
        %v2237 = vadd.f32 0.0, %v2236
        %2238 = vmatmul.bf16.gmra.mxu0 %v1339
        %v2239 = vpop.f32.mrf.mxu0
        %v2240 = vadd.f32 0.0, %v2239
        %v2241 = vpop.f32.mrf.mxu0
        %v2242 = vadd.f32 0.0, %v2241
        %2243 = vmatmul.bf16.gmra.mxu0 %v1342
        %v2244 = vpop.f32.mrf.mxu0
        %v2245 = vadd.f32 0.0, %v2244
        %v2246 = vpop.f32.mrf.mxu0
        %v2247 = vadd.f32 0.0, %v2246
        %2248 = vmatmul.bf16.gmra.mxu0 %v1345
        %v2249 = vpop.f32.mrf.mxu0
        %v2250 = vadd.f32 0.0, %v2249
        %v2251 = vpop.f32.mrf.mxu0
        %v2252 = vadd.f32 0.0, %v2251
        %2253 = vdwg.mxu0
        %v2254 = vadd.f32 %v2030, %v2147
        %v2255 = vadd.f32 %v2069, %v2186
        %v2256 = vadd.f32 %v2108, %v2225
        %v2257 = vadd.f32 %v2032, %v2149
        %v2258 = vadd.f32 %v2071, %v2188
        %v2259 = vadd.f32 %v2110, %v2227
        %v2260 = vadd.f32 %v2035, %v2152
        %v2261 = vadd.f32 %v2074, %v2191
        %v2262 = vadd.f32 %v2113, %v2230
        %v2263 = vadd.f32 %v2037, %v2154
        %v2264 = vadd.f32 %v2076, %v2193
        %v2265 = vadd.f32 %v2115, %v2232
        %v2266 = vadd.f32 %v2040, %v2157
        %v2267 = vadd.f32 %v2079, %v2196
        %v2268 = vadd.f32 %v2118, %v2235
        %v2269 = vadd.f32 %v2042, %v2159
        %v2270 = vadd.f32 %v2081, %v2198
        %v2271 = vadd.f32 %v2120, %v2237
        %v2272 = vadd.f32 %v2045, %v2162
        %v2273 = vadd.f32 %v2084, %v2201
        %v2274 = vadd.f32 %v2123, %v2240
        %v2275 = vadd.f32 %v2047, %v2164
        %v2276 = vadd.f32 %v2086, %v2203
        %v2277 = vadd.f32 %v2125, %v2242
        %v2278 = vadd.f32 %v2050, %v2167
        %v2279 = vadd.f32 %v2089, %v2206
        %v2280 = vadd.f32 %v2128, %v2245
        %v2281 = vadd.f32 %v2052, %v2169
        %v2282 = vadd.f32 %v2091, %v2208
        %v2283 = vadd.f32 %v2130, %v2247
        %v2284 = vadd.f32 %v2055, %v2172
        %v2285 = vadd.f32 %v2094, %v2211
        %v2286 = vadd.f32 %v2133, %v2250
        %v2287 = vadd.f32 %v2057, %v2174
        %v2288 = vadd.f32 %v2096, %v2213
        %v2289 = vadd.f32 %v2135, %v2252
        %2290 = vmatpush.bf16.msra.mxu0 0
        %2291 = vmatpush.bf16.msra.mxu0 0
        %2292 = vmatpush.bf16.msra.mxu0 0
        %2293 = vmatpush.bf16.msra.mxu0 0
        %2294 = vmatpush.bf16.msra.mxu0 0
        %2295 = vmatpush.bf16.msra.mxu0 0
        %2296 = vmatpush.bf16.msra.mxu0 %v1348
        %2297 = vmatpush.bf16.msra.mxu0 %v1320
        %2298 = vmatmul.bf16.gmra.mxu0 %v1591
        %v2299 = vpop.f32.mrf.mxu0
        %v2300 = vadd.f32 0.0, %v2299
        %v2301 = vpop.f32.mrf.mxu0
        %v2302 = vadd.f32 0.0, %v2301
        %2303 = vmatmul.bf16.gmra.mxu0 %v1594
        %v2304 = vpop.f32.mrf.mxu0
        %v2305 = vadd.f32 0.0, %v2304
        %v2306 = vpop.f32.mrf.mxu0
        %v2307 = vadd.f32 0.0, %v2306
        %2308 = vmatmul.bf16.gmra.mxu0 %v1597
        %v2309 = vpop.f32.mrf.mxu0
        %v2310 = vadd.f32 0.0, %v2309
        %v2311 = vpop.f32.mrf.mxu0
        %v2312 = vadd.f32 0.0, %v2311
        %2313 = vmatmul.bf16.gmra.mxu0 %v1600
        %v2314 = vpop.f32.mrf.mxu0
        %v2315 = vadd.f32 0.0, %v2314
        %v2316 = vpop.f32.mrf.mxu0
        %v2317 = vadd.f32 0.0, %v2316
        %2318 = vmatmul.bf16.gmra.mxu0 %v1603
        %v2319 = vpop.f32.mrf.mxu0
        %v2320 = vadd.f32 0.0, %v2319
        %v2321 = vpop.f32.mrf.mxu0
        %v2322 = vadd.f32 0.0, %v2321
        %2323 = vmatmul.bf16.gmra.mxu0 %v1606
        %v2324 = vpop.f32.mrf.mxu0
        %v2325 = vadd.f32 0.0, %v2324
        %v2326 = vpop.f32.mrf.mxu0
        %v2327 = vadd.f32 0.0, %v2326
        %2328 = vdwg.mxu0
        %2329 = vmatpush.bf16.msra.mxu0 0
        %2330 = vmatpush.bf16.msra.mxu0 0
        %2331 = vmatpush.bf16.msra.mxu0 0
        %2332 = vmatpush.bf16.msra.mxu0 0
        %2333 = vmatpush.bf16.msra.mxu0 0
        %2334 = vmatpush.bf16.msra.mxu0 0
        %2335 = vmatpush.bf16.msra.mxu0 %v1351
        %2336 = vmatpush.bf16.msra.mxu0 %v1321
        %2337 = vmatmul.bf16.gmra.mxu0 %v1591
        %v2338 = vpop.f32.mrf.mxu0
        %v2339 = vadd.f32 0.0, %v2338
        %v2340 = vpop.f32.mrf.mxu0
        %v2341 = vadd.f32 0.0, %v2340
        %2342 = vmatmul.bf16.gmra.mxu0 %v1594
        %v2343 = vpop.f32.mrf.mxu0
        %v2344 = vadd.f32 0.0, %v2343
        %v2345 = vpop.f32.mrf.mxu0
        %v2346 = vadd.f32 0.0, %v2345
        %2347 = vmatmul.bf16.gmra.mxu0 %v1597
        %v2348 = vpop.f32.mrf.mxu0
        %v2349 = vadd.f32 0.0, %v2348
        %v2350 = vpop.f32.mrf.mxu0
        %v2351 = vadd.f32 0.0, %v2350
        %2352 = vmatmul.bf16.gmra.mxu0 %v1600
        %v2353 = vpop.f32.mrf.mxu0
        %v2354 = vadd.f32 0.0, %v2353
        %v2355 = vpop.f32.mrf.mxu0
        %v2356 = vadd.f32 0.0, %v2355
        %2357 = vmatmul.bf16.gmra.mxu0 %v1603
        %v2358 = vpop.f32.mrf.mxu0
        %v2359 = vadd.f32 0.0, %v2358
        %v2360 = vpop.f32.mrf.mxu0
        %v2361 = vadd.f32 0.0, %v2360
        %2362 = vmatmul.bf16.gmra.mxu0 %v1606
        %v2363 = vpop.f32.mrf.mxu0
        %v2364 = vadd.f32 0.0, %v2363
        %v2365 = vpop.f32.mrf.mxu0
        %v2366 = vadd.f32 0.0, %v2365
        %2367 = vdwg.mxu0
        %2368 = vmatpush.bf16.msra.mxu0 0
        %2369 = vmatpush.bf16.msra.mxu0 0
        %2370 = vmatpush.bf16.msra.mxu0 0
        %2371 = vmatpush.bf16.msra.mxu0 0
        %2372 = vmatpush.bf16.msra.mxu0 0
        %2373 = vmatpush.bf16.msra.mxu0 0
        %2374 = vmatpush.bf16.msra.mxu0 %v1354
        %2375 = vmatpush.bf16.msra.mxu0 %v1322
        %2376 = vmatmul.bf16.gmra.mxu0 %v1591
        %v2377 = vpop.f32.mrf.mxu0
        %v2378 = vadd.f32 0.0, %v2377
        %v2379 = vpop.f32.mrf.mxu0
        %v2380 = vadd.f32 0.0, %v2379
        %2381 = vmatmul.bf16.gmra.mxu0 %v1594
        %v2382 = vpop.f32.mrf.mxu0
        %v2383 = vadd.f32 0.0, %v2382
        %v2384 = vpop.f32.mrf.mxu0
        %v2385 = vadd.f32 0.0, %v2384
        %2386 = vmatmul.bf16.gmra.mxu0 %v1597
        %v2387 = vpop.f32.mrf.mxu0
        %v2388 = vadd.f32 0.0, %v2387
        %v2389 = vpop.f32.mrf.mxu0
        %v2390 = vadd.f32 0.0, %v2389
        %2391 = vmatmul.bf16.gmra.mxu0 %v1600
        %v2392 = vpop.f32.mrf.mxu0
        %v2393 = vadd.f32 0.0, %v2392
        %v2394 = vpop.f32.mrf.mxu0
        %v2395 = vadd.f32 0.0, %v2394
        %2396 = vmatmul.bf16.gmra.mxu0 %v1603
        %v2397 = vpop.f32.mrf.mxu0
        %v2398 = vadd.f32 0.0, %v2397
        %v2399 = vpop.f32.mrf.mxu0
        %v2400 = vadd.f32 0.0, %v2399
        %2401 = vmatmul.bf16.gmra.mxu0 %v1606
        %v2402 = vpop.f32.mrf.mxu0
        %v2403 = vadd.f32 0.0, %v2402
        %v2404 = vpop.f32.mrf.mxu0
        %v2405 = vadd.f32 0.0, %v2404
        %2406 = vdwg.mxu0
        %v2407 = vadd.f32 %v2254, %v2300
        %v2408 = vadd.f32 %v2255, %v2339
        %v2409 = vadd.f32 %v2256, %v2378
        %v2410 = vadd.f32 %v2257, %v2302
        %v2411 = vadd.f32 %v2258, %v2341
        %v2412 = vadd.f32 %v2259, %v2380
        %v2413 = vadd.f32 %v2260, %v2305
        %v2414 = vadd.f32 %v2261, %v2344
        %v2415 = vadd.f32 %v2262, %v2383
        %v2416 = vadd.f32 %v2263, %v2307
        %v2417 = vadd.f32 %v2264, %v2346
        %v2418 = vadd.f32 %v2265, %v2385
        %v2419 = vadd.f32 %v2266, %v2310
        %v2420 = vadd.f32 %v2267, %v2349
        %v2421 = vadd.f32 %v2268, %v2388
        %v2422 = vadd.f32 %v2269, %v2312
        %v2423 = vadd.f32 %v2270, %v2351
        %v2424 = vadd.f32 %v2271, %v2390
        %v2425 = vadd.f32 %v2272, %v2315
        %v2426 = vadd.f32 %v2273, %v2354
        %v2427 = vadd.f32 %v2274, %v2393
        %v2428 = vadd.f32 %v2275, %v2317
        %v2429 = vadd.f32 %v2276, %v2356
        %v2430 = vadd.f32 %v2277, %v2395
        %v2431 = vadd.f32 %v2278, %v2320
        %v2432 = vadd.f32 %v2279, %v2359
        %v2433 = vadd.f32 %v2280, %v2398
        %v2434 = vadd.f32 %v2281, %v2322
        %v2435 = vadd.f32 %v2282, %v2361
        %v2436 = vadd.f32 %v2283, %v2400
        %v2437 = vadd.f32 %v2284, %v2325
        %v2438 = vadd.f32 %v2285, %v2364
        %v2439 = vadd.f32 %v2286, %v2403
        %v2440 = vadd.f32 %v2287, %v2327
        %v2441 = vadd.f32 %v2288, %v2366
        %v2442 = vadd.f32 %v2289, %v2405
        %s2443 = scalar_lea.vmem %s496, 20 [#allocation3]
        %v2444 = vld [vmem:[%s2443] sm:$0xf]
        %v2445 = vld [vmem:[%s2443 + $0x8] sm:$0xf]
        %v2446 = vld [vmem:[%s2443 + $0x10] sm:$0xf]
        %v2447 = vld [vmem:[%s2443 + $0x18] sm:$0xf]
        %v2448 = vld [vmem:[%s2443 + $0x20] sm:$0xf]
        %v2449 = vld [vmem:[%s2443 + $0x28] sm:$0xf]
        %v2450 = vld [vmem:[%s2443 + $0x30] sm:$0xf]
        %v2451 = vld [vmem:[%s2443 + $0x38] sm:$0xf]
        %v2452 = vld [vmem:[%s2443 + $0x40] sm:$0xf]
        %v2453 = vld [vmem:[%s2443 + $0x48] sm:$0xf]
        %v2454 = vld [vmem:[%s2443 + $0x50] sm:$0xf]
        %v2455 = vld [vmem:[%s2443 + $0x58] sm:$0xf]
        %v2468 = vunpack.c.l.b16 %v2444
        %v2469 = vunpack.c.l.b16 %v2445
        %v2470 = vunpack.c.l.b16 %v2446
        %v2471 = vunpack.c.l.b16 %v2447
        %v2472 = vunpack.c.l.b16 %v2448
        %v2473 = vunpack.c.l.b16 %v2449
        %v2474 = vunpack.c.l.b16 %v2450
        %v2475 = vunpack.c.l.b16 %v2451
        %v2476 = vunpack.c.l.b16 %v2452
        %v2477 = vunpack.c.l.b16 %v2453
        %v2478 = vunpack.c.l.b16 %v2454
        %v2479 = vunpack.c.l.b16 %v2455
        %v2480 = vpack.c.b16 %v2469, %v2468
        %v2481 = vpack.c.b16 %v2471, %v2470
        %v2482 = vpack.c.b16 %v2473, %v2472
        %v2483 = vpack.c.b16 %v2475, %v2474
        %v2484 = vpack.c.b16 %v2477, %v2476
        %v2485 = vpack.c.b16 %v2479, %v2478
        %v2487 = vsel %vm638, %v2480, 0
        %v2490 = vsel %vm638, %v2481, 0
        %v2493 = vsel %vm638, %v2482, 0
        %v2496 = vsel %vm638, %v2483, 0
        %v2499 = vsel %vm638, %v2484, 0
        %v2502 = vsel %vm638, %v2485, 0
        %2504 = vmatpush.bf16.msra.mxu0 0
        %2505 = vmatpush.bf16.msra.mxu0 0
        %2506 = vmatpush.bf16.msra.mxu0 0
        %2507 = vmatpush.bf16.msra.mxu0 0
        %2508 = vmatpush.bf16.msra.mxu0 0
        %2509 = vmatpush.bf16.msra.mxu0 0
        %2510 = vmatpush.bf16.msra.mxu0 %v1609
        %2511 = vmatpush.bf16.msra.mxu0 %v1581
        %2512 = vmatmul.bf16.gmra.mxu0 %v2487
        %v2513 = vpop.f32.mrf.mxu0
        %v2514 = vadd.f32 0.0, %v2513
        %v2515 = vpop.f32.mrf.mxu0
        %v2516 = vadd.f32 0.0, %v2515
        %2517 = vmatmul.bf16.gmra.mxu0 %v2490
        %v2518 = vpop.f32.mrf.mxu0
        %v2519 = vadd.f32 0.0, %v2518
        %v2520 = vpop.f32.mrf.mxu0
        %v2521 = vadd.f32 0.0, %v2520
        %2522 = vmatmul.bf16.gmra.mxu0 %v2493
        %v2523 = vpop.f32.mrf.mxu0
        %v2524 = vadd.f32 0.0, %v2523
        %v2525 = vpop.f32.mrf.mxu0
        %v2526 = vadd.f32 0.0, %v2525
        %2527 = vmatmul.bf16.gmra.mxu0 %v2496
        %v2528 = vpop.f32.mrf.mxu0
        %v2529 = vadd.f32 0.0, %v2528
        %v2530 = vpop.f32.mrf.mxu0
        %v2531 = vadd.f32 0.0, %v2530
        %2532 = vmatmul.bf16.gmra.mxu0 %v2499
        %v2533 = vpop.f32.mrf.mxu0
        %v2534 = vadd.f32 0.0, %v2533
        %v2535 = vpop.f32.mrf.mxu0
        %v2536 = vadd.f32 0.0, %v2535
        %2537 = vmatmul.bf16.gmra.mxu0 %v2502
        %v2538 = vpop.f32.mrf.mxu0
        %v2539 = vadd.f32 0.0, %v2538
        %v2540 = vpop.f32.mrf.mxu0
        %v2541 = vadd.f32 0.0, %v2540
        %2542 = vdwg.mxu0
        %2543 = vmatpush.bf16.msra.mxu0 0
        %2544 = vmatpush.bf16.msra.mxu0 0
        %2545 = vmatpush.bf16.msra.mxu0 0
        %2546 = vmatpush.bf16.msra.mxu0 0
        %2547 = vmatpush.bf16.msra.mxu0 0
        %2548 = vmatpush.bf16.msra.mxu0 0
        %2549 = vmatpush.bf16.msra.mxu0 %v1612
        %2550 = vmatpush.bf16.msra.mxu0 %v1582
        %2551 = vmatmul.bf16.gmra.mxu0 %v2487
        %v2552 = vpop.f32.mrf.mxu0
        %v2553 = vadd.f32 0.0, %v2552
        %v2554 = vpop.f32.mrf.mxu0
        %v2555 = vadd.f32 0.0, %v2554
        %2556 = vmatmul.bf16.gmra.mxu0 %v2490
        %v2557 = vpop.f32.mrf.mxu0
        %v2558 = vadd.f32 0.0, %v2557
        %v2559 = vpop.f32.mrf.mxu0
        %v2560 = vadd.f32 0.0, %v2559
        %2561 = vmatmul.bf16.gmra.mxu0 %v2493
        %v2562 = vpop.f32.mrf.mxu0
        %v2563 = vadd.f32 0.0, %v2562
        %v2564 = vpop.f32.mrf.mxu0
        %v2565 = vadd.f32 0.0, %v2564
        %2566 = vmatmul.bf16.gmra.mxu0 %v2496
        %v2567 = vpop.f32.mrf.mxu0
        %v2568 = vadd.f32 0.0, %v2567
        %v2569 = vpop.f32.mrf.mxu0
        %v2570 = vadd.f32 0.0, %v2569
        %2571 = vmatmul.bf16.gmra.mxu0 %v2499
        %v2572 = vpop.f32.mrf.mxu0
        %v2573 = vadd.f32 0.0, %v2572
        %v2574 = vpop.f32.mrf.mxu0
        %v2575 = vadd.f32 0.0, %v2574
        %2576 = vmatmul.bf16.gmra.mxu0 %v2502
        %v2577 = vpop.f32.mrf.mxu0
        %v2578 = vadd.f32 0.0, %v2577
        %v2579 = vpop.f32.mrf.mxu0
        %v2580 = vadd.f32 0.0, %v2579
        %2581 = vdwg.mxu0
        %2582 = vmatpush.bf16.msra.mxu0 0
        %2583 = vmatpush.bf16.msra.mxu0 0
        %2584 = vmatpush.bf16.msra.mxu0 0
        %2585 = vmatpush.bf16.msra.mxu0 0
        %2586 = vmatpush.bf16.msra.mxu0 0
        %2587 = vmatpush.bf16.msra.mxu0 0
        %2588 = vmatpush.bf16.msra.mxu0 %v1615
        %2589 = vmatpush.bf16.msra.mxu0 %v1583
        %2590 = vmatmul.bf16.gmra.mxu0 %v2487
        %v2591 = vpop.f32.mrf.mxu0
        %v2592 = vadd.f32 0.0, %v2591
        %v2593 = vpop.f32.mrf.mxu0
        %v2594 = vadd.f32 0.0, %v2593
        %2595 = vmatmul.bf16.gmra.mxu0 %v2490
        %v2596 = vpop.f32.mrf.mxu0
        %v2597 = vadd.f32 0.0, %v2596
        %v2598 = vpop.f32.mrf.mxu0
        %v2599 = vadd.f32 0.0, %v2598
        %2600 = vmatmul.bf16.gmra.mxu0 %v2493
        %v2601 = vpop.f32.mrf.mxu0
        %v2602 = vadd.f32 0.0, %v2601
        %v2603 = vpop.f32.mrf.mxu0
        %v2604 = vadd.f32 0.0, %v2603
        %2605 = vmatmul.bf16.gmra.mxu0 %v2496
        %v2606 = vpop.f32.mrf.mxu0
        %v2607 = vadd.f32 0.0, %v2606
        %v2608 = vpop.f32.mrf.mxu0
        %v2609 = vadd.f32 0.0, %v2608
        %2610 = vmatmul.bf16.gmra.mxu0 %v2499
        %v2611 = vpop.f32.mrf.mxu0
        %v2612 = vadd.f32 0.0, %v2611
        %v2613 = vpop.f32.mrf.mxu0
        %v2614 = vadd.f32 0.0, %v2613
        %2615 = vmatmul.bf16.gmra.mxu0 %v2502
        %v2616 = vpop.f32.mrf.mxu0
        %v2617 = vadd.f32 0.0, %v2616
        %v2618 = vpop.f32.mrf.mxu0
        %v2619 = vadd.f32 0.0, %v2618
        %2620 = vdwg.mxu0
        %v2621 = vadd.f32 %v2407, %v2514
        %v2622 = vadd.f32 %v2408, %v2553
        %v2623 = vadd.f32 %v2409, %v2592
        %v2624 = vadd.f32 %v2410, %v2516
        %v2625 = vadd.f32 %v2411, %v2555
        %v2626 = vadd.f32 %v2412, %v2594
        %v2627 = vadd.f32 %v2413, %v2519
        %v2628 = vadd.f32 %v2414, %v2558
        %v2629 = vadd.f32 %v2415, %v2597
        %v2630 = vadd.f32 %v2416, %v2521
        %v2631 = vadd.f32 %v2417, %v2560
        %v2632 = vadd.f32 %v2418, %v2599
        %v2633 = vadd.f32 %v2419, %v2524
        %v2634 = vadd.f32 %v2420, %v2563
        %v2635 = vadd.f32 %v2421, %v2602
        %v2636 = vadd.f32 %v2422, %v2526
        %v2637 = vadd.f32 %v2423, %v2565
        %v2638 = vadd.f32 %v2424, %v2604
        %v2639 = vadd.f32 %v2425, %v2529
        %v2640 = vadd.f32 %v2426, %v2568
        %v2641 = vadd.f32 %v2427, %v2607
        %v2642 = vadd.f32 %v2428, %v2531
        %v2643 = vadd.f32 %v2429, %v2570
        %v2644 = vadd.f32 %v2430, %v2609
        %v2645 = vadd.f32 %v2431, %v2534
        %v2646 = vadd.f32 %v2432, %v2573
        %v2647 = vadd.f32 %v2433, %v2612
        %v2648 = vadd.f32 %v2434, %v2536
        %v2649 = vadd.f32 %v2435, %v2575
        %v2650 = vadd.f32 %v2436, %v2614
        %v2651 = vadd.f32 %v2437, %v2539
        %v2652 = vadd.f32 %v2438, %v2578
        %v2653 = vadd.f32 %v2439, %v2617
        %v2654 = vadd.f32 %v2440, %v2541
        %v2655 = vadd.f32 %v2441, %v2580
        %v2656 = vadd.f32 %v2442, %v2619
        %2681 = vrot.lane.b32.xlu0 %v2622, 64
        %v2682 = vpop.permute.xlu0 %2681
        %2683 = vrot.lane.b32.xlu0 %v2623, 64
        %v2684 = vpop.permute.xlu0 %2683
        %2685 = vrot.lane.b32.xlu0 %v2625, 64
        %v2686 = vpop.permute.xlu0 %2685
        %2687 = vrot.lane.b32.xlu0 %v2626, 64
        %v2688 = vpop.permute.xlu0 %2687
        %2689 = vrot.lane.b32.xlu0 %v2628, 64
        %v2690 = vpop.permute.xlu0 %2689
        %2691 = vrot.lane.b32.xlu0 %v2629, 64
        %v2692 = vpop.permute.xlu0 %2691
        %2693 = vrot.lane.b32.xlu0 %v2631, 64
        %v2694 = vpop.permute.xlu0 %2693
        %2695 = vrot.lane.b32.xlu0 %v2632, 64
        %v2696 = vpop.permute.xlu0 %2695
        %2697 = vrot.lane.b32.xlu0 %v2634, 64
        %v2698 = vpop.permute.xlu0 %2697
        %2699 = vrot.lane.b32.xlu0 %v2635, 64
        %v2700 = vpop.permute.xlu0 %2699
        %2701 = vrot.lane.b32.xlu0 %v2637, 64
        %v2702 = vpop.permute.xlu0 %2701
        %2703 = vrot.lane.b32.xlu0 %v2638, 64
        %v2704 = vpop.permute.xlu0 %2703
        %2705 = vrot.lane.b32.xlu0 %v2640, 64
        %v2706 = vpop.permute.xlu0 %2705
        %2707 = vrot.lane.b32.xlu0 %v2641, 64
        %v2708 = vpop.permute.xlu0 %2707
        %2709 = vrot.lane.b32.xlu0 %v2643, 64
        %v2710 = vpop.permute.xlu0 %2709
        %2711 = vrot.lane.b32.xlu0 %v2644, 64
        %v2712 = vpop.permute.xlu0 %2711
        %2713 = vrot.lane.b32.xlu0 %v2646, 64
        %v2714 = vpop.permute.xlu0 %2713
        %2715 = vrot.lane.b32.xlu0 %v2647, 64
        %v2716 = vpop.permute.xlu0 %2715
        %2717 = vrot.lane.b32.xlu0 %v2649, 64
        %v2718 = vpop.permute.xlu0 %2717
        %2719 = vrot.lane.b32.xlu0 %v2650, 64
        %v2720 = vpop.permute.xlu0 %2719
        %2721 = vrot.lane.b32.xlu0 %v2652, 64
        %v2722 = vpop.permute.xlu0 %2721
        %2723 = vrot.lane.b32.xlu0 %v2653, 64
        %v2724 = vpop.permute.xlu0 %2723
        %2725 = vrot.lane.b32.xlu0 %v2655, 64
        %v2726 = vpop.permute.xlu0 %2725
        %2727 = vrot.lane.b32.xlu0 %v2656, 64
        %v2728 = vpop.permute.xlu0 %2727
        %v2729 = vsel %vm1842, %v2682, %v2684
        %v2730 = vsel %vm1842, %v2686, %v2688
        %v2731 = vsel %vm1842, %v2690, %v2692
        %v2732 = vsel %vm1842, %v2694, %v2696
        %v2733 = vsel %vm1842, %v2698, %v2700
        %v2734 = vsel %vm1842, %v2702, %v2704
        %v2735 = vsel %vm1842, %v2706, %v2708
        %v2736 = vsel %vm1842, %v2710, %v2712
        %v2737 = vsel %vm1842, %v2714, %v2716
        %v2738 = vsel %vm1842, %v2718, %v2720
        %v2739 = vsel %vm1842, %v2722, %v2724
        %v2740 = vsel %vm1842, %v2726, %v2728
        %v2765 = vmax.f32 %v2621, %v2729
        %v2766 = vmax.f32 %v2622, %v2684
        %v2767 = vmax.f32 %v2624, %v2730
        %v2768 = vmax.f32 %v2625, %v2688
        %v2769 = vmax.f32 %v2627, %v2731
        %v2770 = vmax.f32 %v2628, %v2692
        %v2771 = vmax.f32 %v2630, %v2732
        %v2772 = vmax.f32 %v2631, %v2696
        %v2773 = vmax.f32 %v2633, %v2733
        %v2774 = vmax.f32 %v2634, %v2700
        %v2775 = vmax.f32 %v2636, %v2734
        %v2776 = vmax.f32 %v2637, %v2704
        %v2777 = vmax.f32 %v2639, %v2735
        %v2778 = vmax.f32 %v2640, %v2708
        %v2779 = vmax.f32 %v2642, %v2736
        %v2780 = vmax.f32 %v2643, %v2712
        %v2781 = vmax.f32 %v2645, %v2737
        %v2782 = vmax.f32 %v2646, %v2716
        %v2783 = vmax.f32 %v2648, %v2738
        %v2784 = vmax.f32 %v2649, %v2720
        %v2785 = vmax.f32 %v2651, %v2739
        %v2786 = vmax.f32 %v2652, %v2724
        %v2787 = vmax.f32 %v2654, %v2740
        %v2788 = vmax.f32 %v2655, %v2728
        %v2789 = vmax.f32 %v1879, %v2765
        %v2790 = vmax.f32 %v1880, %v2766
        %v2791 = vmax.f32 %v1881, %v2767
        %v2792 = vmax.f32 %v1882, %v2768
        %v2793 = vmax.f32 %v1883, %v2769
        %v2794 = vmax.f32 %v1884, %v2770
        %v2795 = vmax.f32 %v1885, %v2771
        %v2796 = vmax.f32 %v1886, %v2772
        %v2797 = vmax.f32 %v1887, %v2773
        %v2798 = vmax.f32 %v1888, %v2774
        %v2799 = vmax.f32 %v1889, %v2775
        %v2800 = vmax.f32 %v1890, %v2776
        %v2801 = vmax.f32 %v1891, %v2777
        %v2802 = vmax.f32 %v1892, %v2778
        %v2803 = vmax.f32 %v1893, %v2779
        %v2804 = vmax.f32 %v1894, %v2780
        %v2805 = vmax.f32 %v1895, %v2781
        %v2806 = vmax.f32 %v1896, %v2782
        %v2807 = vmax.f32 %v1897, %v2783
        %v2808 = vmax.f32 %v1898, %v2784
        %v2809 = vmax.f32 %v1899, %v2785
        %v2810 = vmax.f32 %v1900, %v2786
        %v2811 = vmax.f32 %v1901, %v2787
        %v2812 = vmax.f32 %v1902, %v2788
        %v2813 = vld [vmem:[%s2] sm:$0x3]
        %v2815 = vperm.slane %v2813, 0
        %v2816 = vperm.slane %v2813, 1
        %v2819 = vadd.f32 %v2789, %v2815
        %v2820 = vadd.f32 %v2790, %v2816
        %v2821 = vadd.f32 %v2791, %v2815
        %v2822 = vadd.f32 %v2792, %v2816
        %v2823 = vadd.f32 %v2793, %v2815
        %v2824 = vadd.f32 %v2794, %v2816
        %v2825 = vadd.f32 %v2795, %v2815
        %v2826 = vadd.f32 %v2796, %v2816
        %v2827 = vadd.f32 %v2797, %v2815
        %v2828 = vadd.f32 %v2798, %v2816
        %v2829 = vadd.f32 %v2799, %v2815
        %v2830 = vadd.f32 %v2800, %v2816
        %v2831 = vadd.f32 %v2801, %v2815
        %v2832 = vadd.f32 %v2802, %v2816
        %v2833 = vadd.f32 %v2803, %v2815
        %v2834 = vadd.f32 %v2804, %v2816
        %v2835 = vadd.f32 %v2805, %v2815
        %v2836 = vadd.f32 %v2806, %v2816
        %v2837 = vadd.f32 %v2807, %v2815
        %v2838 = vadd.f32 %v2808, %v2816
        %v2839 = vadd.f32 %v2809, %v2815
        %v2840 = vadd.f32 %v2810, %v2816
        %v2841 = vadd.f32 %v2811, %v2815
        %v2842 = vadd.f32 %v2812, %v2816
        %v2843 = vmax.f32 %v2819, 0.0
        %v2844 = vmax.f32 %v2820, 0.0
        %v2845 = vmax.f32 %v2821, 0.0
        %v2846 = vmax.f32 %v2822, 0.0
        %v2847 = vmax.f32 %v2823, 0.0
        %v2848 = vmax.f32 %v2824, 0.0
        %v2849 = vmax.f32 %v2825, 0.0
        %v2850 = vmax.f32 %v2826, 0.0
        %v2851 = vmax.f32 %v2827, 0.0
        %v2852 = vmax.f32 %v2828, 0.0
        %v2853 = vmax.f32 %v2829, 0.0
        %v2854 = vmax.f32 %v2830, 0.0
        %v2855 = vmax.f32 %v2831, 0.0
        %v2856 = vmax.f32 %v2832, 0.0
        %v2857 = vmax.f32 %v2833, 0.0
        %v2858 = vmax.f32 %v2834, 0.0
        %v2859 = vmax.f32 %v2835, 0.0
        %v2860 = vmax.f32 %v2836, 0.0
        %v2861 = vmax.f32 %v2837, 0.0
        %v2862 = vmax.f32 %v2838, 0.0
        %v2863 = vmax.f32 %v2839, 0.0
        %v2864 = vmax.f32 %v2840, 0.0
        %v2865 = vmax.f32 %v2841, 0.0
        %v2866 = vmax.f32 %v2842, 0.0
        %v2867 = vpack.c.bf16 %v2844, %v2843
        %v2868 = vpack.c.bf16 %v2846, %v2845
        %v2869 = vpack.c.bf16 %v2848, %v2847
        %v2870 = vpack.c.bf16 %v2850, %v2849
        %v2871 = vpack.c.bf16 %v2852, %v2851
        %v2872 = vpack.c.bf16 %v2854, %v2853
        %v2873 = vpack.c.bf16 %v2856, %v2855
        %v2874 = vpack.c.bf16 %v2858, %v2857
        %v2875 = vpack.c.bf16 %v2860, %v2859
        %v2876 = vpack.c.bf16 %v2862, %v2861
        %v2877 = vpack.c.bf16 %v2864, %v2863
        %v2878 = vpack.c.bf16 %v2866, %v2865
        %vm2879 = vcmask 1043456
        %vm2880 = vcmask 523268
        %vm2881 = vmor %vm2880, %vm2879
        %2882 = vst.msk [vmem:[#allocation2] sm:$0xff] %vm2881, %v2867
        %2883 = vst.msk [vmem:[#allocation2 + $0x8] sm:$0xff] %vm2881, %v2868
        %2884 = vst.msk [vmem:[#allocation2 + $0x10] sm:$0xff] %vm2881, %v2869
        %2885 = vst.msk [vmem:[#allocation2 + $0x18] sm:$0xff] %vm2881, %v2870
        %2886 = vst.msk [vmem:[#allocation2 + $0x20] sm:$0xff] %vm2881, %v2871
        %2887 = vst.msk [vmem:[#allocation2 + $0x28] sm:$0xff] %vm2881, %v2872
        %2888 = vst.msk [vmem:[#allocation2 + $0x30] sm:$0xff] %vm2881, %v2873
        %2889 = vst.msk [vmem:[#allocation2 + $0x38] sm:$0xff] %vm2881, %v2874
        %2890 = vst.msk [vmem:[#allocation2 + $0x40] sm:$0xff] %vm2881, %v2875
        %2891 = vst.msk [vmem:[#allocation2 + $0x48] sm:$0xff] %vm2881, %v2876
        %2892 = vst.msk [vmem:[#allocation2 + $0x50] sm:$0xff] %vm2881, %v2877
        %2893 = vst.msk [vmem:[#allocation2 + $0x58] sm:$0xff] %vm2881, %v2878
        %v2894 = vld [vmem:[#allocation2] sm:$0xff]
        %v2895 = vld [vmem:[#allocation2 + $0x10] sm:$0xff]
        %v2896 = vld [vmem:[#allocation2 + $0x20] sm:$0xff]
        %v2897 = vld [vmem:[#allocation2 + $0x30] sm:$0xff]
        %v2898 = vld [vmem:[%s3] sm:$0xff]
        %v2899 = vld [vmem:[%s3 + $0x8] sm:$0xff]
        %v2900 = vld [vmem:[%s3 + $0x10] sm:$0xff]
        %v2901 = vld [vmem:[%s3 + $0x18] sm:$0xff]
        %v2902 = vld [vmem:[%s3 + $0x20] sm:$0xff]
        %v2903 = vld [vmem:[%s3 + $0x28] sm:$0xff]
        %v2904 = vld [vmem:[%s3 + $0x30] sm:$0xff]
        %v2905 = vld [vmem:[%s3 + $0x38] sm:$0xff]
        %v2906 = vld [vmem:[%s3 + $0x40] sm:$0xff]
        %v2907 = vld [vmem:[%s3 + $0x48] sm:$0xff]
        %v2908 = vld [vmem:[%s3 + $0x50] sm:$0xff]
        %v2909 = vld [vmem:[%s3 + $0x58] sm:$0xff]
        %v2910 = vld [vmem:[%s3 + $0x60] sm:$0xff]
        %v2911 = vld [vmem:[%s3 + $0x68] sm:$0xff]
        %v2912 = vld [vmem:[%s3 + $0x70] sm:$0xff]
        %v2913 = vld [vmem:[%s3 + $0x78] sm:$0xff]
        %v2914 = vld [vmem:[%s3 + $0x80] sm:$0xff]
        %v2915 = vld [vmem:[%s3 + $0x88] sm:$0xff]
        %v2916 = vld [vmem:[%s3 + $0x90] sm:$0xff]
        %v2917 = vld [vmem:[%s3 + $0x98] sm:$0xff]
        %v2918 = vld [vmem:[%s3 + $0xa0] sm:$0xff]
        %v2919 = vld [vmem:[%s3 + $0xa8] sm:$0xff]
        %v2920 = vld [vmem:[%s3 + $0xb0] sm:$0xff]
        %v2921 = vld [vmem:[%s3 + $0xb8] sm:$0xff]
        %s2922 = scalar_lea.vmem [#allocation2], 8
        %v2923 = vld [vmem:[%s2922] sm:$0xff]
        %v2924 = vld [vmem:[%s2922 + $0x10] sm:$0xff]
        %v2925 = vld [vmem:[%s2922 + $0x20] sm:$0xff]
        %v2926 = vld [vmem:[%s2922 + $0x30] sm:$0xff]
        %s2927 = scalar_lea.vmem %s3, 192
        %v2928 = vld [vmem:[%s2927] sm:$0xff]
        %v2929 = vld [vmem:[%s2927 + $0x8] sm:$0xff]
        %v2930 = vld [vmem:[%s2927 + $0x10] sm:$0xff]
        %v2931 = vld [vmem:[%s2927 + $0x18] sm:$0xff]
        %v2932 = vld [vmem:[%s2927 + $0x20] sm:$0xff]
        %v2933 = vld [vmem:[%s2927 + $0x28] sm:$0xff]
        %v2934 = vld [vmem:[%s2927 + $0x30] sm:$0xff]
        %v2935 = vld [vmem:[%s2927 + $0x38] sm:$0xff]
        %v2936 = vld [vmem:[%s2927 + $0x40] sm:$0xff]
        %v2937 = vld [vmem:[%s2927 + $0x48] sm:$0xff]
        %v2938 = vld [vmem:[%s2927 + $0x50] sm:$0xff]
        %v2939 = vld [vmem:[%s2927 + $0x58] sm:$0xff]
        %v2940 = vld [vmem:[%s2927 + $0x60] sm:$0xff]
        %v2941 = vld [vmem:[%s2927 + $0x68] sm:$0xff]
        %v2942 = vld [vmem:[%s2927 + $0x70] sm:$0xff]
        %v2943 = vld [vmem:[%s2927 + $0x78] sm:$0xff]
        %v2944 = vld [vmem:[%s2927 + $0x80] sm:$0xff]
        %v2945 = vld [vmem:[%s2927 + $0x88] sm:$0xff]
        %v2946 = vld [vmem:[%s2927 + $0x90] sm:$0xff]
        %v2947 = vld [vmem:[%s2927 + $0x98] sm:$0xff]
        %v2948 = vld [vmem:[%s2927 + $0xa0] sm:$0xff]
        %v2949 = vld [vmem:[%s2927 + $0xa8] sm:$0xff]
        %v2950 = vld [vmem:[%s2927 + $0xb0] sm:$0xff]
        %v2951 = vld [vmem:[%s2927 + $0xb8] sm:$0xff]
        %v2956 = vunpack.c.l.b16 %v2923
        %v2957 = vunpack.c.h.b16 %v2923
        %v2958 = vunpack.c.l.b16 %v2924
        %v2959 = vunpack.c.h.b16 %v2924
        %v2960 = vunpack.c.l.b16 %v2925
        %v2961 = vunpack.c.h.b16 %v2925
        %v2962 = vunpack.c.l.b16 %v2926
        %v2963 = vunpack.c.h.b16 %v2926
        %v2964 = vpack.c.b16 %v2958, %v2956
        %v2965 = vpack.c.b16 %v2959, %v2957
        %v2966 = vpack.c.b16 %v2962, %v2960
        %v2967 = vpack.c.b16 %v2963, %v2961
        %v2994 = vunpack.c.l.b16 %v2928
        %v2995 = vunpack.c.h.b16 %v2928
        %v2996 = vunpack.c.l.b16 %v2929
        %v2997 = vunpack.c.h.b16 %v2929
        %v2998 = vunpack.c.l.b16 %v2930
        %v2999 = vunpack.c.h.b16 %v2930
        %v3000 = vunpack.c.l.b16 %v2931
        %v3001 = vunpack.c.h.b16 %v2931
        %v3002 = vunpack.c.l.b16 %v2932
        %v3003 = vunpack.c.h.b16 %v2932
        %v3004 = vunpack.c.l.b16 %v2933
        %v3005 = vunpack.c.h.b16 %v2933
        %v3006 = vunpack.c.l.b16 %v2934
        %v3007 = vunpack.c.h.b16 %v2934
        %v3008 = vunpack.c.l.b16 %v2935
        %v3009 = vunpack.c.h.b16 %v2935
        %v3010 = vunpack.c.l.b16 %v2936
        %v3011 = vunpack.c.h.b16 %v2936
        %v3012 = vunpack.c.l.b16 %v2937
        %v3013 = vunpack.c.h.b16 %v2937
        %v3014 = vunpack.c.l.b16 %v2938
        %v3015 = vunpack.c.h.b16 %v2938
        %v3016 = vunpack.c.l.b16 %v2939
        %v3017 = vunpack.c.h.b16 %v2939
        %v3018 = vunpack.c.l.b16 %v2940
        %v3019 = vunpack.c.h.b16 %v2940
        %v3020 = vunpack.c.l.b16 %v2941
        %v3021 = vunpack.c.h.b16 %v2941
        %v3022 = vunpack.c.l.b16 %v2942
        %v3023 = vunpack.c.h.b16 %v2942
        %v3024 = vunpack.c.l.b16 %v2943
        %v3025 = vunpack.c.h.b16 %v2943
        %v3026 = vunpack.c.l.b16 %v2944
        %v3027 = vunpack.c.h.b16 %v2944
        %v3028 = vunpack.c.l.b16 %v2945
        %v3029 = vunpack.c.h.b16 %v2945
        %v3030 = vunpack.c.l.b16 %v2946
        %v3031 = vunpack.c.h.b16 %v2946
        %v3032 = vunpack.c.l.b16 %v2947
        %v3033 = vunpack.c.h.b16 %v2947
        %v3034 = vunpack.c.l.b16 %v2948
        %v3035 = vunpack.c.h.b16 %v2948
        %v3036 = vunpack.c.l.b16 %v2949
        %v3037 = vunpack.c.h.b16 %v2949
        %v3038 = vunpack.c.l.b16 %v2950
        %v3039 = vunpack.c.h.b16 %v2950
        %v3040 = vunpack.c.l.b16 %v2951
        %v3041 = vunpack.c.h.b16 %v2951
        %v3042 = vpack.c.b16 %v2996, %v2994
        %v3043 = vpack.c.b16 %v2997, %v2995
        %v3044 = vpack.c.b16 %v3000, %v2998
        %v3045 = vpack.c.b16 %v3001, %v2999
        %v3046 = vpack.c.b16 %v3004, %v3002
        %v3047 = vpack.c.b16 %v3005, %v3003
        %v3048 = vpack.c.b16 %v3008, %v3006
        %v3049 = vpack.c.b16 %v3009, %v3007
        %v3050 = vpack.c.b16 %v3012, %v3010
        %v3051 = vpack.c.b16 %v3013, %v3011
        %v3052 = vpack.c.b16 %v3016, %v3014
        %v3053 = vpack.c.b16 %v3017, %v3015
        %v3054 = vpack.c.b16 %v3020, %v3018
        %v3055 = vpack.c.b16 %v3021, %v3019
        %v3056 = vpack.c.b16 %v3024, %v3022
        %v3057 = vpack.c.b16 %v3025, %v3023
        %v3058 = vpack.c.b16 %v3028, %v3026
        %v3059 = vpack.c.b16 %v3029, %v3027
        %v3060 = vpack.c.b16 %v3032, %v3030
        %v3061 = vpack.c.b16 %v3033, %v3031
        %v3062 = vpack.c.b16 %v3036, %v3034
        %v3063 = vpack.c.b16 %v3037, %v3035
        %v3064 = vpack.c.b16 %v3040, %v3038
        %v3065 = vpack.c.b16 %v3041, %v3039
        %v3091 = vsel %vm1842, %v2965, 0
        %v3094 = vsel %vm1842, %v2967, 0
        %3096 = vmatpush.bf16.msra.mxu0 %v3056
        %3097 = vmatpush.bf16.msra.mxu0 %v3054
        %3098 = vmatpush.bf16.msra.mxu0 %v3052
        %3099 = vmatpush.bf16.msra.mxu0 %v3050
        %3100 = vmatpush.bf16.msra.mxu0 %v3048
        %3101 = vmatpush.bf16.msra.mxu0 %v3046
        %3102 = vmatpush.bf16.msra.mxu0 %v3044
        %3103 = vmatpush.bf16.msra.mxu0 %v3042
        %3104 = vmatmul.bf16.gmra.mxu0 %v2964
        %v3105 = vpop.f32.mrf.mxu0
        %v3106 = vadd.f32 0.0, %v3105
        %v3107 = vpop.f32.mrf.mxu0
        %v3108 = vadd.f32 0.0, %v3107
        %3109 = vmatmul.bf16.gmra.mxu0 %v2966
        %v3110 = vpop.f32.mrf.mxu0
        %v3111 = vadd.f32 0.0, %v3110
        %v3112 = vpop.f32.mrf.mxu0
        %v3113 = vadd.f32 0.0, %v3112
        %3114 = vdwg.mxu0
        %3115 = vmatpush.bf16.msra.mxu0 0
        %3116 = vmatpush.bf16.msra.mxu0 0
        %3117 = vmatpush.bf16.msra.mxu0 0
        %3118 = vmatpush.bf16.msra.mxu0 0
        %3119 = vmatpush.bf16.msra.mxu0 %v3064
        %3120 = vmatpush.bf16.msra.mxu0 %v3062
        %3121 = vmatpush.bf16.msra.mxu0 %v3060
        %3122 = vmatpush.bf16.msra.mxu0 %v3058
        %3123 = vmatmul.bf16.gmra.mxu0 %v3091
        %v3124 = vpop.f32.mrf.mxu0
        %v3125 = vadd.f32 %v3106, %v3124
        %v3126 = vpop.f32.mrf.mxu0
        %v3127 = vadd.f32 %v3108, %v3126
        %3128 = vmatmul.bf16.gmra.mxu0 %v3094
        %v3129 = vpop.f32.mrf.mxu0
        %v3130 = vadd.f32 %v3111, %v3129
        %v3131 = vpop.f32.mrf.mxu0
        %v3132 = vadd.f32 %v3113, %v3131
        %3133 = vdwg.mxu0
        %3134 = vmatpush.bf16.msra.mxu0 %v3057
        %3135 = vmatpush.bf16.msra.mxu0 %v3055
        %3136 = vmatpush.bf16.msra.mxu0 %v3053
        %3137 = vmatpush.bf16.msra.mxu0 %v3051
        %3138 = vmatpush.bf16.msra.mxu0 %v3049
        %3139 = vmatpush.bf16.msra.mxu0 %v3047
        %3140 = vmatpush.bf16.msra.mxu0 %v3045
        %3141 = vmatpush.bf16.msra.mxu0 %v3043
        %3142 = vmatmul.bf16.gmra.mxu0 %v2964
        %v3143 = vpop.f32.mrf.mxu0
        %v3144 = vadd.f32 0.0, %v3143
        %v3145 = vpop.f32.mrf.mxu0
        %v3146 = vadd.f32 0.0, %v3145
        %3147 = vmatmul.bf16.gmra.mxu0 %v2966
        %v3148 = vpop.f32.mrf.mxu0
        %v3149 = vadd.f32 0.0, %v3148
        %v3150 = vpop.f32.mrf.mxu0
        %v3151 = vadd.f32 0.0, %v3150
        %3152 = vdwg.mxu0
        %3153 = vmatpush.bf16.msra.mxu0 0
        %3154 = vmatpush.bf16.msra.mxu0 0
        %3155 = vmatpush.bf16.msra.mxu0 0
        %3156 = vmatpush.bf16.msra.mxu0 0
        %3157 = vmatpush.bf16.msra.mxu0 %v3065
        %3158 = vmatpush.bf16.msra.mxu0 %v3063
        %3159 = vmatpush.bf16.msra.mxu0 %v3061
        %3160 = vmatpush.bf16.msra.mxu0 %v3059
        %3161 = vmatmul.bf16.gmra.mxu0 %v3091
        %v3162 = vpop.f32.mrf.mxu0
        %v3163 = vadd.f32 %v3144, %v3162
        %v3164 = vpop.f32.mrf.mxu0
        %v3165 = vadd.f32 %v3146, %v3164
        %3166 = vmatmul.bf16.gmra.mxu0 %v3094
        %v3167 = vpop.f32.mrf.mxu0
        %v3168 = vadd.f32 %v3149, %v3167
        %v3169 = vpop.f32.mrf.mxu0
        %v3170 = vadd.f32 %v3151, %v3169
        %3171 = vdwg.mxu0
        %v3176 = vunpack.c.l.b16 %v2894
        %v3177 = vunpack.c.h.b16 %v2894
        %v3178 = vunpack.c.l.b16 %v2895
        %v3179 = vunpack.c.h.b16 %v2895
        %v3180 = vunpack.c.l.b16 %v2896
        %v3181 = vunpack.c.h.b16 %v2896
        %v3182 = vunpack.c.l.b16 %v2897
        %v3183 = vunpack.c.h.b16 %v2897
        %v3184 = vpack.c.b16 %v3178, %v3176
        %v3185 = vpack.c.b16 %v3179, %v3177
        %v3186 = vpack.c.b16 %v3182, %v3180
        %v3187 = vpack.c.b16 %v3183, %v3181
        %v3214 = vunpack.c.l.b16 %v2898
        %v3215 = vunpack.c.h.b16 %v2898
        %v3216 = vunpack.c.l.b16 %v2899
        %v3217 = vunpack.c.h.b16 %v2899
        %v3218 = vunpack.c.l.b16 %v2900
        %v3219 = vunpack.c.h.b16 %v2900
        %v3220 = vunpack.c.l.b16 %v2901
        %v3221 = vunpack.c.h.b16 %v2901
        %v3222 = vunpack.c.l.b16 %v2902
        %v3223 = vunpack.c.h.b16 %v2902
        %v3224 = vunpack.c.l.b16 %v2903
        %v3225 = vunpack.c.h.b16 %v2903
        %v3226 = vunpack.c.l.b16 %v2904
        %v3227 = vunpack.c.h.b16 %v2904
        %v3228 = vunpack.c.l.b16 %v2905
        %v3229 = vunpack.c.h.b16 %v2905
        %v3230 = vunpack.c.l.b16 %v2906
        %v3231 = vunpack.c.h.b16 %v2906
        %v3232 = vunpack.c.l.b16 %v2907
        %v3233 = vunpack.c.h.b16 %v2907
        %v3234 = vunpack.c.l.b16 %v2908
        %v3235 = vunpack.c.h.b16 %v2908
        %v3236 = vunpack.c.l.b16 %v2909
        %v3237 = vunpack.c.h.b16 %v2909
        %v3238 = vunpack.c.l.b16 %v2910
        %v3239 = vunpack.c.h.b16 %v2910
        %v3240 = vunpack.c.l.b16 %v2911
        %v3241 = vunpack.c.h.b16 %v2911
        %v3242 = vunpack.c.l.b16 %v2912
        %v3243 = vunpack.c.h.b16 %v2912
        %v3244 = vunpack.c.l.b16 %v2913
        %v3245 = vunpack.c.h.b16 %v2913
        %v3246 = vunpack.c.l.b16 %v2914
        %v3247 = vunpack.c.h.b16 %v2914
        %v3248 = vunpack.c.l.b16 %v2915
        %v3249 = vunpack.c.h.b16 %v2915
        %v3250 = vunpack.c.l.b16 %v2916
        %v3251 = vunpack.c.h.b16 %v2916
        %v3252 = vunpack.c.l.b16 %v2917
        %v3253 = vunpack.c.h.b16 %v2917
        %v3254 = vunpack.c.l.b16 %v2918
        %v3255 = vunpack.c.h.b16 %v2918
        %v3256 = vunpack.c.l.b16 %v2919
        %v3257 = vunpack.c.h.b16 %v2919
        %v3258 = vunpack.c.l.b16 %v2920
        %v3259 = vunpack.c.h.b16 %v2920
        %v3260 = vunpack.c.l.b16 %v2921
        %v3261 = vunpack.c.h.b16 %v2921
        %v3262 = vpack.c.b16 %v3216, %v3214
        %v3263 = vpack.c.b16 %v3217, %v3215
        %v3264 = vpack.c.b16 %v3220, %v3218
        %v3265 = vpack.c.b16 %v3221, %v3219
        %v3266 = vpack.c.b16 %v3224, %v3222
        %v3267 = vpack.c.b16 %v3225, %v3223
        %v3268 = vpack.c.b16 %v3228, %v3226
        %v3269 = vpack.c.b16 %v3229, %v3227
        %v3270 = vpack.c.b16 %v3232, %v3230
        %v3271 = vpack.c.b16 %v3233, %v3231
        %v3272 = vpack.c.b16 %v3236, %v3234
        %v3273 = vpack.c.b16 %v3237, %v3235
        %v3274 = vpack.c.b16 %v3240, %v3238
        %v3275 = vpack.c.b16 %v3241, %v3239
        %v3276 = vpack.c.b16 %v3244, %v3242
        %v3277 = vpack.c.b16 %v3245, %v3243
        %v3278 = vpack.c.b16 %v3248, %v3246
        %v3279 = vpack.c.b16 %v3249, %v3247
        %v3280 = vpack.c.b16 %v3252, %v3250
        %v3281 = vpack.c.b16 %v3253, %v3251
        %v3282 = vpack.c.b16 %v3256, %v3254
        %v3283 = vpack.c.b16 %v3257, %v3255
        %v3284 = vpack.c.b16 %v3260, %v3258
        %v3285 = vpack.c.b16 %v3261, %v3259
        %v3311 = vsel %vm1842, %v3185, 0
        %v3314 = vsel %vm1842, %v3187, 0
        %3316 = vmatpush.bf16.msra.mxu0 %v3276
        %3317 = vmatpush.bf16.msra.mxu0 %v3274
        %3318 = vmatpush.bf16.msra.mxu0 %v3272
        %3319 = vmatpush.bf16.msra.mxu0 %v3270
        %3320 = vmatpush.bf16.msra.mxu0 %v3268
        %3321 = vmatpush.bf16.msra.mxu0 %v3266
        %3322 = vmatpush.bf16.msra.mxu0 %v3264
        %3323 = vmatpush.bf16.msra.mxu0 %v3262
        %3324 = vmatmul.bf16.gmra.mxu0 %v3184
        %v3325 = vpop.f32.mrf.mxu0
        %v3326 = vadd.f32 %v3125, %v3325
        %v3327 = vpop.f32.mrf.mxu0
        %v3328 = vadd.f32 %v3127, %v3327
        %3329 = vmatmul.bf16.gmra.mxu0 %v3186
        %v3330 = vpop.f32.mrf.mxu0
        %v3331 = vadd.f32 %v3130, %v3330
        %v3332 = vpop.f32.mrf.mxu0
        %v3333 = vadd.f32 %v3132, %v3332
        %3334 = vdwg.mxu0
        %3335 = vmatpush.bf16.msra.mxu0 0
        %3336 = vmatpush.bf16.msra.mxu0 0
        %3337 = vmatpush.bf16.msra.mxu0 0
        %3338 = vmatpush.bf16.msra.mxu0 0
        %3339 = vmatpush.bf16.msra.mxu0 %v3284
        %3340 = vmatpush.bf16.msra.mxu0 %v3282
        %3341 = vmatpush.bf16.msra.mxu0 %v3280
        %3342 = vmatpush.bf16.msra.mxu0 %v3278
        %3343 = vmatmul.bf16.gmra.mxu0 %v3311
        %v3344 = vpop.f32.mrf.mxu0
        %v3345 = vadd.f32 %v3326, %v3344
        %v3346 = vpop.f32.mrf.mxu0
        %v3347 = vadd.f32 %v3328, %v3346
        %3348 = vmatmul.bf16.gmra.mxu0 %v3314
        %v3349 = vpop.f32.mrf.mxu0
        %v3350 = vadd.f32 %v3331, %v3349
        %v3351 = vpop.f32.mrf.mxu0
        %v3352 = vadd.f32 %v3333, %v3351
        %3353 = vdwg.mxu0
        %3354 = vmatpush.bf16.msra.mxu0 %v3277
        %3355 = vmatpush.bf16.msra.mxu0 %v3275
        %3356 = vmatpush.bf16.msra.mxu0 %v3273
        %3357 = vmatpush.bf16.msra.mxu0 %v3271
        %3358 = vmatpush.bf16.msra.mxu0 %v3269
        %3359 = vmatpush.bf16.msra.mxu0 %v3267
        %3360 = vmatpush.bf16.msra.mxu0 %v3265
        %3361 = vmatpush.bf16.msra.mxu0 %v3263
        %3362 = vmatmul.bf16.gmra.mxu0 %v3184
        %v3363 = vpop.f32.mrf.mxu0
        %v3364 = vadd.f32 %v3163, %v3363
        %v3365 = vpop.f32.mrf.mxu0
        %v3366 = vadd.f32 %v3165, %v3365
        %3367 = vmatmul.bf16.gmra.mxu0 %v3186
        %v3368 = vpop.f32.mrf.mxu0
        %v3369 = vadd.f32 %v3168, %v3368
        %v3370 = vpop.f32.mrf.mxu0
        %v3371 = vadd.f32 %v3170, %v3370
        %3372 = vdwg.mxu0
        %3373 = vmatpush.bf16.msra.mxu0 0
        %3374 = vmatpush.bf16.msra.mxu0 0
        %3375 = vmatpush.bf16.msra.mxu0 0
        %3376 = vmatpush.bf16.msra.mxu0 0
        %3377 = vmatpush.bf16.msra.mxu0 %v3285
        %3378 = vmatpush.bf16.msra.mxu0 %v3283
        %3379 = vmatpush.bf16.msra.mxu0 %v3281
        %3380 = vmatpush.bf16.msra.mxu0 %v3279
        %3381 = vmatmul.bf16.gmra.mxu0 %v3311
        %v3382 = vpop.f32.mrf.mxu0
        %v3383 = vadd.f32 %v3364, %v3382
        %v3384 = vpop.f32.mrf.mxu0
        %v3385 = vadd.f32 %v3366, %v3384
        %3386 = vmatmul.bf16.gmra.mxu0 %v3314
        %v3387 = vpop.f32.mrf.mxu0
        %v3388 = vadd.f32 %v3369, %v3387
        %v3389 = vpop.f32.mrf.mxu0
        %v3390 = vadd.f32 %v3371, %v3389
        %3391 = vdwg.mxu0
        %s3392 = scalar_lea.vmem [#allocation2], 16
        %v3393 = vld [vmem:[%s3392] sm:$0xff]
        %v3394 = vld [vmem:[%s3392 + $0x10] sm:$0xff]
        %v3395 = vld [vmem:[%s3392 + $0x20] sm:$0xff]
        %v3396 = vld [vmem:[%s3392 + $0x30] sm:$0xff]
        %s3397 = scalar_lea.vmem %s3, 384
        %v3398 = vld [vmem:[%s3397] sm:$0xff]
        %v3399 = vld [vmem:[%s3397 + $0x8] sm:$0xff]
        %v3400 = vld [vmem:[%s3397 + $0x10] sm:$0xff]
        %v3401 = vld [vmem:[%s3397 + $0x18] sm:$0xff]
        %v3402 = vld [vmem:[%s3397 + $0x20] sm:$0xff]
        %v3403 = vld [vmem:[%s3397 + $0x28] sm:$0xff]
        %v3404 = vld [vmem:[%s3397 + $0x30] sm:$0xff]
        %v3405 = vld [vmem:[%s3397 + $0x38] sm:$0xff]
        %v3406 = vld [vmem:[%s3397 + $0x40] sm:$0xff]
        %v3407 = vld [vmem:[%s3397 + $0x48] sm:$0xff]
        %v3408 = vld [vmem:[%s3397 + $0x50] sm:$0xff]
        %v3409 = vld [vmem:[%s3397 + $0x58] sm:$0xff]
        %v3410 = vld [vmem:[%s3397 + $0x60] sm:$0xff]
        %v3411 = vld [vmem:[%s3397 + $0x68] sm:$0xff]
        %v3412 = vld [vmem:[%s3397 + $0x70] sm:$0xff]
        %v3413 = vld [vmem:[%s3397 + $0x78] sm:$0xff]
        %v3414 = vld [vmem:[%s3397 + $0x80] sm:$0xff]
        %v3415 = vld [vmem:[%s3397 + $0x88] sm:$0xff]
        %v3416 = vld [vmem:[%s3397 + $0x90] sm:$0xff]
        %v3417 = vld [vmem:[%s3397 + $0x98] sm:$0xff]
        %v3418 = vld [vmem:[%s3397 + $0xa0] sm:$0xff]
        %v3419 = vld [vmem:[%s3397 + $0xa8] sm:$0xff]
        %v3420 = vld [vmem:[%s3397 + $0xb0] sm:$0xff]
        %v3421 = vld [vmem:[%s3397 + $0xb8] sm:$0xff]
        %v3426 = vunpack.c.l.b16 %v3393
        %v3427 = vunpack.c.h.b16 %v3393
        %v3428 = vunpack.c.l.b16 %v3394
        %v3429 = vunpack.c.h.b16 %v3394
        %v3430 = vunpack.c.l.b16 %v3395
        %v3431 = vunpack.c.h.b16 %v3395
        %v3432 = vunpack.c.l.b16 %v3396
        %v3433 = vunpack.c.h.b16 %v3396
        %v3434 = vpack.c.b16 %v3428, %v3426
        %v3435 = vpack.c.b16 %v3429, %v3427
        %v3436 = vpack.c.b16 %v3432, %v3430
        %v3437 = vpack.c.b16 %v3433, %v3431
        %v3464 = vunpack.c.l.b16 %v3398
        %v3465 = vunpack.c.h.b16 %v3398
        %v3466 = vunpack.c.l.b16 %v3399
        %v3467 = vunpack.c.h.b16 %v3399
        %v3468 = vunpack.c.l.b16 %v3400
        %v3469 = vunpack.c.h.b16 %v3400
        %v3470 = vunpack.c.l.b16 %v3401
        %v3471 = vunpack.c.h.b16 %v3401
        %v3472 = vunpack.c.l.b16 %v3402
        %v3473 = vunpack.c.h.b16 %v3402
        %v3474 = vunpack.c.l.b16 %v3403
        %v3475 = vunpack.c.h.b16 %v3403
        %v3476 = vunpack.c.l.b16 %v3404
        %v3477 = vunpack.c.h.b16 %v3404
        %v3478 = vunpack.c.l.b16 %v3405
        %v3479 = vunpack.c.h.b16 %v3405
        %v3480 = vunpack.c.l.b16 %v3406
        %v3481 = vunpack.c.h.b16 %v3406
        %v3482 = vunpack.c.l.b16 %v3407
        %v3483 = vunpack.c.h.b16 %v3407
        %v3484 = vunpack.c.l.b16 %v3408
        %v3485 = vunpack.c.h.b16 %v3408
        %v3486 = vunpack.c.l.b16 %v3409
        %v3487 = vunpack.c.h.b16 %v3409
        %v3488 = vunpack.c.l.b16 %v3410
        %v3489 = vunpack.c.h.b16 %v3410
        %v3490 = vunpack.c.l.b16 %v3411
        %v3491 = vunpack.c.h.b16 %v3411
        %v3492 = vunpack.c.l.b16 %v3412
        %v3493 = vunpack.c.h.b16 %v3412
        %v3494 = vunpack.c.l.b16 %v3413
        %v3495 = vunpack.c.h.b16 %v3413
        %v3496 = vunpack.c.l.b16 %v3414
        %v3497 = vunpack.c.h.b16 %v3414
        %v3498 = vunpack.c.l.b16 %v3415
        %v3499 = vunpack.c.h.b16 %v3415
        %v3500 = vunpack.c.l.b16 %v3416
        %v3501 = vunpack.c.h.b16 %v3416
        %v3502 = vunpack.c.l.b16 %v3417
        %v3503 = vunpack.c.h.b16 %v3417
        %v3504 = vunpack.c.l.b16 %v3418
        %v3505 = vunpack.c.h.b16 %v3418
        %v3506 = vunpack.c.l.b16 %v3419
        %v3507 = vunpack.c.h.b16 %v3419
        %v3508 = vunpack.c.l.b16 %v3420
        %v3509 = vunpack.c.h.b16 %v3420
        %v3510 = vunpack.c.l.b16 %v3421
        %v3511 = vunpack.c.h.b16 %v3421
        %v3512 = vpack.c.b16 %v3466, %v3464
        %v3513 = vpack.c.b16 %v3467, %v3465
        %v3514 = vpack.c.b16 %v3470, %v3468
        %v3515 = vpack.c.b16 %v3471, %v3469
        %v3516 = vpack.c.b16 %v3474, %v3472
        %v3517 = vpack.c.b16 %v3475, %v3473
        %v3518 = vpack.c.b16 %v3478, %v3476
        %v3519 = vpack.c.b16 %v3479, %v3477
        %v3520 = vpack.c.b16 %v3482, %v3480
        %v3521 = vpack.c.b16 %v3483, %v3481
        %v3522 = vpack.c.b16 %v3486, %v3484
        %v3523 = vpack.c.b16 %v3487, %v3485
        %v3524 = vpack.c.b16 %v3490, %v3488
        %v3525 = vpack.c.b16 %v3491, %v3489
        %v3526 = vpack.c.b16 %v3494, %v3492
        %v3527 = vpack.c.b16 %v3495, %v3493
        %v3528 = vpack.c.b16 %v3498, %v3496
        %v3529 = vpack.c.b16 %v3499, %v3497
        %v3530 = vpack.c.b16 %v3502, %v3500
        %v3531 = vpack.c.b16 %v3503, %v3501
        %v3532 = vpack.c.b16 %v3506, %v3504
        %v3533 = vpack.c.b16 %v3507, %v3505
        %v3534 = vpack.c.b16 %v3510, %v3508
        %v3535 = vpack.c.b16 %v3511, %v3509
        %v3561 = vsel %vm1842, %v3435, 0
        %v3564 = vsel %vm1842, %v3437, 0
        %3566 = vmatpush.bf16.msra.mxu0 %v3526
        %3567 = vmatpush.bf16.msra.mxu0 %v3524
        %3568 = vmatpush.bf16.msra.mxu0 %v3522
        %3569 = vmatpush.bf16.msra.mxu0 %v3520
        %3570 = vmatpush.bf16.msra.mxu0 %v3518
        %3571 = vmatpush.bf16.msra.mxu0 %v3516
        %3572 = vmatpush.bf16.msra.mxu0 %v3514
        %3573 = vmatpush.bf16.msra.mxu0 %v3512
        %3574 = vmatmul.bf16.gmra.mxu0 %v3434
        %v3575 = vpop.f32.mrf.mxu0
        %v3576 = vadd.f32 0.0, %v3575
        %v3577 = vpop.f32.mrf.mxu0
        %v3578 = vadd.f32 0.0, %v3577
        %3579 = vmatmul.bf16.gmra.mxu0 %v3436
        %v3580 = vpop.f32.mrf.mxu0
        %v3581 = vadd.f32 0.0, %v3580
        %v3582 = vpop.f32.mrf.mxu0
        %v3583 = vadd.f32 0.0, %v3582
        %3584 = vdwg.mxu0
        %3585 = vmatpush.bf16.msra.mxu0 0
        %3586 = vmatpush.bf16.msra.mxu0 0
        %3587 = vmatpush.bf16.msra.mxu0 0
        %3588 = vmatpush.bf16.msra.mxu0 0
        %3589 = vmatpush.bf16.msra.mxu0 %v3534
        %3590 = vmatpush.bf16.msra.mxu0 %v3532
        %3591 = vmatpush.bf16.msra.mxu0 %v3530
        %3592 = vmatpush.bf16.msra.mxu0 %v3528
        %3593 = vmatmul.bf16.gmra.mxu0 %v3561
        %v3594 = vpop.f32.mrf.mxu0
        %v3595 = vadd.f32 %v3576, %v3594
        %v3596 = vpop.f32.mrf.mxu0
        %v3597 = vadd.f32 %v3578, %v3596
        %3598 = vmatmul.bf16.gmra.mxu0 %v3564
        %v3599 = vpop.f32.mrf.mxu0
        %v3600 = vadd.f32 %v3581, %v3599
        %v3601 = vpop.f32.mrf.mxu0
        %v3602 = vadd.f32 %v3583, %v3601
        %3603 = vdwg.mxu0
        %3604 = vmatpush.bf16.msra.mxu0 %v3527
        %3605 = vmatpush.bf16.msra.mxu0 %v3525
        %3606 = vmatpush.bf16.msra.mxu0 %v3523
        %3607 = vmatpush.bf16.msra.mxu0 %v3521
        %3608 = vmatpush.bf16.msra.mxu0 %v3519
        %3609 = vmatpush.bf16.msra.mxu0 %v3517
        %3610 = vmatpush.bf16.msra.mxu0 %v3515
        %3611 = vmatpush.bf16.msra.mxu0 %v3513
        %3612 = vmatmul.bf16.gmra.mxu0 %v3434
        %v3613 = vpop.f32.mrf.mxu0
        %v3614 = vadd.f32 0.0, %v3613
        %v3615 = vpop.f32.mrf.mxu0
        %v3616 = vadd.f32 0.0, %v3615
        %3617 = vmatmul.bf16.gmra.mxu0 %v3436
        %v3618 = vpop.f32.mrf.mxu0
        %v3619 = vadd.f32 0.0, %v3618
        %v3620 = vpop.f32.mrf.mxu0
        %v3621 = vadd.f32 0.0, %v3620
        %3622 = vdwg.mxu0
        %3623 = vmatpush.bf16.msra.mxu0 0
        %3624 = vmatpush.bf16.msra.mxu0 0
        %3625 = vmatpush.bf16.msra.mxu0 0
        %3626 = vmatpush.bf16.msra.mxu0 0
        %3627 = vmatpush.bf16.msra.mxu0 %v3535
        %3628 = vmatpush.bf16.msra.mxu0 %v3533
        %3629 = vmatpush.bf16.msra.mxu0 %v3531
        %3630 = vmatpush.bf16.msra.mxu0 %v3529
        %3631 = vmatmul.bf16.gmra.mxu0 %v3561
        %v3632 = vpop.f32.mrf.mxu0
        %v3633 = vadd.f32 %v3614, %v3632
        %v3634 = vpop.f32.mrf.mxu0
        %v3635 = vadd.f32 %v3616, %v3634
        %3636 = vmatmul.bf16.gmra.mxu0 %v3564
        %v3637 = vpop.f32.mrf.mxu0
        %v3638 = vadd.f32 %v3619, %v3637
        %v3639 = vpop.f32.mrf.mxu0
        %v3640 = vadd.f32 %v3621, %v3639
        %3641 = vdwg.mxu0
        %v3642 = vadd.f32 %v3345, %v3595
        %v3643 = vadd.f32 %v3383, %v3633
        %v3644 = vadd.f32 %v3347, %v3597
        %v3645 = vadd.f32 %v3385, %v3635
        %v3646 = vadd.f32 %v3350, %v3600
        %v3647 = vadd.f32 %v3388, %v3638
        %v3648 = vadd.f32 %v3352, %v3602
        %v3649 = vadd.f32 %v3390, %v3640
        %s3650 = scalar_lea.vmem [#allocation2], 24
        %v3651 = vld [vmem:[%s3650] sm:$0xff]
        %v3652 = vld [vmem:[%s3650 + $0x10] sm:$0xff]
        %v3653 = vld [vmem:[%s3650 + $0x20] sm:$0xff]
        %v3654 = vld [vmem:[%s3650 + $0x30] sm:$0xff]
        %s3655 = scalar_lea.vmem %s3, 576
        %v3656 = vld [vmem:[%s3655] sm:$0xff]
        %v3657 = vld [vmem:[%s3655 + $0x8] sm:$0xff]
        %v3658 = vld [vmem:[%s3655 + $0x10] sm:$0xff]
        %v3659 = vld [vmem:[%s3655 + $0x18] sm:$0xff]
        %v3660 = vld [vmem:[%s3655 + $0x20] sm:$0xff]
        %v3661 = vld [vmem:[%s3655 + $0x28] sm:$0xff]
        %v3662 = vld [vmem:[%s3655 + $0x30] sm:$0xff]
        %v3663 = vld [vmem:[%s3655 + $0x38] sm:$0xff]
        %v3664 = vld [vmem:[%s3655 + $0x40] sm:$0xff]
        %v3665 = vld [vmem:[%s3655 + $0x48] sm:$0xff]
        %v3666 = vld [vmem:[%s3655 + $0x50] sm:$0xff]
        %v3667 = vld [vmem:[%s3655 + $0x58] sm:$0xff]
        %v3668 = vld [vmem:[%s3655 + $0x60] sm:$0xff]
        %v3669 = vld [vmem:[%s3655 + $0x68] sm:$0xff]
        %v3670 = vld [vmem:[%s3655 + $0x70] sm:$0xff]
        %v3671 = vld [vmem:[%s3655 + $0x78] sm:$0xff]
        %v3672 = vld [vmem:[%s3655 + $0x80] sm:$0xff]
        %v3673 = vld [vmem:[%s3655 + $0x88] sm:$0xff]
        %v3674 = vld [vmem:[%s3655 + $0x90] sm:$0xff]
        %v3675 = vld [vmem:[%s3655 + $0x98] sm:$0xff]
        %v3676 = vld [vmem:[%s3655 + $0xa0] sm:$0xff]
        %v3677 = vld [vmem:[%s3655 + $0xa8] sm:$0xff]
        %v3678 = vld [vmem:[%s3655 + $0xb0] sm:$0xff]
        %v3679 = vld [vmem:[%s3655 + $0xb8] sm:$0xff]
        %v3684 = vunpack.c.l.b16 %v3651
        %v3685 = vunpack.c.h.b16 %v3651
        %v3686 = vunpack.c.l.b16 %v3652
        %v3687 = vunpack.c.h.b16 %v3652
        %v3688 = vunpack.c.l.b16 %v3653
        %v3689 = vunpack.c.h.b16 %v3653
        %v3690 = vunpack.c.l.b16 %v3654
        %v3691 = vunpack.c.h.b16 %v3654
        %v3692 = vpack.c.b16 %v3686, %v3684
        %v3693 = vpack.c.b16 %v3687, %v3685
        %v3694 = vpack.c.b16 %v3690, %v3688
        %v3695 = vpack.c.b16 %v3691, %v3689
        %v3722 = vunpack.c.l.b16 %v3656
        %v3723 = vunpack.c.h.b16 %v3656
        %v3724 = vunpack.c.l.b16 %v3657
        %v3725 = vunpack.c.h.b16 %v3657
        %v3726 = vunpack.c.l.b16 %v3658
        %v3727 = vunpack.c.h.b16 %v3658
        %v3728 = vunpack.c.l.b16 %v3659
        %v3729 = vunpack.c.h.b16 %v3659
        %v3730 = vunpack.c.l.b16 %v3660
        %v3731 = vunpack.c.h.b16 %v3660
        %v3732 = vunpack.c.l.b16 %v3661
        %v3733 = vunpack.c.h.b16 %v3661
        %v3734 = vunpack.c.l.b16 %v3662
        %v3735 = vunpack.c.h.b16 %v3662
        %v3736 = vunpack.c.l.b16 %v3663
        %v3737 = vunpack.c.h.b16 %v3663
        %v3738 = vunpack.c.l.b16 %v3664
        %v3739 = vunpack.c.h.b16 %v3664
        %v3740 = vunpack.c.l.b16 %v3665
        %v3741 = vunpack.c.h.b16 %v3665
        %v3742 = vunpack.c.l.b16 %v3666
        %v3743 = vunpack.c.h.b16 %v3666
        %v3744 = vunpack.c.l.b16 %v3667
        %v3745 = vunpack.c.h.b16 %v3667
        %v3746 = vunpack.c.l.b16 %v3668
        %v3747 = vunpack.c.h.b16 %v3668
        %v3748 = vunpack.c.l.b16 %v3669
        %v3749 = vunpack.c.h.b16 %v3669
        %v3750 = vunpack.c.l.b16 %v3670
        %v3751 = vunpack.c.h.b16 %v3670
        %v3752 = vunpack.c.l.b16 %v3671
        %v3753 = vunpack.c.h.b16 %v3671
        %v3754 = vunpack.c.l.b16 %v3672
        %v3755 = vunpack.c.h.b16 %v3672
        %v3756 = vunpack.c.l.b16 %v3673
        %v3757 = vunpack.c.h.b16 %v3673
        %v3758 = vunpack.c.l.b16 %v3674
        %v3759 = vunpack.c.h.b16 %v3674
        %v3760 = vunpack.c.l.b16 %v3675
        %v3761 = vunpack.c.h.b16 %v3675
        %v3762 = vunpack.c.l.b16 %v3676
        %v3763 = vunpack.c.h.b16 %v3676
        %v3764 = vunpack.c.l.b16 %v3677
        %v3765 = vunpack.c.h.b16 %v3677
        %v3766 = vunpack.c.l.b16 %v3678
        %v3767 = vunpack.c.h.b16 %v3678
        %v3768 = vunpack.c.l.b16 %v3679
        %v3769 = vunpack.c.h.b16 %v3679
        %v3770 = vpack.c.b16 %v3724, %v3722
        %v3771 = vpack.c.b16 %v3725, %v3723
        %v3772 = vpack.c.b16 %v3728, %v3726
        %v3773 = vpack.c.b16 %v3729, %v3727
        %v3774 = vpack.c.b16 %v3732, %v3730
        %v3775 = vpack.c.b16 %v3733, %v3731
        %v3776 = vpack.c.b16 %v3736, %v3734
        %v3777 = vpack.c.b16 %v3737, %v3735
        %v3778 = vpack.c.b16 %v3740, %v3738
        %v3779 = vpack.c.b16 %v3741, %v3739
        %v3780 = vpack.c.b16 %v3744, %v3742
        %v3781 = vpack.c.b16 %v3745, %v3743
        %v3782 = vpack.c.b16 %v3748, %v3746
        %v3783 = vpack.c.b16 %v3749, %v3747
        %v3784 = vpack.c.b16 %v3752, %v3750
        %v3785 = vpack.c.b16 %v3753, %v3751
        %v3786 = vpack.c.b16 %v3756, %v3754
        %v3787 = vpack.c.b16 %v3757, %v3755
        %v3788 = vpack.c.b16 %v3760, %v3758
        %v3789 = vpack.c.b16 %v3761, %v3759
        %v3790 = vpack.c.b16 %v3764, %v3762
        %v3791 = vpack.c.b16 %v3765, %v3763
        %v3792 = vpack.c.b16 %v3768, %v3766
        %v3793 = vpack.c.b16 %v3769, %v3767
        %v3819 = vsel %vm1842, %v3693, 0
        %v3822 = vsel %vm1842, %v3695, 0
        %3824 = vmatpush.bf16.msra.mxu0 %v3784
        %3825 = vmatpush.bf16.msra.mxu0 %v3782
        %3826 = vmatpush.bf16.msra.mxu0 %v3780
        %3827 = vmatpush.bf16.msra.mxu0 %v3778
        %3828 = vmatpush.bf16.msra.mxu0 %v3776
        %3829 = vmatpush.bf16.msra.mxu0 %v3774
        %3830 = vmatpush.bf16.msra.mxu0 %v3772
        %3831 = vmatpush.bf16.msra.mxu0 %v3770
        %3832 = vmatmul.bf16.gmra.mxu0 %v3692
        %v3833 = vpop.f32.mrf.mxu0
        %v3834 = vadd.f32 0.0, %v3833
        %v3835 = vpop.f32.mrf.mxu0
        %v3836 = vadd.f32 0.0, %v3835
        %3837 = vmatmul.bf16.gmra.mxu0 %v3694
        %v3838 = vpop.f32.mrf.mxu0
        %v3839 = vadd.f32 0.0, %v3838
        %v3840 = vpop.f32.mrf.mxu0
        %v3841 = vadd.f32 0.0, %v3840
        %3842 = vdwg.mxu0
        %3843 = vmatpush.bf16.msra.mxu0 0
        %3844 = vmatpush.bf16.msra.mxu0 0
        %3845 = vmatpush.bf16.msra.mxu0 0
        %3846 = vmatpush.bf16.msra.mxu0 0
        %3847 = vmatpush.bf16.msra.mxu0 %v3792
        %3848 = vmatpush.bf16.msra.mxu0 %v3790
        %3849 = vmatpush.bf16.msra.mxu0 %v3788
        %3850 = vmatpush.bf16.msra.mxu0 %v3786
        %3851 = vmatmul.bf16.gmra.mxu0 %v3819
        %v3852 = vpop.f32.mrf.mxu0
        %v3853 = vadd.f32 %v3834, %v3852
        %v3854 = vpop.f32.mrf.mxu0
        %v3855 = vadd.f32 %v3836, %v3854
        %3856 = vmatmul.bf16.gmra.mxu0 %v3822
        %v3857 = vpop.f32.mrf.mxu0
        %v3858 = vadd.f32 %v3839, %v3857
        %v3859 = vpop.f32.mrf.mxu0
        %v3860 = vadd.f32 %v3841, %v3859
        %3861 = vdwg.mxu0
        %3862 = vmatpush.bf16.msra.mxu0 %v3785
        %3863 = vmatpush.bf16.msra.mxu0 %v3783
        %3864 = vmatpush.bf16.msra.mxu0 %v3781
        %3865 = vmatpush.bf16.msra.mxu0 %v3779
        %3866 = vmatpush.bf16.msra.mxu0 %v3777
        %3867 = vmatpush.bf16.msra.mxu0 %v3775
        %3868 = vmatpush.bf16.msra.mxu0 %v3773
        %3869 = vmatpush.bf16.msra.mxu0 %v3771
        %3870 = vmatmul.bf16.gmra.mxu0 %v3692
        %v3871 = vpop.f32.mrf.mxu0
        %v3872 = vadd.f32 0.0, %v3871
        %v3873 = vpop.f32.mrf.mxu0
        %v3874 = vadd.f32 0.0, %v3873
        %3875 = vmatmul.bf16.gmra.mxu0 %v3694
        %v3876 = vpop.f32.mrf.mxu0
        %v3877 = vadd.f32 0.0, %v3876
        %v3878 = vpop.f32.mrf.mxu0
        %v3879 = vadd.f32 0.0, %v3878
        %3880 = vdwg.mxu0
        %3881 = vmatpush.bf16.msra.mxu0 0
        %3882 = vmatpush.bf16.msra.mxu0 0
        %3883 = vmatpush.bf16.msra.mxu0 0
        %3884 = vmatpush.bf16.msra.mxu0 0
        %3885 = vmatpush.bf16.msra.mxu0 %v3793
        %3886 = vmatpush.bf16.msra.mxu0 %v3791
        %3887 = vmatpush.bf16.msra.mxu0 %v3789
        %3888 = vmatpush.bf16.msra.mxu0 %v3787
        %3889 = vmatmul.bf16.gmra.mxu0 %v3819
        %v3890 = vpop.f32.mrf.mxu0
        %v3891 = vadd.f32 %v3872, %v3890
        %v3892 = vpop.f32.mrf.mxu0
        %v3893 = vadd.f32 %v3874, %v3892
        %3894 = vmatmul.bf16.gmra.mxu0 %v3822
        %v3895 = vpop.f32.mrf.mxu0
        %v3896 = vadd.f32 %v3877, %v3895
        %v3897 = vpop.f32.mrf.mxu0
        %v3898 = vadd.f32 %v3879, %v3897
        %3899 = vdwg.mxu0
        %v3900 = vadd.f32 %v3642, %v3853
        %v3901 = vadd.f32 %v3643, %v3891
        %v3902 = vadd.f32 %v3644, %v3855
        %v3903 = vadd.f32 %v3645, %v3893
        %v3904 = vadd.f32 %v3646, %v3858
        %v3905 = vadd.f32 %v3647, %v3896
        %v3906 = vadd.f32 %v3648, %v3860
        %v3907 = vadd.f32 %v3649, %v3898
        %s3908 = scalar_lea.vmem [#allocation2], 32
        %v3909 = vld [vmem:[%s3908] sm:$0xff]
        %v3910 = vld [vmem:[%s3908 + $0x10] sm:$0xff]
        %v3911 = vld [vmem:[%s3908 + $0x20] sm:$0xff]
        %v3912 = vld [vmem:[%s3908 + $0x30] sm:$0xff]
        %s3913 = scalar_lea.vmem %s3, 768
        %v3914 = vld [vmem:[%s3913] sm:$0xff]
        %v3915 = vld [vmem:[%s3913 + $0x8] sm:$0xff]
        %v3916 = vld [vmem:[%s3913 + $0x10] sm:$0xff]
        %v3917 = vld [vmem:[%s3913 + $0x18] sm:$0xff]
        %v3918 = vld [vmem:[%s3913 + $0x20] sm:$0xff]
        %v3919 = vld [vmem:[%s3913 + $0x28] sm:$0xff]
        %v3920 = vld [vmem:[%s3913 + $0x30] sm:$0xff]
        %v3921 = vld [vmem:[%s3913 + $0x38] sm:$0xff]
        %v3922 = vld [vmem:[%s3913 + $0x40] sm:$0xff]
        %v3923 = vld [vmem:[%s3913 + $0x48] sm:$0xff]
        %v3924 = vld [vmem:[%s3913 + $0x50] sm:$0xff]
        %v3925 = vld [vmem:[%s3913 + $0x58] sm:$0xff]
        %v3926 = vld [vmem:[%s3913 + $0x60] sm:$0xff]
        %v3927 = vld [vmem:[%s3913 + $0x68] sm:$0xff]
        %v3928 = vld [vmem:[%s3913 + $0x70] sm:$0xff]
        %v3929 = vld [vmem:[%s3913 + $0x78] sm:$0xff]
        %v3930 = vld [vmem:[%s3913 + $0x80] sm:$0xff]
        %v3931 = vld [vmem:[%s3913 + $0x88] sm:$0xff]
        %v3932 = vld [vmem:[%s3913 + $0x90] sm:$0xff]
        %v3933 = vld [vmem:[%s3913 + $0x98] sm:$0xff]
        %v3934 = vld [vmem:[%s3913 + $0xa0] sm:$0xff]
        %v3935 = vld [vmem:[%s3913 + $0xa8] sm:$0xff]
        %v3936 = vld [vmem:[%s3913 + $0xb0] sm:$0xff]
        %v3937 = vld [vmem:[%s3913 + $0xb8] sm:$0xff]
        %v3942 = vunpack.c.l.b16 %v3909
        %v3943 = vunpack.c.h.b16 %v3909
        %v3944 = vunpack.c.l.b16 %v3910
        %v3945 = vunpack.c.h.b16 %v3910
        %v3946 = vunpack.c.l.b16 %v3911
        %v3947 = vunpack.c.h.b16 %v3911
        %v3948 = vunpack.c.l.b16 %v3912
        %v3949 = vunpack.c.h.b16 %v3912
        %v3950 = vpack.c.b16 %v3944, %v3942
        %v3951 = vpack.c.b16 %v3945, %v3943
        %v3952 = vpack.c.b16 %v3948, %v3946
        %v3953 = vpack.c.b16 %v3949, %v3947
        %v3980 = vunpack.c.l.b16 %v3914
        %v3981 = vunpack.c.h.b16 %v3914
        %v3982 = vunpack.c.l.b16 %v3915
        %v3983 = vunpack.c.h.b16 %v3915
        %v3984 = vunpack.c.l.b16 %v3916
        %v3985 = vunpack.c.h.b16 %v3916
        %v3986 = vunpack.c.l.b16 %v3917
        %v3987 = vunpack.c.h.b16 %v3917
        %v3988 = vunpack.c.l.b16 %v3918
        %v3989 = vunpack.c.h.b16 %v3918
        %v3990 = vunpack.c.l.b16 %v3919
        %v3991 = vunpack.c.h.b16 %v3919
        %v3992 = vunpack.c.l.b16 %v3920
        %v3993 = vunpack.c.h.b16 %v3920
        %v3994 = vunpack.c.l.b16 %v3921
        %v3995 = vunpack.c.h.b16 %v3921
        %v3996 = vunpack.c.l.b16 %v3922
        %v3997 = vunpack.c.h.b16 %v3922
        %v3998 = vunpack.c.l.b16 %v3923
        %v3999 = vunpack.c.h.b16 %v3923
        %v4000 = vunpack.c.l.b16 %v3924
        %v4001 = vunpack.c.h.b16 %v3924
        %v4002 = vunpack.c.l.b16 %v3925
        %v4003 = vunpack.c.h.b16 %v3925
        %v4004 = vunpack.c.l.b16 %v3926
        %v4005 = vunpack.c.h.b16 %v3926
        %v4006 = vunpack.c.l.b16 %v3927
        %v4007 = vunpack.c.h.b16 %v3927
        %v4008 = vunpack.c.l.b16 %v3928
        %v4009 = vunpack.c.h.b16 %v3928
        %v4010 = vunpack.c.l.b16 %v3929
        %v4011 = vunpack.c.h.b16 %v3929
        %v4012 = vunpack.c.l.b16 %v3930
        %v4013 = vunpack.c.h.b16 %v3930
        %v4014 = vunpack.c.l.b16 %v3931
        %v4015 = vunpack.c.h.b16 %v3931
        %v4016 = vunpack.c.l.b16 %v3932
        %v4017 = vunpack.c.h.b16 %v3932
        %v4018 = vunpack.c.l.b16 %v3933
        %v4019 = vunpack.c.h.b16 %v3933
        %v4020 = vunpack.c.l.b16 %v3934
        %v4021 = vunpack.c.h.b16 %v3934
        %v4022 = vunpack.c.l.b16 %v3935
        %v4023 = vunpack.c.h.b16 %v3935
        %v4024 = vunpack.c.l.b16 %v3936
        %v4025 = vunpack.c.h.b16 %v3936
        %v4026 = vunpack.c.l.b16 %v3937
        %v4027 = vunpack.c.h.b16 %v3937
        %v4028 = vpack.c.b16 %v3982, %v3980
        %v4029 = vpack.c.b16 %v3983, %v3981
        %v4030 = vpack.c.b16 %v3986, %v3984
        %v4031 = vpack.c.b16 %v3987, %v3985
        %v4032 = vpack.c.b16 %v3990, %v3988
        %v4033 = vpack.c.b16 %v3991, %v3989
        %v4034 = vpack.c.b16 %v3994, %v3992
        %v4035 = vpack.c.b16 %v3995, %v3993
        %v4036 = vpack.c.b16 %v3998, %v3996
        %v4037 = vpack.c.b16 %v3999, %v3997
        %v4038 = vpack.c.b16 %v4002, %v4000
        %v4039 = vpack.c.b16 %v4003, %v4001
        %v4040 = vpack.c.b16 %v4006, %v4004
        %v4041 = vpack.c.b16 %v4007, %v4005
        %v4042 = vpack.c.b16 %v4010, %v4008
        %v4043 = vpack.c.b16 %v4011, %v4009
        %v4044 = vpack.c.b16 %v4014, %v4012
        %v4045 = vpack.c.b16 %v4015, %v4013
        %v4046 = vpack.c.b16 %v4018, %v4016
        %v4047 = vpack.c.b16 %v4019, %v4017
        %v4048 = vpack.c.b16 %v4022, %v4020
        %v4049 = vpack.c.b16 %v4023, %v4021
        %v4050 = vpack.c.b16 %v4026, %v4024
        %v4051 = vpack.c.b16 %v4027, %v4025
        %v4077 = vsel %vm1842, %v3951, 0
        %v4080 = vsel %vm1842, %v3953, 0
        %4082 = vmatpush.bf16.msra.mxu0 %v4042
        %4083 = vmatpush.bf16.msra.mxu0 %v4040
        %4084 = vmatpush.bf16.msra.mxu0 %v4038
        %4085 = vmatpush.bf16.msra.mxu0 %v4036
        %4086 = vmatpush.bf16.msra.mxu0 %v4034
        %4087 = vmatpush.bf16.msra.mxu0 %v4032
        %4088 = vmatpush.bf16.msra.mxu0 %v4030
        %4089 = vmatpush.bf16.msra.mxu0 %v4028
        %4090 = vmatmul.bf16.gmra.mxu0 %v3950
        %v4091 = vpop.f32.mrf.mxu0
        %v4092 = vadd.f32 0.0, %v4091
        %v4093 = vpop.f32.mrf.mxu0
        %v4094 = vadd.f32 0.0, %v4093
        %4095 = vmatmul.bf16.gmra.mxu0 %v3952
        %v4096 = vpop.f32.mrf.mxu0
        %v4097 = vadd.f32 0.0, %v4096
        %v4098 = vpop.f32.mrf.mxu0
        %v4099 = vadd.f32 0.0, %v4098
        %4100 = vdwg.mxu0
        %4101 = vmatpush.bf16.msra.mxu0 0
        %4102 = vmatpush.bf16.msra.mxu0 0
        %4103 = vmatpush.bf16.msra.mxu0 0
        %4104 = vmatpush.bf16.msra.mxu0 0
        %4105 = vmatpush.bf16.msra.mxu0 %v4050
        %4106 = vmatpush.bf16.msra.mxu0 %v4048
        %4107 = vmatpush.bf16.msra.mxu0 %v4046
        %4108 = vmatpush.bf16.msra.mxu0 %v4044
        %4109 = vmatmul.bf16.gmra.mxu0 %v4077
        %v4110 = vpop.f32.mrf.mxu0
        %v4111 = vadd.f32 %v4092, %v4110
        %v4112 = vpop.f32.mrf.mxu0
        %v4113 = vadd.f32 %v4094, %v4112
        %4114 = vmatmul.bf16.gmra.mxu0 %v4080
        %v4115 = vpop.f32.mrf.mxu0
        %v4116 = vadd.f32 %v4097, %v4115
        %v4117 = vpop.f32.mrf.mxu0
        %v4118 = vadd.f32 %v4099, %v4117
        %4119 = vdwg.mxu0
        %4120 = vmatpush.bf16.msra.mxu0 %v4043
        %4121 = vmatpush.bf16.msra.mxu0 %v4041
        %4122 = vmatpush.bf16.msra.mxu0 %v4039
        %4123 = vmatpush.bf16.msra.mxu0 %v4037
        %4124 = vmatpush.bf16.msra.mxu0 %v4035
        %4125 = vmatpush.bf16.msra.mxu0 %v4033
        %4126 = vmatpush.bf16.msra.mxu0 %v4031
        %4127 = vmatpush.bf16.msra.mxu0 %v4029
        %4128 = vmatmul.bf16.gmra.mxu0 %v3950
        %v4129 = vpop.f32.mrf.mxu0
        %v4130 = vadd.f32 0.0, %v4129
        %v4131 = vpop.f32.mrf.mxu0
        %v4132 = vadd.f32 0.0, %v4131
        %4133 = vmatmul.bf16.gmra.mxu0 %v3952
        %v4134 = vpop.f32.mrf.mxu0
        %v4135 = vadd.f32 0.0, %v4134
        %v4136 = vpop.f32.mrf.mxu0
        %v4137 = vadd.f32 0.0, %v4136
        %4138 = vdwg.mxu0
        %4139 = vmatpush.bf16.msra.mxu0 0
        %4140 = vmatpush.bf16.msra.mxu0 0
        %4141 = vmatpush.bf16.msra.mxu0 0
        %4142 = vmatpush.bf16.msra.mxu0 0
        %4143 = vmatpush.bf16.msra.mxu0 %v4051
        %4144 = vmatpush.bf16.msra.mxu0 %v4049
        %4145 = vmatpush.bf16.msra.mxu0 %v4047
        %4146 = vmatpush.bf16.msra.mxu0 %v4045
        %4147 = vmatmul.bf16.gmra.mxu0 %v4077
        %v4148 = vpop.f32.mrf.mxu0
        %v4149 = vadd.f32 %v4130, %v4148
        %v4150 = vpop.f32.mrf.mxu0
        %v4151 = vadd.f32 %v4132, %v4150
        %4152 = vmatmul.bf16.gmra.mxu0 %v4080
        %v4153 = vpop.f32.mrf.mxu0
        %v4154 = vadd.f32 %v4135, %v4153
        %v4155 = vpop.f32.mrf.mxu0
        %v4156 = vadd.f32 %v4137, %v4155
        %4157 = vdwg.mxu0
        %v4158 = vadd.f32 %v3900, %v4111
        %v4159 = vadd.f32 %v3901, %v4149
        %v4160 = vadd.f32 %v3902, %v4113
        %v4161 = vadd.f32 %v3903, %v4151
        %v4162 = vadd.f32 %v3904, %v4116
        %v4163 = vadd.f32 %v3905, %v4154
        %v4164 = vadd.f32 %v3906, %v4118
        %v4165 = vadd.f32 %v3907, %v4156
        %v4166 = vmax.f32 %v4158, %v4159
        %v4167 = vmax.f32 %v4160, %v4161
        %v4168 = vmax.f32 %v4162, %v4163
        %v4169 = vmax.f32 %v4164, %v4165
        %4170 = vmatpush.bf16.msra.mxu0 %v3056
        %4171 = vmatpush.bf16.msra.mxu0 %v3054
        %4172 = vmatpush.bf16.msra.mxu0 %v3052
        %4173 = vmatpush.bf16.msra.mxu0 %v3050
        %4174 = vmatpush.bf16.msra.mxu0 %v3048
        %4175 = vmatpush.bf16.msra.mxu0 %v3046
        %4176 = vmatpush.bf16.msra.mxu0 %v3044
        %4177 = vmatpush.bf16.msra.mxu0 %v3042
        %4178 = vmatmul.bf16.gmra.mxu0 %v3434
        %v4179 = vpop.f32.mrf.mxu0
        %v4180 = vadd.f32 0.0, %v4179
        %v4181 = vpop.f32.mrf.mxu0
        %v4182 = vadd.f32 0.0, %v4181
        %4183 = vmatmul.bf16.gmra.mxu0 %v3436
        %v4184 = vpop.f32.mrf.mxu0
        %v4185 = vadd.f32 0.0, %v4184
        %v4186 = vpop.f32.mrf.mxu0
        %v4187 = vadd.f32 0.0, %v4186
        %4188 = vdwg.mxu0
        %4189 = vmatpush.bf16.msra.mxu0 0
        %4190 = vmatpush.bf16.msra.mxu0 0
        %4191 = vmatpush.bf16.msra.mxu0 0
        %4192 = vmatpush.bf16.msra.mxu0 0
        %4193 = vmatpush.bf16.msra.mxu0 %v3064
        %4194 = vmatpush.bf16.msra.mxu0 %v3062
        %4195 = vmatpush.bf16.msra.mxu0 %v3060
        %4196 = vmatpush.bf16.msra.mxu0 %v3058
        %4197 = vmatmul.bf16.gmra.mxu0 %v3561
        %v4198 = vpop.f32.mrf.mxu0
        %v4199 = vadd.f32 %v4180, %v4198
        %v4200 = vpop.f32.mrf.mxu0
        %v4201 = vadd.f32 %v4182, %v4200
        %4202 = vmatmul.bf16.gmra.mxu0 %v3564
        %v4203 = vpop.f32.mrf.mxu0
        %v4204 = vadd.f32 %v4185, %v4203
        %v4205 = vpop.f32.mrf.mxu0
        %v4206 = vadd.f32 %v4187, %v4205
        %4207 = vdwg.mxu0
        %4208 = vmatpush.bf16.msra.mxu0 %v3057
        %4209 = vmatpush.bf16.msra.mxu0 %v3055
        %4210 = vmatpush.bf16.msra.mxu0 %v3053
        %4211 = vmatpush.bf16.msra.mxu0 %v3051
        %4212 = vmatpush.bf16.msra.mxu0 %v3049
        %4213 = vmatpush.bf16.msra.mxu0 %v3047
        %4214 = vmatpush.bf16.msra.mxu0 %v3045
        %4215 = vmatpush.bf16.msra.mxu0 %v3043
        %4216 = vmatmul.bf16.gmra.mxu0 %v3434
        %v4217 = vpop.f32.mrf.mxu0
        %v4218 = vadd.f32 0.0, %v4217
        %v4219 = vpop.f32.mrf.mxu0
        %v4220 = vadd.f32 0.0, %v4219
        %4221 = vmatmul.bf16.gmra.mxu0 %v3436
        %v4222 = vpop.f32.mrf.mxu0
        %v4223 = vadd.f32 0.0, %v4222
        %v4224 = vpop.f32.mrf.mxu0
        %v4225 = vadd.f32 0.0, %v4224
        %4226 = vdwg.mxu0
        %4227 = vmatpush.bf16.msra.mxu0 0
        %4228 = vmatpush.bf16.msra.mxu0 0
        %4229 = vmatpush.bf16.msra.mxu0 0
        %4230 = vmatpush.bf16.msra.mxu0 0
        %4231 = vmatpush.bf16.msra.mxu0 %v3065
        %4232 = vmatpush.bf16.msra.mxu0 %v3063
        %4233 = vmatpush.bf16.msra.mxu0 %v3061
        %4234 = vmatpush.bf16.msra.mxu0 %v3059
        %4235 = vmatmul.bf16.gmra.mxu0 %v3561
        %v4236 = vpop.f32.mrf.mxu0
        %v4237 = vadd.f32 %v4218, %v4236
        %v4238 = vpop.f32.mrf.mxu0
        %v4239 = vadd.f32 %v4220, %v4238
        %4240 = vmatmul.bf16.gmra.mxu0 %v3564
        %v4241 = vpop.f32.mrf.mxu0
        %v4242 = vadd.f32 %v4223, %v4241
        %v4243 = vpop.f32.mrf.mxu0
        %v4244 = vadd.f32 %v4225, %v4243
        %4245 = vdwg.mxu0
        %4246 = vmatpush.bf16.msra.mxu0 %v3276
        %4247 = vmatpush.bf16.msra.mxu0 %v3274
        %4248 = vmatpush.bf16.msra.mxu0 %v3272
        %4249 = vmatpush.bf16.msra.mxu0 %v3270
        %4250 = vmatpush.bf16.msra.mxu0 %v3268
        %4251 = vmatpush.bf16.msra.mxu0 %v3266
        %4252 = vmatpush.bf16.msra.mxu0 %v3264
        %4253 = vmatpush.bf16.msra.mxu0 %v3262
        %4254 = vmatmul.bf16.gmra.mxu0 %v2964
        %v4255 = vpop.f32.mrf.mxu0
        %v4256 = vadd.f32 %v4199, %v4255
        %v4257 = vpop.f32.mrf.mxu0
        %v4258 = vadd.f32 %v4201, %v4257
        %4259 = vmatmul.bf16.gmra.mxu0 %v2966
        %v4260 = vpop.f32.mrf.mxu0
        %v4261 = vadd.f32 %v4204, %v4260
        %v4262 = vpop.f32.mrf.mxu0
        %v4263 = vadd.f32 %v4206, %v4262
        %4264 = vdwg.mxu0
        %4265 = vmatpush.bf16.msra.mxu0 0
        %4266 = vmatpush.bf16.msra.mxu0 0
        %4267 = vmatpush.bf16.msra.mxu0 0
        %4268 = vmatpush.bf16.msra.mxu0 0
        %4269 = vmatpush.bf16.msra.mxu0 %v3284
        %4270 = vmatpush.bf16.msra.mxu0 %v3282
        %4271 = vmatpush.bf16.msra.mxu0 %v3280
        %4272 = vmatpush.bf16.msra.mxu0 %v3278
        %4273 = vmatmul.bf16.gmra.mxu0 %v3091
        %v4274 = vpop.f32.mrf.mxu0
        %v4275 = vadd.f32 %v4256, %v4274
        %v4276 = vpop.f32.mrf.mxu0
        %v4277 = vadd.f32 %v4258, %v4276
        %4278 = vmatmul.bf16.gmra.mxu0 %v3094
        %v4279 = vpop.f32.mrf.mxu0
        %v4280 = vadd.f32 %v4261, %v4279
        %v4281 = vpop.f32.mrf.mxu0
        %v4282 = vadd.f32 %v4263, %v4281
        %4283 = vdwg.mxu0
        %4284 = vmatpush.bf16.msra.mxu0 %v3277
        %4285 = vmatpush.bf16.msra.mxu0 %v3275
        %4286 = vmatpush.bf16.msra.mxu0 %v3273
        %4287 = vmatpush.bf16.msra.mxu0 %v3271
        %4288 = vmatpush.bf16.msra.mxu0 %v3269
        %4289 = vmatpush.bf16.msra.mxu0 %v3267
        %4290 = vmatpush.bf16.msra.mxu0 %v3265
        %4291 = vmatpush.bf16.msra.mxu0 %v3263
        %4292 = vmatmul.bf16.gmra.mxu0 %v2964
        %v4293 = vpop.f32.mrf.mxu0
        %v4294 = vadd.f32 %v4237, %v4293
        %v4295 = vpop.f32.mrf.mxu0
        %v4296 = vadd.f32 %v4239, %v4295
        %4297 = vmatmul.bf16.gmra.mxu0 %v2966
        %v4298 = vpop.f32.mrf.mxu0
        %v4299 = vadd.f32 %v4242, %v4298
        %v4300 = vpop.f32.mrf.mxu0
        %v4301 = vadd.f32 %v4244, %v4300
        %4302 = vdwg.mxu0
        %4303 = vmatpush.bf16.msra.mxu0 0
        %4304 = vmatpush.bf16.msra.mxu0 0
        %4305 = vmatpush.bf16.msra.mxu0 0
        %4306 = vmatpush.bf16.msra.mxu0 0
        %4307 = vmatpush.bf16.msra.mxu0 %v3285
        %4308 = vmatpush.bf16.msra.mxu0 %v3283
        %4309 = vmatpush.bf16.msra.mxu0 %v3281
        %4310 = vmatpush.bf16.msra.mxu0 %v3279
        %4311 = vmatmul.bf16.gmra.mxu0 %v3091
        %v4312 = vpop.f32.mrf.mxu0
        %v4313 = vadd.f32 %v4294, %v4312
        %v4314 = vpop.f32.mrf.mxu0
        %v4315 = vadd.f32 %v4296, %v4314
        %4316 = vmatmul.bf16.gmra.mxu0 %v3094
        %v4317 = vpop.f32.mrf.mxu0
        %v4318 = vadd.f32 %v4299, %v4317
        %v4319 = vpop.f32.mrf.mxu0
        %v4320 = vadd.f32 %v4301, %v4319
        %4321 = vdwg.mxu0
        %4322 = vmatpush.bf16.msra.mxu0 %v3526
        %4323 = vmatpush.bf16.msra.mxu0 %v3524
        %4324 = vmatpush.bf16.msra.mxu0 %v3522
        %4325 = vmatpush.bf16.msra.mxu0 %v3520
        %4326 = vmatpush.bf16.msra.mxu0 %v3518
        %4327 = vmatpush.bf16.msra.mxu0 %v3516
        %4328 = vmatpush.bf16.msra.mxu0 %v3514
        %4329 = vmatpush.bf16.msra.mxu0 %v3512
        %4330 = vmatmul.bf16.gmra.mxu0 %v3692
        %v4331 = vpop.f32.mrf.mxu0
        %v4332 = vadd.f32 0.0, %v4331
        %v4333 = vpop.f32.mrf.mxu0
        %v4334 = vadd.f32 0.0, %v4333
        %4335 = vmatmul.bf16.gmra.mxu0 %v3694
        %v4336 = vpop.f32.mrf.mxu0
        %v4337 = vadd.f32 0.0, %v4336
        %v4338 = vpop.f32.mrf.mxu0
        %v4339 = vadd.f32 0.0, %v4338
        %4340 = vdwg.mxu0
        %4341 = vmatpush.bf16.msra.mxu0 0
        %4342 = vmatpush.bf16.msra.mxu0 0
        %4343 = vmatpush.bf16.msra.mxu0 0
        %4344 = vmatpush.bf16.msra.mxu0 0
        %4345 = vmatpush.bf16.msra.mxu0 %v3534
        %4346 = vmatpush.bf16.msra.mxu0 %v3532
        %4347 = vmatpush.bf16.msra.mxu0 %v3530
        %4348 = vmatpush.bf16.msra.mxu0 %v3528
        %4349 = vmatmul.bf16.gmra.mxu0 %v3819
        %v4350 = vpop.f32.mrf.mxu0
        %v4351 = vadd.f32 %v4332, %v4350
        %v4352 = vpop.f32.mrf.mxu0
        %v4353 = vadd.f32 %v4334, %v4352
        %4354 = vmatmul.bf16.gmra.mxu0 %v3822
        %v4355 = vpop.f32.mrf.mxu0
        %v4356 = vadd.f32 %v4337, %v4355
        %v4357 = vpop.f32.mrf.mxu0
        %v4358 = vadd.f32 %v4339, %v4357
        %4359 = vdwg.mxu0
        %4360 = vmatpush.bf16.msra.mxu0 %v3527
        %4361 = vmatpush.bf16.msra.mxu0 %v3525
        %4362 = vmatpush.bf16.msra.mxu0 %v3523
        %4363 = vmatpush.bf16.msra.mxu0 %v3521
        %4364 = vmatpush.bf16.msra.mxu0 %v3519
        %4365 = vmatpush.bf16.msra.mxu0 %v3517
        %4366 = vmatpush.bf16.msra.mxu0 %v3515
        %4367 = vmatpush.bf16.msra.mxu0 %v3513
        %4368 = vmatmul.bf16.gmra.mxu0 %v3692
        %v4369 = vpop.f32.mrf.mxu0
        %v4370 = vadd.f32 0.0, %v4369
        %v4371 = vpop.f32.mrf.mxu0
        %v4372 = vadd.f32 0.0, %v4371
        %4373 = vmatmul.bf16.gmra.mxu0 %v3694
        %v4374 = vpop.f32.mrf.mxu0
        %v4375 = vadd.f32 0.0, %v4374
        %v4376 = vpop.f32.mrf.mxu0
        %v4377 = vadd.f32 0.0, %v4376
        %4378 = vdwg.mxu0
        %4379 = vmatpush.bf16.msra.mxu0 0
        %4380 = vmatpush.bf16.msra.mxu0 0
        %4381 = vmatpush.bf16.msra.mxu0 0
        %4382 = vmatpush.bf16.msra.mxu0 0
        %4383 = vmatpush.bf16.msra.mxu0 %v3535
        %4384 = vmatpush.bf16.msra.mxu0 %v3533
        %4385 = vmatpush.bf16.msra.mxu0 %v3531
        %4386 = vmatpush.bf16.msra.mxu0 %v3529
        %4387 = vmatmul.bf16.gmra.mxu0 %v3819
        %v4388 = vpop.f32.mrf.mxu0
        %v4389 = vadd.f32 %v4370, %v4388
        %v4390 = vpop.f32.mrf.mxu0
        %v4391 = vadd.f32 %v4372, %v4390
        %4392 = vmatmul.bf16.gmra.mxu0 %v3822
        %v4393 = vpop.f32.mrf.mxu0
        %v4394 = vadd.f32 %v4375, %v4393
        %v4395 = vpop.f32.mrf.mxu0
        %v4396 = vadd.f32 %v4377, %v4395
        %4397 = vdwg.mxu0
        %v4398 = vadd.f32 %v4275, %v4351
        %v4399 = vadd.f32 %v4313, %v4389
        %v4400 = vadd.f32 %v4277, %v4353
        %v4401 = vadd.f32 %v4315, %v4391
        %v4402 = vadd.f32 %v4280, %v4356
        %v4403 = vadd.f32 %v4318, %v4394
        %v4404 = vadd.f32 %v4282, %v4358
        %v4405 = vadd.f32 %v4320, %v4396
        %4406 = vmatpush.bf16.msra.mxu0 %v3784
        %4407 = vmatpush.bf16.msra.mxu0 %v3782
        %4408 = vmatpush.bf16.msra.mxu0 %v3780
        %4409 = vmatpush.bf16.msra.mxu0 %v3778
        %4410 = vmatpush.bf16.msra.mxu0 %v3776
        %4411 = vmatpush.bf16.msra.mxu0 %v3774
        %4412 = vmatpush.bf16.msra.mxu0 %v3772
        %4413 = vmatpush.bf16.msra.mxu0 %v3770
        %4414 = vmatmul.bf16.gmra.mxu0 %v3950
        %v4415 = vpop.f32.mrf.mxu0
        %v4416 = vadd.f32 0.0, %v4415
        %v4417 = vpop.f32.mrf.mxu0
        %v4418 = vadd.f32 0.0, %v4417
        %4419 = vmatmul.bf16.gmra.mxu0 %v3952
        %v4420 = vpop.f32.mrf.mxu0
        %v4421 = vadd.f32 0.0, %v4420
        %v4422 = vpop.f32.mrf.mxu0
        %v4423 = vadd.f32 0.0, %v4422
        %4424 = vdwg.mxu0
        %4425 = vmatpush.bf16.msra.mxu0 0
        %4426 = vmatpush.bf16.msra.mxu0 0
        %4427 = vmatpush.bf16.msra.mxu0 0
        %4428 = vmatpush.bf16.msra.mxu0 0
        %4429 = vmatpush.bf16.msra.mxu0 %v3792
        %4430 = vmatpush.bf16.msra.mxu0 %v3790
        %4431 = vmatpush.bf16.msra.mxu0 %v3788
        %4432 = vmatpush.bf16.msra.mxu0 %v3786
        %4433 = vmatmul.bf16.gmra.mxu0 %v4077
        %v4434 = vpop.f32.mrf.mxu0
        %v4435 = vadd.f32 %v4416, %v4434
        %v4436 = vpop.f32.mrf.mxu0
        %v4437 = vadd.f32 %v4418, %v4436
        %4438 = vmatmul.bf16.gmra.mxu0 %v4080
        %v4439 = vpop.f32.mrf.mxu0
        %v4440 = vadd.f32 %v4421, %v4439
        %v4441 = vpop.f32.mrf.mxu0
        %v4442 = vadd.f32 %v4423, %v4441
        %4443 = vdwg.mxu0
        %4444 = vmatpush.bf16.msra.mxu0 %v3785
        %4445 = vmatpush.bf16.msra.mxu0 %v3783
        %4446 = vmatpush.bf16.msra.mxu0 %v3781
        %4447 = vmatpush.bf16.msra.mxu0 %v3779
        %4448 = vmatpush.bf16.msra.mxu0 %v3777
        %4449 = vmatpush.bf16.msra.mxu0 %v3775
        %4450 = vmatpush.bf16.msra.mxu0 %v3773
        %4451 = vmatpush.bf16.msra.mxu0 %v3771
        %4452 = vmatmul.bf16.gmra.mxu0 %v3950
        %v4453 = vpop.f32.mrf.mxu0
        %v4454 = vadd.f32 0.0, %v4453
        %v4455 = vpop.f32.mrf.mxu0
        %v4456 = vadd.f32 0.0, %v4455
        %4457 = vmatmul.bf16.gmra.mxu0 %v3952
        %v4458 = vpop.f32.mrf.mxu0
        %v4459 = vadd.f32 0.0, %v4458
        %v4460 = vpop.f32.mrf.mxu0
        %v4461 = vadd.f32 0.0, %v4460
        %4462 = vdwg.mxu0
        %4463 = vmatpush.bf16.msra.mxu0 0
        %4464 = vmatpush.bf16.msra.mxu0 0
        %4465 = vmatpush.bf16.msra.mxu0 0
        %4466 = vmatpush.bf16.msra.mxu0 0
        %4467 = vmatpush.bf16.msra.mxu0 %v3793
        %4468 = vmatpush.bf16.msra.mxu0 %v3791
        %4469 = vmatpush.bf16.msra.mxu0 %v3789
        %4470 = vmatpush.bf16.msra.mxu0 %v3787
        %4471 = vmatmul.bf16.gmra.mxu0 %v4077
        %v4472 = vpop.f32.mrf.mxu0
        %v4473 = vadd.f32 %v4454, %v4472
        %v4474 = vpop.f32.mrf.mxu0
        %v4475 = vadd.f32 %v4456, %v4474
        %4476 = vmatmul.bf16.gmra.mxu0 %v4080
        %v4477 = vpop.f32.mrf.mxu0
        %v4478 = vadd.f32 %v4459, %v4477
        %v4479 = vpop.f32.mrf.mxu0
        %v4480 = vadd.f32 %v4461, %v4479
        %4481 = vdwg.mxu0
        %v4482 = vadd.f32 %v4398, %v4435
        %v4483 = vadd.f32 %v4399, %v4473
        %v4484 = vadd.f32 %v4400, %v4437
        %v4485 = vadd.f32 %v4401, %v4475
        %v4486 = vadd.f32 %v4402, %v4440
        %v4487 = vadd.f32 %v4403, %v4478
        %v4488 = vadd.f32 %v4404, %v4442
        %v4489 = vadd.f32 %v4405, %v4480
        %s4490 = scalar_lea.vmem [#allocation2], 40
        %v4491 = vld [vmem:[%s4490] sm:$0xff]
        %v4492 = vld [vmem:[%s4490 + $0x10] sm:$0xff]
        %v4493 = vld [vmem:[%s4490 + $0x20] sm:$0xff]
        %v4494 = vld [vmem:[%s4490 + $0x30] sm:$0xff]
        %v4499 = vunpack.c.l.b16 %v4491
        %v4500 = vunpack.c.h.b16 %v4491
        %v4501 = vunpack.c.l.b16 %v4492
        %v4502 = vunpack.c.h.b16 %v4492
        %v4503 = vunpack.c.l.b16 %v4493
        %v4504 = vunpack.c.h.b16 %v4493
        %v4505 = vunpack.c.l.b16 %v4494
        %v4506 = vunpack.c.h.b16 %v4494
        %v4507 = vpack.c.b16 %v4501, %v4499
        %v4508 = vpack.c.b16 %v4502, %v4500
        %v4509 = vpack.c.b16 %v4505, %v4503
        %v4510 = vpack.c.b16 %v4506, %v4504
        %v4514 = vsel %vm1842, %v4508, 0
        %v4517 = vsel %vm1842, %v4510, 0
        %4519 = vmatpush.bf16.msra.mxu0 %v4042
        %4520 = vmatpush.bf16.msra.mxu0 %v4040
        %4521 = vmatpush.bf16.msra.mxu0 %v4038
        %4522 = vmatpush.bf16.msra.mxu0 %v4036
        %4523 = vmatpush.bf16.msra.mxu0 %v4034
        %4524 = vmatpush.bf16.msra.mxu0 %v4032
        %4525 = vmatpush.bf16.msra.mxu0 %v4030
        %4526 = vmatpush.bf16.msra.mxu0 %v4028
        %4527 = vmatmul.bf16.gmra.mxu0 %v4507
        %v4528 = vpop.f32.mrf.mxu0
        %v4529 = vadd.f32 0.0, %v4528
        %v4530 = vpop.f32.mrf.mxu0
        %v4531 = vadd.f32 0.0, %v4530
        %4532 = vmatmul.bf16.gmra.mxu0 %v4509
        %v4533 = vpop.f32.mrf.mxu0
        %v4534 = vadd.f32 0.0, %v4533
        %v4535 = vpop.f32.mrf.mxu0
        %v4536 = vadd.f32 0.0, %v4535
        %4537 = vdwg.mxu0
        %4538 = vmatpush.bf16.msra.mxu0 0
        %4539 = vmatpush.bf16.msra.mxu0 0
        %4540 = vmatpush.bf16.msra.mxu0 0
        %4541 = vmatpush.bf16.msra.mxu0 0
        %4542 = vmatpush.bf16.msra.mxu0 %v4050
        %4543 = vmatpush.bf16.msra.mxu0 %v4048
        %4544 = vmatpush.bf16.msra.mxu0 %v4046
        %4545 = vmatpush.bf16.msra.mxu0 %v4044
        %4546 = vmatmul.bf16.gmra.mxu0 %v4514
        %v4547 = vpop.f32.mrf.mxu0
        %v4548 = vadd.f32 %v4529, %v4547
        %v4549 = vpop.f32.mrf.mxu0
        %v4550 = vadd.f32 %v4531, %v4549
        %4551 = vmatmul.bf16.gmra.mxu0 %v4517
        %v4552 = vpop.f32.mrf.mxu0
        %v4553 = vadd.f32 %v4534, %v4552
        %v4554 = vpop.f32.mrf.mxu0
        %v4555 = vadd.f32 %v4536, %v4554
        %4556 = vdwg.mxu0
        %4557 = vmatpush.bf16.msra.mxu0 %v4043
        %4558 = vmatpush.bf16.msra.mxu0 %v4041
        %4559 = vmatpush.bf16.msra.mxu0 %v4039
        %4560 = vmatpush.bf16.msra.mxu0 %v4037
        %4561 = vmatpush.bf16.msra.mxu0 %v4035
        %4562 = vmatpush.bf16.msra.mxu0 %v4033
        %4563 = vmatpush.bf16.msra.mxu0 %v4031
        %4564 = vmatpush.bf16.msra.mxu0 %v4029
        %4565 = vmatmul.bf16.gmra.mxu0 %v4507
        %v4566 = vpop.f32.mrf.mxu0
        %v4567 = vadd.f32 0.0, %v4566
        %v4568 = vpop.f32.mrf.mxu0
        %v4569 = vadd.f32 0.0, %v4568
        %4570 = vmatmul.bf16.gmra.mxu0 %v4509
        %v4571 = vpop.f32.mrf.mxu0
        %v4572 = vadd.f32 0.0, %v4571
        %v4573 = vpop.f32.mrf.mxu0
        %v4574 = vadd.f32 0.0, %v4573
        %4575 = vdwg.mxu0
        %4576 = vmatpush.bf16.msra.mxu0 0
        %4577 = vmatpush.bf16.msra.mxu0 0
        %4578 = vmatpush.bf16.msra.mxu0 0
        %4579 = vmatpush.bf16.msra.mxu0 0
        %4580 = vmatpush.bf16.msra.mxu0 %v4051
        %4581 = vmatpush.bf16.msra.mxu0 %v4049
        %4582 = vmatpush.bf16.msra.mxu0 %v4047
        %4583 = vmatpush.bf16.msra.mxu0 %v4045
        %4584 = vmatmul.bf16.gmra.mxu0 %v4514
        %v4585 = vpop.f32.mrf.mxu0
        %v4586 = vadd.f32 %v4567, %v4585
        %v4587 = vpop.f32.mrf.mxu0
        %v4588 = vadd.f32 %v4569, %v4587
        %4589 = vmatmul.bf16.gmra.mxu0 %v4517
        %v4590 = vpop.f32.mrf.mxu0
        %v4591 = vadd.f32 %v4572, %v4590
        %v4592 = vpop.f32.mrf.mxu0
        %v4593 = vadd.f32 %v4574, %v4592
        %4594 = vdwg.mxu0
        %v4595 = vadd.f32 %v4482, %v4548
        %v4596 = vadd.f32 %v4483, %v4586
        %v4597 = vadd.f32 %v4484, %v4550
        %v4598 = vadd.f32 %v4485, %v4588
        %v4599 = vadd.f32 %v4486, %v4553
        %v4600 = vadd.f32 %v4487, %v4591
        %v4601 = vadd.f32 %v4488, %v4555
        %v4602 = vadd.f32 %v4489, %v4593
        %v4603 = vmax.f32 %v4595, %v4596
        %v4604 = vmax.f32 %v4597, %v4598
        %v4605 = vmax.f32 %v4599, %v4600
        %v4606 = vmax.f32 %v4601, %v4602
        %v4607 = vmax.f32 %v4166, %v4603
        %v4608 = vmax.f32 %v4167, %v4604
        %v4609 = vmax.f32 %v4168, %v4605
        %v4610 = vmax.f32 %v4169, %v4606
        %v4611 = vld [vmem:[%s4] sm:$0x1]
        %v4613 = vperm.slane %v4611, 0
        %v4615 = vadd.f32 %v4607, %v4613
        %v4616 = vadd.f32 %v4608, %v4613
        %v4617 = vadd.f32 %v4609, %v4613
        %v4618 = vadd.f32 %v4610, %v4613
        %v4619 = vmax.f32 %v4615, 0.0
        %v4620 = vmax.f32 %v4616, 0.0
        %v4621 = vmax.f32 %v4617, 0.0
        %v4622 = vmax.f32 %v4618, 0.0
        %v4623 = vld [vmem:[%s5] sm:$0xff]
        %v4624 = vld [vmem:[%s5 + $0x8] sm:$0xff]
        %v4625 = vld [vmem:[%s5 + $0x10] sm:$0xff]
        %v4626 = vld [vmem:[%s5 + $0x18] sm:$0xff]
        %v4627 = vld [vmem:[%s5 + $0x20] sm:$0xff]
        %v4628 = vld [vmem:[%s5 + $0x28] sm:$0xff]
        %v4629 = vld [vmem:[%s5 + $0x30] sm:$0xff]
        %v4630 = vld [vmem:[%s5 + $0x38] sm:$0xff]
        %v4631 = vld [vmem:[%s5 + $0x40] sm:$0xff]
        %v4632 = vld [vmem:[%s5 + $0x48] sm:$0xff]
        %v4633 = vld [vmem:[%s5 + $0x50] sm:$0xff]
        %v4634 = vld [vmem:[%s5 + $0x58] sm:$0xff]
        %v4635 = vld [vmem:[%s5 + $0x60] sm:$0xff]
        %v4636 = vld [vmem:[%s5 + $0x68] sm:$0xff]
        %v4637 = vld [vmem:[%s5 + $0x70] sm:$0xff]
        %v4638 = vld [vmem:[%s5 + $0x78] sm:$0xff]
        %s4639 = scalar_lea.vmem %s5, 128
        %v4640 = vld [vmem:[%s4639] sm:$0xff]
        %v4641 = vld [vmem:[%s4639 + $0x8] sm:$0xff]
        %v4642 = vld [vmem:[%s4639 + $0x10] sm:$0xff]
        %v4643 = vld [vmem:[%s4639 + $0x18] sm:$0xff]
        %v4644 = vld [vmem:[%s4639 + $0x20] sm:$0xff]
        %v4645 = vld [vmem:[%s4639 + $0x28] sm:$0xff]
        %v4646 = vld [vmem:[%s4639 + $0x30] sm:$0xff]
        %v4647 = vld [vmem:[%s4639 + $0x38] sm:$0xff]
        %v4648 = vld [vmem:[%s4639 + $0x40] sm:$0xff]
        %v4649 = vld [vmem:[%s4639 + $0x48] sm:$0xff]
        %v4650 = vld [vmem:[%s4639 + $0x50] sm:$0xff]
        %v4651 = vld [vmem:[%s4639 + $0x58] sm:$0xff]
        %v4652 = vld [vmem:[%s4639 + $0x60] sm:$0xff]
        %v4653 = vld [vmem:[%s4639 + $0x68] sm:$0xff]
        %v4654 = vld [vmem:[%s4639 + $0x70] sm:$0xff]
        %v4655 = vld [vmem:[%s4639 + $0x78] sm:$0xff]
        %4656 = vmatpush.msra.mxu0 %v4655
        %4657 = vmatpush.msra.mxu0 %v4654
        %4658 = vmatpush.msra.mxu0 %v4653
        %4659 = vmatpush.msra.mxu0 %v4652
        %4660 = vmatpush.msra.mxu0 %v4651
        %4661 = vmatpush.msra.mxu0 %v4650
        %4662 = vmatpush.msra.mxu0 %v4649
        %4663 = vmatpush.msra.mxu0 %v4648
        %4664 = vmatpush.msra.mxu0 %v4647
        %4665 = vmatpush.msra.mxu0 %v4646
        %4666 = vmatpush.msra.mxu0 %v4645
        %4667 = vmatpush.msra.mxu0 %v4644
        %4668 = vmatpush.msra.mxu0 %v4643
        %4669 = vmatpush.msra.mxu0 %v4642
        %4670 = vmatpush.msra.mxu0 %v4641
        %4671 = vmatpush.msra.mxu0 %v4640
        %4672 = vmatmul.f32.gmra.mxu0 %v4620
        %v4673 = vpop.f32.mrf.mxu0
        %v4674 = vadd.f32 0.0, %v4673
        %4675 = vdwg.mxu0
        %4676 = vmatpush.msra.mxu0 %v4638
        %4677 = vmatpush.msra.mxu0 %v4637
        %4678 = vmatpush.msra.mxu0 %v4636
        %4679 = vmatpush.msra.mxu0 %v4635
        %4680 = vmatpush.msra.mxu0 %v4634
        %4681 = vmatpush.msra.mxu0 %v4633
        %4682 = vmatpush.msra.mxu0 %v4632
        %4683 = vmatpush.msra.mxu0 %v4631
        %4684 = vmatpush.msra.mxu0 %v4630
        %4685 = vmatpush.msra.mxu0 %v4629
        %4686 = vmatpush.msra.mxu0 %v4628
        %4687 = vmatpush.msra.mxu0 %v4627
        %4688 = vmatpush.msra.mxu0 %v4626
        %4689 = vmatpush.msra.mxu0 %v4625
        %4690 = vmatpush.msra.mxu0 %v4624
        %4691 = vmatpush.msra.mxu0 %v4623
        %4692 = vmatmul.f32.gmra.mxu0 %v4619
        %v4693 = vpop.f32.mrf.mxu0
        %v4694 = vadd.f32 %v4674, %v4693
        %4695 = vdwg.mxu0
        %s4696 = scalar_lea.vmem %s5, 256
        %v4697 = vld [vmem:[%s4696] sm:$0xff]
        %v4698 = vld [vmem:[%s4696 + $0x8] sm:$0xff]
        %v4699 = vld [vmem:[%s4696 + $0x10] sm:$0xff]
        %v4700 = vld [vmem:[%s4696 + $0x18] sm:$0xff]
        %v4701 = vld [vmem:[%s4696 + $0x20] sm:$0xff]
        %v4702 = vld [vmem:[%s4696 + $0x28] sm:$0xff]
        %v4703 = vld [vmem:[%s4696 + $0x30] sm:$0xff]
        %v4704 = vld [vmem:[%s4696 + $0x38] sm:$0xff]
        %v4705 = vld [vmem:[%s4696 + $0x40] sm:$0xff]
        %v4706 = vld [vmem:[%s4696 + $0x48] sm:$0xff]
        %v4707 = vld [vmem:[%s4696 + $0x50] sm:$0xff]
        %v4708 = vld [vmem:[%s4696 + $0x58] sm:$0xff]
        %v4709 = vld [vmem:[%s4696 + $0x60] sm:$0xff]
        %v4710 = vld [vmem:[%s4696 + $0x68] sm:$0xff]
        %v4711 = vld [vmem:[%s4696 + $0x70] sm:$0xff]
        %v4712 = vld [vmem:[%s4696 + $0x78] sm:$0xff]
        %4713 = vmatpush.msra.mxu0 %v4712
        %4714 = vmatpush.msra.mxu0 %v4711
        %4715 = vmatpush.msra.mxu0 %v4710
        %4716 = vmatpush.msra.mxu0 %v4709
        %4717 = vmatpush.msra.mxu0 %v4708
        %4718 = vmatpush.msra.mxu0 %v4707
        %4719 = vmatpush.msra.mxu0 %v4706
        %4720 = vmatpush.msra.mxu0 %v4705
        %4721 = vmatpush.msra.mxu0 %v4704
        %4722 = vmatpush.msra.mxu0 %v4703
        %4723 = vmatpush.msra.mxu0 %v4702
        %4724 = vmatpush.msra.mxu0 %v4701
        %4725 = vmatpush.msra.mxu0 %v4700
        %4726 = vmatpush.msra.mxu0 %v4699
        %4727 = vmatpush.msra.mxu0 %v4698
        %4728 = vmatpush.msra.mxu0 %v4697
        %4729 = vmatmul.f32.gmra.mxu0 %v4621
        %v4730 = vpop.f32.mrf.mxu0
        %v4731 = vadd.f32 0.0, %v4730
        %4732 = vdwg.mxu0
        %v4733 = vadd.f32 %v4694, %v4731
        %s4734 = scalar_lea.vmem %s5, 384
        %v4735 = vld [vmem:[%s4734] sm:$0xff]
        %v4736 = vld [vmem:[%s4734 + $0x8] sm:$0xff]
        %v4737 = vld [vmem:[%s4734 + $0x10] sm:$0xff]
        %v4738 = vld [vmem:[%s4734 + $0x18] sm:$0xff]
        %v4739 = vld [vmem:[%s4734 + $0x20] sm:$0xff]
        %v4740 = vld [vmem:[%s4734 + $0x28] sm:$0xff]
        %v4741 = vld [vmem:[%s4734 + $0x30] sm:$0xff]
        %v4742 = vld [vmem:[%s4734 + $0x38] sm:$0xff]
        %v4743 = vld [vmem:[%s4734 + $0x40] sm:$0xff]
        %v4744 = vld [vmem:[%s4734 + $0x48] sm:$0xff]
        %v4745 = vld [vmem:[%s4734 + $0x50] sm:$0xff]
        %v4746 = vld [vmem:[%s4734 + $0x58] sm:$0xff]
        %v4747 = vld [vmem:[%s4734 + $0x60] sm:$0xff]
        %v4748 = vld [vmem:[%s4734 + $0x68] sm:$0xff]
        %v4749 = vld [vmem:[%s4734 + $0x70] sm:$0xff]
        %v4750 = vld [vmem:[%s4734 + $0x78] sm:$0xff]
        %4751 = vmatpush.msra.mxu0 %v4750
        %4752 = vmatpush.msra.mxu0 %v4749
        %4753 = vmatpush.msra.mxu0 %v4748
        %4754 = vmatpush.msra.mxu0 %v4747
        %4755 = vmatpush.msra.mxu0 %v4746
        %4756 = vmatpush.msra.mxu0 %v4745
        %4757 = vmatpush.msra.mxu0 %v4744
        %4758 = vmatpush.msra.mxu0 %v4743
        %4759 = vmatpush.msra.mxu0 %v4742
        %4760 = vmatpush.msra.mxu0 %v4741
        %4761 = vmatpush.msra.mxu0 %v4740
        %4762 = vmatpush.msra.mxu0 %v4739
        %4763 = vmatpush.msra.mxu0 %v4738
        %4764 = vmatpush.msra.mxu0 %v4737
        %4765 = vmatpush.msra.mxu0 %v4736
        %4766 = vmatpush.msra.mxu0 %v4735
        %4767 = vmatmul.f32.gmra.mxu0 %v4622
        %v4768 = vpop.f32.mrf.mxu0
        %v4769 = vadd.f32 0.0, %v4768
        %4770 = vdwg.mxu0
        %v4771 = vadd.f32 %v4733, %v4769
        %v4772 = vld [vmem:[%s6] sm:$0x1]
        %v4774 = vperm.slane %v4772, 0
        %v4776 = vadd.f32 %v4771, %v4774
        %v4777 = vmax.f32 %v4776, 0.0
        %v4778 = vld [vmem:[%s7] sm:$0xff]
        %v4779 = vld [vmem:[%s7 + $0x8] sm:$0xff]
        %v4780 = vld [vmem:[%s7 + $0x10] sm:$0xff]
        %v4781 = vld [vmem:[%s7 + $0x18] sm:$0xff]
        %v4782 = vld [vmem:[%s7 + $0x20] sm:$0xff]
        %v4783 = vld [vmem:[%s7 + $0x28] sm:$0xff]
        %v4784 = vld [vmem:[%s7 + $0x30] sm:$0xff]
        %v4785 = vld [vmem:[%s7 + $0x38] sm:$0xff]
        %v4786 = vld [vmem:[%s7 + $0x40] sm:$0xff]
        %v4787 = vld [vmem:[%s7 + $0x48] sm:$0xff]
        %v4788 = vld [vmem:[%s7 + $0x50] sm:$0xff]
        %v4789 = vld [vmem:[%s7 + $0x58] sm:$0xff]
        %v4790 = vld [vmem:[%s7 + $0x60] sm:$0xff]
        %v4791 = vld [vmem:[%s7 + $0x68] sm:$0xff]
        %v4792 = vld [vmem:[%s7 + $0x70] sm:$0xff]
        %v4793 = vld [vmem:[%s8] sm:$0x1]
        %v4795 = vperm.slane %v4793, 0
        %vm4797 = vcmask 982016
        %v4799 = vsel %vm4797, %v4777, 0
        %4801 = vmatpush.msra.mxu0 0.0
        %4802 = vmatpush.msra.mxu0 %v4792
        %4803 = vmatpush.msra.mxu0 %v4791
        %4804 = vmatpush.msra.mxu0 %v4790
        %4805 = vmatpush.msra.mxu0 %v4789
        %4806 = vmatpush.msra.mxu0 %v4788
        %4807 = vmatpush.msra.mxu0 %v4787
        %4808 = vmatpush.msra.mxu0 %v4786
        %4809 = vmatpush.msra.mxu0 %v4785
        %4810 = vmatpush.msra.mxu0 %v4784
        %4811 = vmatpush.msra.mxu0 %v4783
        %4812 = vmatpush.msra.mxu0 %v4782
        %4813 = vmatpush.msra.mxu0 %v4781
        %4814 = vmatpush.msra.mxu0 %v4780
        %4815 = vmatpush.msra.mxu0 %v4779
        %4816 = vmatpush.msra.mxu0 %v4778
        %4817 = vmatmul.f32.gmra.mxu0 %v4799
        %v4818 = vpop.f32.mrf.mxu0
        %v4819 = vadd.f32 %v4795, %v4818
        %4820 = vdwg.mxu0
        %v4821 = vmax.f32 %v4819, 0.0
        %v4822 = vld [vmem:[%s9] sm:$0xff]
        %v4823 = vld [vmem:[%s9 + $0x8] sm:$0xff]
        %v4824 = vld [vmem:[%s9 + $0x10] sm:$0xff]
        %v4825 = vld [vmem:[%s9 + $0x18] sm:$0xff]
        %v4826 = vld [vmem:[%s9 + $0x20] sm:$0xff]
        %v4827 = vld [vmem:[%s9 + $0x28] sm:$0xff]
        %v4828 = vld [vmem:[%s9 + $0x30] sm:$0xff]
        %v4829 = vld [vmem:[%s9 + $0x38] sm:$0xff]
        %v4830 = vld [vmem:[%s9 + $0x40] sm:$0xff]
        %v4831 = vld [vmem:[%s9 + $0x48] sm:$0xff]
        %v4832 = vld [vmem:[%s9 + $0x50] sm:$0xf]
        %v4833 = vld [vmem:[%s10] sm:$0x1]
        %v4835 = vperm.slane %v4833, 0
        %vm4837 = vcmask 687104
        %v4839 = vsel %vm4837, %v4821, 0
        %v4842 = vsel %vm2879, %v4832, 0
        %4844 = vmatpush.msra.mxu0 0.0
        %4845 = vmatpush.msra.mxu0 0.0
        %4846 = vmatpush.msra.mxu0 0.0
        %4847 = vmatpush.msra.mxu0 0.0
        %4848 = vmatpush.msra.mxu0 0.0
        %4849 = vmatpush.msra.mxu0 %v4842
        %4850 = vmatpush.msra.mxu0 %v4831
        %4851 = vmatpush.msra.mxu0 %v4830
        %4852 = vmatpush.msra.mxu0 %v4829
        %4853 = vmatpush.msra.mxu0 %v4828
        %4854 = vmatpush.msra.mxu0 %v4827
        %4855 = vmatpush.msra.mxu0 %v4826
        %4856 = vmatpush.msra.mxu0 %v4825
        %4857 = vmatpush.msra.mxu0 %v4824
        %4858 = vmatpush.msra.mxu0 %v4823
        %4859 = vmatpush.msra.mxu0 %v4822
        %4860 = vmatmul.f32.gmra.mxu0 %v4839
        %v4861 = vpop.f32.mrf.mxu0
        %v4862 = vadd.f32 %v4835, %v4861
        %4863 = vdwg.mxu0
        %vm4864 = vcmask 80896
        %v4865 = vsel %vm4864, %v4862, -inf
        %4866 = vmax.xlane.f32.xlu0 %v4865
        %v4867 = vpop.xlane.xlu0 %4866
        %v4868 = vsub.f32 %v4862, %v4867
        %v4869 = vmul.f32 %v4868, 1.442695
        %v4870 = vpow.pop %v4869
        %v4871 = vsel %vm4864, %v4870, 0.0
        %4872 = vadd.xlane.f32.xlu0 %v4871
        %v4873 = vpop.xlane.xlu0 %4872
        %v4874 = vlog2.pop %v4873
        %v4875 = vmul.f32 %v4874, 0.6931472
        %v4876 = vsub.f32 %v4868, %v4875
        %4877 = vst.msk [vmem:[%s535] sm:$0xff] %vm4864, %v4876
        %p4878 = scmp.lt.s32.totalorder %s22, 1
        %s4879 = scalar_select %p4878, %s22, 1
        %s4880 = smul.addr %s4879, 8
        %s4881 = scalar_lea.vmem %s11, %s4880
        // Predicated region
        $region106: #{cnn_target_mnist_forward.1} parent=100 // pred_check
          %p4882 = pneg %p276
        $region107: #{cnn_target_mnist_forward.1} parent=100 // pred_check_branch
          %4884 = sbr.rel (%p4882) target = $region109
        $region108: #{cnn_target_mnist_forward.1} parent=100 // pred_region
          _
        $region109: #{cnn_target_mnist_forward.1} parent=100 // pred_fallthru
          _
      $region101: #{cnn_target_mnist_forward.1} parent=5 // pred_fallthru
        _
      %p4885 = scmp.le.s32.totalorder 2, %s17
      // Predicated region
      $region110: #{cnn_target_mnist_forward.1} parent=5 // pred_check
        %p4886 = pneg %p4885
      $region111: #{cnn_target_mnist_forward.1} parent=5 // pred_check_branch
        %4888 = sbr.rel (%p4886) target = $region113
      $region112: #{cnn_target_mnist_forward.1} parent=5 // pred_region
        %s4889 = ssub.s32 %s17, 2
        // Predicated region
        $region114: #{cnn_target_mnist_forward.1} parent=112 // pred_check
          %p4890 = pneg %p282
        $region115: #{cnn_target_mnist_forward.1} parent=112 // pred_check_branch
          %4892 = sbr.rel (%p4890) target = $region117
        $region116: #{cnn_target_mnist_forward.1} parent=112 // pred_region
          %p4893 = scmp.lt.s32.totalorder %s23, 1
          %s4894 = scalar_select %p4893, %s23, 1
          %s4895 = smul.addr %s4894, 8
          %s4896 = scalar_lea.vmem %s11, %s4895
        $region117: #{cnn_target_mnist_forward.1} parent=112 // pred_fallthru
          _
      $region113: #{cnn_target_mnist_forward.1} parent=5 // pred_fallthru
        _
    $region6: #{cnn_target_mnist_forward.1} parent=1 // loop_footer
      %s21 = sadd.s32 1, %s17
    $region7: #{cnn_target_mnist_forward.1} parent=1 // loop_footer_branch
      %16 = sbr.rel target = $region3
    $region8: #{cnn_target_mnist_forward.1} parent=1 // loop_exit
      _

</llo_original>
